<compile_context>
chip_gen: v5e
topology: v5e:2x2
jax: 0.10.0
libtpu: 0.0.40
codegen_flags: <defaults>
</compile_context>

<pallas_src>
import functools

import jax
import jax.numpy as jnp
from jax.experimental import pallas as pl
from jax.experimental.pallas import tpu as pltpu

T = 1.0      # temperature used in MaskedResNet.forward
TAU = 0.5    # threshold used in MaskedResNet.forward


# ----------------------------------------------------------------------------
# Fused kernel: conv1(+mask,+ReLU) -> conv2(+mask,+ReLU) -> masked pool -> fc
#
# Data layout: each image is padded (2 rows top/bottom, 1+ cols left/right so
# the padded width Wp is a multiple of 8) and flattened row-major to [Lp, C]
# with Lp = (H+4)*Wp; nb images are stacked along the row axis.  A 3x3 tap
# (kh, kw) of the conv output window [base, base+Mtot) reads the contiguous
# slice starting at  base + (kh-1)*Wp + (kw-1)  (base = 2*Wp, Mtot = nb*Lp -
# 4*Wp), so each conv is ONE matmul on an im2col slab built from 9 shifted
# slices plus a `valid` column that doubles as the bias multiplier.  Outputs
# at pad rows/columns are garbage; `valid` zeroes them before staging conv1's
# activation, and the per-image pool matrix zeroes them for conv2.
#
#   x_ref     : [nb*Lp, Cin]      padded, flattened input slab (nb images)
#   w1_ref    : [9*Cin+1, C1]     conv1 weight (mask folded) + bias row
#   w2_ref    : [9*C1+1, C2]      conv2 weight (mask folded) + bias row
#   wfc_ref   : [C2+1, NCLS]      fc weight / (H*W)  + fc bias row
#   valid_ref : [Mtot, 1]         1.0 on real pixels, 0.0 on pad positions
#   pool_ref  : [nb, Mtot]        per-image valid indicator (pool as matmul)
#   o_ref     : [1, nb, NCLS]     logits for the nb images of this step
#   p2_ref    : [nb*Lp, C1]       VMEM scratch: padded flat conv1 output
# ----------------------------------------------------------------------------
def _fused_kernel(x_ref, w1_ref, w2_ref, wfc_ref, valid_ref, pool_ref,
                  o_ref, p2_ref, *, Wp, Lp, nb, c1, c2):
    base = 2 * Wp                    # flat offset of the first output row
    Mtot = nb * Lp - 4 * Wp          # rows of the conv output window

    valid = valid_ref[...]           # [Mtot, 1]

    # ---- conv1: im2col (9 shifted slices + valid/bias column) -> 1 matmul ---
    taps = []
    for t in range(9):
        kh, kw = t // 3, t % 3
        d = (kh - 1) * Wp + (kw - 1)
        taps.append(x_ref[base + d: base + d + Mtot, :])
    col1 = jnp.concatenate(taps + [valid], axis=1)              # [Mtot, 9*Cin+1]
    y1 = jnp.maximum(
        jnp.dot(col1, w1_ref[...], preferred_element_type=jnp.float32),
        0.0) * valid                                            # [Mtot, C1]

    # ---- stage conv1 output in padded flat layout (zero only the pad rows) --
    p2_ref[0:base, :] = jnp.zeros((base, c1), jnp.float32)
    p2_ref[base + Mtot: base + Mtot + base, :] = jnp.zeros((base, c1),
                                                           jnp.float32)
    p2_ref[base: base + Mtot, :] = y1

    # ---- conv2: same im2col trick on the staged activation ------------------
    taps2 = []
    for t in range(9):
        kh, kw = t // 3, t % 3
        d = (kh - 1) * Wp + (kw - 1)
        taps2.append(p2_ref[base + d: base + d + Mtot, :])
    col2 = jnp.concatenate(taps2 + [valid], axis=1)             # [Mtot, 9*C1+1]
    y2 = jnp.maximum(
        jnp.dot(col2, w2_ref[...], preferred_element_type=jnp.float32),
        0.0)                                                    # [Mtot, C2]

    # ---- per-image valid-masked global-average pool + fc, both on the MXU ---
    pooled = jnp.dot(pool_ref[...], y2,
                     preferred_element_type=jnp.float32)        # [nb, C2]
    logits = (jnp.dot(pooled, wfc_ref[0:c2, :],
                      preferred_element_type=jnp.float32)
              + wfc_ref[c2:c2 + 1, :])                          # [nb, NCLS]
    o_ref[0] = logits


# ----------------------------------------------------------------------------
# MaskedResNet forward (synthetic base_model + HSN), fully fused Pallas path.
# ----------------------------------------------------------------------------
def hsn_forward(params):
    """Synthetic HSN: returns per-conv-layer gate vectors and a reg loss."""
    outs = [jax.nn.sigmoid(params["hsn1"]), jax.nn.sigmoid(params["hsn2"])]
    reg_loss = sum(jnp.sum(o) for o in outs)
    return outs, reg_loss


def masked_resnet_forward(x_nchw, params):
    # NCHW (PyTorch) -> NHWC (kernel layout)
    x = jnp.transpose(x_nchw, (0, 2, 3, 1)).astype(jnp.float32)
    N, H, W, Cin = x.shape
    C1 = params["w1"].shape[-1]
    C2 = params["w2"].shape[-1]
    NCLS = params["wfc"].shape[-1]

    # Padded row width rounded up to a multiple of 8 so the base offset and
    # the +-Wp (kh) tap shifts are sublane-aligned (only +-1 kw shifts aren't).
    Wp = ((W + 2 + 7) // 8) * 8
    Lp = (H + 4) * Wp

    # Batch folding: two grid steps for even batches (v7x: one per TensorCore),
    # otherwise one fat step (v5e/v6e have a single TC; one slab amortizes all
    # per-step overhead and constant-operand DMAs).
    steps = 2 if (N >= 2 and N % 2 == 0) else 1
    nb = N // steps
    Mtot = nb * Lp - 4 * Wp

    # hsn() + combine_importance + probabilistic mask (tiny per-channel glue).
    hsn_outputs, _reg_loss = hsn_forward(params)
    m1 = jax.nn.sigmoid(hsn_outputs[0] * params["imp1"] * T - TAU)   # conv1 mask
    m2 = jax.nn.sigmoid(hsn_outputs[1] * params["imp2"] * T - TAU)   # conv2 mask

    # Fold masks into weights/biases (exact: ReLU(z*m) == ReLU(z)*m for m > 0),
    # fold biases in as an extra weight row (matched by the `valid` column of
    # the in-kernel im2col slab), fold the 1/(H*W) pool scale into the fc
    # weight and append the fc bias as its last row.
    w1e = jnp.concatenate(
        [(params["w1"] * m1).reshape(9 * Cin, C1),
         (params["b1"] * m1).reshape(1, C1)], axis=0)            # [9*Cin+1, C1]
    w2e = jnp.concatenate(
        [(params["w2"] * m2).reshape(9 * C1, C2),
         (params["b2"] * m2).reshape(1, C2)], axis=0)            # [9*C1+1, C2]
    wfce = jnp.concatenate(
        [params["wfc"] / float(H * W),
         params["bfc"].reshape(1, NCLS)], axis=0)                # [C2+1, NCLS]

    # Pad (2 rows top/bottom; 1 col left, remainder right up to Wp) + flatten.
    xp = jnp.pad(x, ((0, 0), (2, 2), (1, Wp - W - 1), (0, 0)))
    x2d = xp.reshape(N * Lp, Cin)

    # Validity of each row of the flat output window + per-image pool matrix
    # (pooling and valid-masking are done as a single matmul in the kernel).
    p_abs = jnp.arange(2 * Wp, nb * Lp - 2 * Wp, dtype=jnp.int32)   # [Mtot]
    img = p_abs // Lp
    q = p_abs % Lp
    row = q // Wp
    col = q % Wp
    is_valid = (row >= 2) & (row < 2 + H) & (col >= 1) & (col <= W)
    valid = is_valid.astype(jnp.float32).reshape(Mtot, 1)
    pool = (is_valid[None, :]
            & (img[None, :] == jnp.arange(nb, dtype=jnp.int32)[:, None])
            ).astype(jnp.float32)                                   # [nb, Mtot]

    flops = steps * (2 * Mtot * (9 * Cin + 1) * C1
                     + 2 * Mtot * (9 * C1 + 1) * C2
                     + 2 * nb * Mtot * C2
                     + 2 * nb * (C2 + 1) * NCLS)
    bytes_accessed = 4 * (x2d.size + w1e.size + w2e.size + wfce.size
                          + valid.size + pool.size + N * NCLS)

    kernel = functools.partial(_fused_kernel, Wp=Wp, Lp=Lp, nb=nb,
                               c1=C1, c2=C2)
    out = pl.pallas_call(
        kernel,
        out_shape=jax.ShapeDtypeStruct((steps, nb, NCLS), jnp.float32),
        grid=(steps,),
        in_specs=[
            pl.BlockSpec((nb * Lp, Cin), lambda s: (s, 0)),
            pl.BlockSpec((9 * Cin + 1, C1), lambda s: (0, 0)),
            pl.BlockSpec((9 * C1 + 1, C2), lambda s: (0, 0)),
            pl.BlockSpec((C2 + 1, NCLS), lambda s: (0, 0)),
            pl.BlockSpec((Mtot, 1), lambda s: (0, 0)),
            pl.BlockSpec((nb, Mtot), lambda s: (0, 0)),
        ],
        out_specs=pl.BlockSpec((1, nb, NCLS), lambda s: (s, 0, 0)),
        scratch_shapes=[pltpu.VMEM((nb * Lp, C1), jnp.float32)],
        compiler_params=pltpu.CompilerParams(
            dimension_semantics=("parallel",),    # v7x: 2 TCs split the steps
            vmem_limit_bytes=32 * 1024 * 1024),   # far above actual usage here
        cost_estimate=pl.CostEstimate(
            flops=flops, transcendentals=0, bytes_accessed=bytes_accessed),
    )(x2d, w1e, w2e, wfce, valid, pool)
    return out.reshape(N, NCLS)


# ----------------------------------------------------------------------------
# Pure-JAX reference for validation.
# ----------------------------------------------------------------------------
def reference_forward(x_nchw, params):
    x = jnp.transpose(x_nchw, (0, 2, 3, 1)).astype(jnp.float32)
    hsn_outputs, _ = hsn_forward(params)
    m1 = jax.nn.sigmoid(hsn_outputs[0] * params["imp1"] * T - TAU)
    m2 = jax.nn.sigmoid(hsn_outputs[1] * params["imp2"] * T - TAU)

    def conv(inp, w, b):
        y = jax.lax.conv_general_dilated(
            inp, w, (1, 1), "SAME", dimension_numbers=("NHWC", "HWIO", "NHWC"))
        return y + b

    y = jnp.maximum(conv(x, params["w1"], params["b1"]) * m1, 0.0)
    y = jnp.maximum(conv(y, params["w2"], params["b2"]) * m2, 0.0)
    pooled = jnp.mean(y, axis=(1, 2))
    return pooled @ params["wfc"] + params["bfc"]


def init_params(key):
    C_IN, C1, C2, NCLS = 4, 8, 16, 10
    ks = jax.random.split(key, 8)
    return dict(
        w1=0.1 * jax.random.normal(ks[0], (3, 3, C_IN, C1), jnp.float32),
        b1=0.01 * jax.random.normal(ks[1], (C1,), jnp.float32),
        w2=0.1 * jax.random.normal(ks[2], (3, 3, C1, C2), jnp.float32),
        b2=0.01 * jax.random.normal(ks[3], (C2,), jnp.float32),
        wfc=0.1 * jax.random.normal(ks[4], (C2, NCLS), jnp.float32),
        bfc=0.01 * jax.random.normal(ks[5], (NCLS,), jnp.float32),
        # HSN parameters (one gate logit per conv output channel)
        hsn1=0.5 * jax.random.normal(ks[6], (C1,), jnp.float32),
        hsn2=0.5 * jax.random.normal(ks[7], (C2,), jnp.float32),
        # "important" dict values (non-negative channel importance scores)
        imp1=jnp.abs(jax.random.normal(jax.random.fold_in(key, 101), (C1,), jnp.float32)),
        imp2=jnp.abs(jax.random.normal(jax.random.fold_in(key, 102), (C2,), jnp.float32)),
    )


if __name__ == "__main__":
    key = jax.random.PRNGKey(0)
    params = init_params(key)
    x = jax.random.normal(jax.random.fold_in(key, 7), (2, 4, 16, 16), jnp.float32)

    fwd = jax.jit(masked_resnet_forward)
    out = jax.block_until_ready(fwd(x, params))
    ref = jax.block_until_ready(reference_forward(x, params))

    assert out.shape == (2, 10), out.shape
    max_err = float(jnp.max(jnp.abs(out - ref)))
    assert jnp.allclose(out, ref, rtol=1e-3, atol=1e-3), (
        "mismatch vs reference: max abs err = %e" % max_err)
    print("KERNEL_OK")
</pallas_src>

<mosaic_0001>
module attributes {stable_mosaic.version = 11 : i64} {
  func.func @_fused_kernel(%arg0: i32, %arg1: memref<480x4xf32, #tpu.memory_space<vmem>>, %arg2: memref<37x8xf32, #tpu.memory_space<vmem>>, %arg3: memref<73x16xf32, #tpu.memory_space<vmem>>, %arg4: memref<17x10xf32, #tpu.memory_space<vmem>>, %arg5: memref<384x1xf32, #tpu.memory_space<vmem>>, %arg6: memref<1x384xf32, #tpu.memory_space<vmem>>, %arg7: memref<1x1x10xf32, #tpu.memory_space<vmem>>, %arg8: memref<480x8xf32, #tpu.memory_space<vmem>>) attributes {dimension_semantics = [#tpu.dimension_semantics<parallel>], iteration_bounds = array<i64: 2>, scalar_prefetch = 0 : i64, scratch_operands = 1 : i64, tpu.core_type = #tpu.core_type<tc>, window_params = [{transform_indices = @transform_0, window_bounds = array<i64: 480, 4>}, {pipeline_mode = #tpu.pipeline_mode<synchronous>, transform_indices = @transform_1, window_bounds = array<i64: 37, 8>}, {pipeline_mode = #tpu.pipeline_mode<synchronous>, transform_indices = @transform_2, window_bounds = array<i64: 73, 16>}, {pipeline_mode = #tpu.pipeline_mode<synchronous>, transform_indices = @transform_3, window_bounds = array<i64: 17, 10>}, {pipeline_mode = #tpu.pipeline_mode<synchronous>, transform_indices = @transform_4, window_bounds = array<i64: 384, 1>}, {pipeline_mode = #tpu.pipeline_mode<synchronous>, transform_indices = @transform_5, window_bounds = array<i64: 1, 384>}, {transform_indices = @transform_6, window_bounds = array<i64: 1, 1, 10>}]} {
    %c0 = arith.constant 0 : index
    %c0_0 = arith.constant 0 : index
    %0 = vector.load %arg5[%c0, %c0_0] : memref<384x1xf32, #tpu.memory_space<vmem>>, vector<384x1xf32>
    %c23 = arith.constant 23 : index
    %c0_1 = arith.constant 0 : index
    %1 = vector.load %arg1[%c23, %c0_1] : memref<480x4xf32, #tpu.memory_space<vmem>>, vector<384x4xf32>
    %c24 = arith.constant 24 : index
    %c0_2 = arith.constant 0 : index
    %2 = vector.load %arg1[%c24, %c0_2] : memref<480x4xf32, #tpu.memory_space<vmem>>, vector<384x4xf32>
    %c25 = arith.constant 25 : index
    %c0_3 = arith.constant 0 : index
    %3 = vector.load %arg1[%c25, %c0_3] : memref<480x4xf32, #tpu.memory_space<vmem>>, vector<384x4xf32>
    %c47 = arith.constant 47 : index
    %c0_4 = arith.constant 0 : index
    %4 = vector.load %arg1[%c47, %c0_4] : memref<480x4xf32, #tpu.memory_space<vmem>>, vector<384x4xf32>
    %c48 = arith.constant 48 : index
    %c0_5 = arith.constant 0 : index
    %5 = vector.load %arg1[%c48, %c0_5] : memref<480x4xf32, #tpu.memory_space<vmem>>, vector<384x4xf32>
    %c49 = arith.constant 49 : index
    %c0_6 = arith.constant 0 : index
    %6 = vector.load %arg1[%c49, %c0_6] : memref<480x4xf32, #tpu.memory_space<vmem>>, vector<384x4xf32>
    %c71 = arith.constant 71 : index
    %c0_7 = arith.constant 0 : index
    %7 = vector.load %arg1[%c71, %c0_7] : memref<480x4xf32, #tpu.memory_space<vmem>>, vector<384x4xf32>
    %c72 = arith.constant 72 : index
    %c0_8 = arith.constant 0 : index
    %8 = vector.load %arg1[%c72, %c0_8] : memref<480x4xf32, #tpu.memory_space<vmem>>, vector<384x4xf32>
    %c73 = arith.constant 73 : index
    %c0_9 = arith.constant 0 : index
    %9 = vector.load %arg1[%c73, %c0_9] : memref<480x4xf32, #tpu.memory_space<vmem>>, vector<384x4xf32>
    %10 = tpu.concatenate %1, %2, %3, %4, %5, %6, %7, %8, %9, %0 in 1 : vector<384x4xf32>, vector<384x4xf32>, vector<384x4xf32>, vector<384x4xf32>, vector<384x4xf32>, vector<384x4xf32>, vector<384x4xf32>, vector<384x4xf32>, vector<384x4xf32>, vector<384x1xf32> -> vector<384x37xf32>
    %c0_10 = arith.constant 0 : index
    %c0_11 = arith.constant 0 : index
    %11 = vector.load %arg2[%c0_10, %c0_11] : memref<37x8xf32, #tpu.memory_space<vmem>>, vector<37x8xf32>
    %cst = arith.constant dense<0.000000e+00> : vector<384x8xf32>
    %12 = tpu.matmul %10, %11, %cst {dimension_numbers = #tpu.dot_dimension_numbers<[1], [0], [0], [1], [0, 0, 1, 1], [], []>} : vector<384x37xf32>, vector<37x8xf32>, vector<384x8xf32> -> vector<384x8xf32>
    %cst_12 = arith.constant 0.000000e+00 : f32
    %13 = vector.broadcast %cst_12 : f32 to vector<384x8xf32>
    %14 = arith.maximumf %12, %13 : vector<384x8xf32>
    %15 = vector.broadcast %0 : vector<384x1xf32> to vector<384x8xf32>
    %16 = arith.mulf %14, %15 : vector<384x8xf32>
    %cst_13 = arith.constant 0.000000e+00 : f32
    %17 = vector.broadcast %cst_13 : f32 to vector<48x8xf32>
    %c0_14 = arith.constant 0 : index
    %c0_15 = arith.constant 0 : index
    %18 = vector.load %arg8[%c0_14, %c0_15] : memref<480x8xf32, #tpu.memory_space<vmem>>, vector<48x8xf32>
    tpu.vector_store %arg8[%c0_14, %c0_15], %17 {strides = array<i32>} : memref<480x8xf32, #tpu.memory_space<vmem>>, vector<48x8xf32>,
    %cst_16 = arith.constant 0.000000e+00 : f32
    %19 = vector.broadcast %cst_16 : f32 to vector<48x8xf32>
    %c432 = arith.constant 432 : index
    %c0_17 = arith.constant 0 : index
    %20 = vector.load %arg8[%c432, %c0_17] : memref<480x8xf32, #tpu.memory_space<vmem>>, vector<48x8xf32>
    tpu.vector_store %arg8[%c432, %c0_17], %19 {strides = array<i32>} : memref<480x8xf32, #tpu.memory_space<vmem>>, vector<48x8xf32>,
    %c48_18 = arith.constant 48 : index
    %c0_19 = arith.constant 0 : index
    %21 = vector.load %arg8[%c48_18, %c0_19] : memref<480x8xf32, #tpu.memory_space<vmem>>, vector<384x8xf32>
    tpu.vector_store %arg8[%c48_18, %c0_19], %16 {strides = array<i32>} : memref<480x8xf32, #tpu.memory_space<vmem>>, vector<384x8xf32>,
    %c23_20 = arith.constant 23 : index
    %c0_21 = arith.constant 0 : index
    %22 = vector.load %arg8[%c23_20, %c0_21] : memref<480x8xf32, #tpu.memory_space<vmem>>, vector<384x8xf32>
    %c24_22 = arith.constant 24 : index
    %c0_23 = arith.constant 0 : index
    %23 = vector.load %arg8[%c24_22, %c0_23] : memref<480x8xf32, #tpu.memory_space<vmem>>, vector<384x8xf32>
    %c25_24 = arith.constant 25 : index
    %c0_25 = arith.constant 0 : index
    %24 = vector.load %arg8[%c25_24, %c0_25] : memref<480x8xf32, #tpu.memory_space<vmem>>, vector<384x8xf32>
    %c47_26 = arith.constant 47 : index
    %c0_27 = arith.constant 0 : index
    %25 = vector.load %arg8[%c47_26, %c0_27] : memref<480x8xf32, #tpu.memory_space<vmem>>, vector<384x8xf32>
    %c48_28 = arith.constant 48 : index
    %c0_29 = arith.constant 0 : index
    %26 = vector.load %arg8[%c48_28, %c0_29] : memref<480x8xf32, #tpu.memory_space<vmem>>, vector<384x8xf32>
    %c49_30 = arith.constant 49 : index
    %c0_31 = arith.constant 0 : index
    %27 = vector.load %arg8[%c49_30, %c0_31] : memref<480x8xf32, #tpu.memory_space<vmem>>, vector<384x8xf32>
    %c71_32 = arith.constant 71 : index
    %c0_33 = arith.constant 0 : index
    %28 = vector.load %arg8[%c71_32, %c0_33] : memref<480x8xf32, #tpu.memory_space<vmem>>, vector<384x8xf32>
    %c72_34 = arith.constant 72 : index
    %c0_35 = arith.constant 0 : index
    %29 = vector.load %arg8[%c72_34, %c0_35] : memref<480x8xf32, #tpu.memory_space<vmem>>, vector<384x8xf32>
    %c73_36 = arith.constant 73 : index
    %c0_37 = arith.constant 0 : index
    %30 = vector.load %arg8[%c73_36, %c0_37] : memref<480x8xf32, #tpu.memory_space<vmem>>, vector<384x8xf32>
    %31 = tpu.concatenate %22, %23, %24, %25, %26, %27, %28, %29, %30, %0 in 1 : vector<384x8xf32>, vector<384x8xf32>, vector<384x8xf32>, vector<384x8xf32>, vector<384x8xf32>, vector<384x8xf32>, vector<384x8xf32>, vector<384x8xf32>, vector<384x8xf32>, vector<384x1xf32> -> vector<384x73xf32>
    %c0_38 = arith.constant 0 : index
    %c0_39 = arith.constant 0 : index
    %32 = vector.load %arg3[%c0_38, %c0_39] : memref<73x16xf32, #tpu.memory_space<vmem>>, vector<73x16xf32>
    %cst_40 = arith.constant dense<0.000000e+00> : vector<384x16xf32>
    %33 = tpu.matmul %31, %32, %cst_40 {dimension_numbers = #tpu.dot_dimension_numbers<[1], [0], [0], [1], [0, 0, 1, 1], [], []>} : vector<384x73xf32>, vector<73x16xf32>, vector<384x16xf32> -> vector<384x16xf32>
    %cst_41 = arith.constant 0.000000e+00 : f32
    %34 = vector.broadcast %cst_41 : f32 to vector<384x16xf32>
    %35 = arith.maximumf %33, %34 : vector<384x16xf32>
    %c0_42 = arith.constant 0 : index
    %c0_43 = arith.constant 0 : index
    %36 = vector.load %arg6[%c0_42, %c0_43] : memref<1x384xf32, #tpu.memory_space<vmem>>, vector<1x384xf32>
    %cst_44 = arith.constant dense<0.000000e+00> : vector<1x16xf32>
    %37 = tpu.matmul %36, %35, %cst_44 {dimension_numbers = #tpu.dot_dimension_numbers<[1], [0], [0], [1], [0, 0, 1, 1], [], []>} : vector<1x384xf32>, vector<384x16xf32>, vector<1x16xf32> -> vector<1x16xf32>
    %c0_45 = arith.constant 0 : index
    %c0_46 = arith.constant 0 : index
    %38 = vector.load %arg4[%c0_45, %c0_46] : memref<17x10xf32, #tpu.memory_space<vmem>>, vector<16x10xf32>
    %cst_47 = arith.constant dense<0.000000e+00> : vector<1x10xf32>
    %39 = tpu.matmul %37, %38, %cst_47 {dimension_numbers = #tpu.dot_dimension_numbers<[1], [0], [0], [1], [0, 0, 1, 1], [], []>} : vector<1x16xf32>, vector<16x10xf32>, vector<1x10xf32> -> vector<1x10xf32>
    %c16 = arith.constant 16 : index
    %c0_48 = arith.constant 0 : index
    %40 = vector.load %arg4[%c16, %c0_48] : memref<17x10xf32, #tpu.memory_space<vmem>>, vector<1x10xf32>
    %41 = arith.addf %39, %40 : vector<1x10xf32>
    %c0_49 = arith.constant 0 : index
    %c0_50 = arith.constant 0 : index
    %c0_51 = arith.constant 0 : index
    %42 = vector.load %arg7[%c0_49, %c0_50, %c0_51] : memref<1x1x10xf32, #tpu.memory_space<vmem>>, vector<1x1x10xf32>
    %43 = vector.shape_cast %42 : vector<1x1x10xf32> to vector<1x10xf32>
    %44 = vector.shape_cast %41 : vector<1x10xf32> to vector<1x1x10xf32>
    tpu.vector_store %arg7[%c0_49, %c0_50, %c0_51], %44 {strides = array<i32>} : memref<1x1x10xf32, #tpu.memory_space<vmem>>, vector<1x1x10xf32>,
    return
  }
  func.func @transform_0(%arg0: i32) -> (i32, i32) {
    %c0_i32 = arith.constant 0 : i32
    %c0_i32_0 = arith.constant 0 : i32
    return %arg0, %c0_i32 : i32, i32
  }
  func.func @transform_1(%arg0: i32) -> (i32, i32) {
    %c0_i32 = arith.constant 0 : i32
    %c0_i32_0 = arith.constant 0 : i32
    %c0_i32_1 = arith.constant 0 : i32
    return %c0_i32, %c0_i32_0 : i32, i32
  }
  func.func @transform_2(%arg0: i32) -> (i32, i32) {
    %c0_i32 = arith.constant 0 : i32
    %c0_i32_0 = arith.constant 0 : i32
    %c0_i32_1 = arith.constant 0 : i32
    return %c0_i32, %c0_i32_0 : i32, i32
  }
  func.func @transform_3(%arg0: i32) -> (i32, i32) {
    %c0_i32 = arith.constant 0 : i32
    %c0_i32_0 = arith.constant 0 : i32
    %c0_i32_1 = arith.constant 0 : i32
    return %c0_i32, %c0_i32_0 : i32, i32
  }
  func.func @transform_4(%arg0: i32) -> (i32, i32) {
    %c0_i32 = arith.constant 0 : i32
    %c0_i32_0 = arith.constant 0 : i32
    %c0_i32_1 = arith.constant 0 : i32
    return %c0_i32, %c0_i32_0 : i32, i32
  }
  func.func @transform_5(%arg0: i32) -> (i32, i32) {
    %c0_i32 = arith.constant 0 : i32
    %c0_i32_0 = arith.constant 0 : i32
    %c0_i32_1 = arith.constant 0 : i32
    return %c0_i32, %c0_i32_0 : i32, i32
  }
  func.func @transform_6(%arg0: i32) -> (i32, i32, i32) {
    %c0_i32 = arith.constant 0 : i32
    %c0_i32_0 = arith.constant 0 : i32
    %c0_i32_1 = arith.constant 0 : i32
    return %arg0, %c0_i32, %c0_i32_0 : i32, i32, i32
  }
}

</mosaic_0001>

<llo_original>
// kernel: masked_resnet_forward.1
$region0: #{masked_resnet_forward.1}
  #allocation0 [shape = 'u32[]', space=smem, size = 0x4, offset = 0x4, fixed_abs, tag = 'smem constant byte address 0x4 - core index']
  #allocation1 [shape = 'u32[72,128]{1,0:T(1,128)}', space=vmem, size = 0x9000, scoped, tag = 'internal scratch']
  #allocation2 [shape = 'f32[480,8]{1,0:T(8,128)}', space=vmem, size = 0x3c000, scoped, tag = 'scratch operand']
  %s0 = inlined_call_operand.vmem [shape: f32[960,4], index: 0, kind: input, shape index: {}]
  %s1 = inlined_call_operand.vmem [shape: f32[37,8], index: 1, kind: input, shape index: {}]
  %s2 = inlined_call_operand.vmem [shape: f32[73,16], index: 2, kind: input, shape index: {}]
  %s3 = inlined_call_operand.vmem [shape: f32[17,10], index: 3, kind: input, shape index: {}]
  %s4 = inlined_call_operand.vmem [shape: f32[384,1], index: 4, kind: input, shape index: {}]
  %s5 = inlined_call_operand.vmem [shape: f32[1,384], index: 5, kind: input, shape index: {}]
  %s6 = inlined_call_operand.hbm [shape: f32[2,1,10], index: 6, kind: output, shape index: {}]
  %s7 = sld [smem:[#allocation0]]
  $region57: #{masked_resnet_forward.1} parent=0
    _
  %s9 = ssub.s32 1, %s7
  %s10 = scalar_select 0, %s9, %s7
  $region1: #{masked_resnet_forward.1} parent=0
    #allocation3 [shape = 'u8[1024]{0}', space=vmem, size = 0x400, scoped, tag = 'output window, operand 0']
    #allocation4 [shape = 's32[2]{0}', space=sflag, size = 0x8, scoped, tag = 'scoped memory for masked_resnet_forward.1']
    %11 = vsyncpa [#allocation4], 0
    %s12 = scalar_lea.sflag [#allocation4], 1
    %13 = vsyncpa %s12, 0
    loop: start=0, step=1, limit=4
    $region2: #{masked_resnet_forward.1} parent=1 // loop_pre_header
      _
    $region3: #{masked_resnet_forward.1} parent=1 // loop_header
      %s15 = sphi 0, %s19
      %p16 = scmp.ge.s32.totalorder %s15, 4
      %s25 = sphi 0, %s27
      %s28 = sphi 0, %s25
      %s29 = sphi 0, %s28
      %s45 = sphi 0, %s29
      %s49 = sphi 0, %s49
      %s51 = sphi 0, %s49
      %s52 = sphi 0, %s51
      %s66 = sphi 0, %s52
      %s70 = sphi 0, %s70
      %s72 = sphi 0, %s70
      %s73 = sphi 0, %s72
      %s87 = sphi 0, %s73
      %s91 = sphi 0, %s91
      %s93 = sphi 0, %s91
      %s94 = sphi 0, %s93
      %s108 = sphi 0, %s94
      %s112 = sphi 0, %s112
      %s114 = sphi 0, %s112
      %s115 = sphi 0, %s114
      %s129 = sphi 0, %s115
      %s133 = sphi 0, %s133
      %s135 = sphi 0, %s133
      %s136 = sphi 0, %s135
      %s150 = sphi 0, %s136
      %s156 = sphi 0, %s158
      %s159 = sphi 0, %s156
      %s160 = sphi 0, %s159
      %s176 = sphi 0, %s160
    $region4: #{masked_resnet_forward.1} parent=1 // loop_header_branch
      %18 = sbr.rel (%p16) target = $region8
    $region5: #{masked_resnet_forward.1} parent=1 // loop_body
      %s20 = ssub.s32 %s15, 1
      %s21 = ssub.s32 %s15, 2
      %s22 = sadd.s32 %s15, 1
      %s23 = ssub.s32 %s15, %s22
      %p24 = scmp.eq.s32.totalorder %s23, 0
      %s26 = sadd.s32 %s25, 1
      %s27 = scalar_select %p24, %s25, %s26
      %p30 = pneg %p24
      %p31 = scmp.eq.s32.totalorder %s15, 1
      %p32 = por %p30, %p31
      %p33 = scmp.ne.s32.totalorder %s25, %s28
      %p34 = scmp.eq.s32.totalorder %s15, 0
      %p35 = por %p33, %p34
      %p36 = scmp.ne.s32.totalorder %s25, %s28
      %p37 = scmp.eq.s32.totalorder %s20, 1
      %p38 = por %p36, %p37
      %p39 = scmp.ne.s32.totalorder %s28, %s29
      %p40 = scmp.eq.s32.totalorder %s20, 0
      %p41 = por %p39, %p40
      %p42 = scmp.ne.s32.totalorder %s28, %s29
      %p43 = scmp.eq.s32.totalorder %s21, 1
      %p44 = por %p42, %p43
      %p46 = scmp.ne.s32.totalorder %s29, %s45
      %p47 = scmp.eq.s32.totalorder %s21, 0
      %p48 = por %p46, %p47
      %s50 = sadd.s32 %s49, 1
      %p53 = scmp.eq.s32.totalorder %s15, 1
      %p54 = scmp.ne.s32.totalorder %s49, %s51
      %p55 = scmp.eq.s32.totalorder %s15, 0
      %p56 = por %p54, %p55
      %p57 = scmp.ne.s32.totalorder %s49, %s51
      %p58 = scmp.eq.s32.totalorder %s20, 1
      %p59 = por %p57, %p58
      %p60 = scmp.ne.s32.totalorder %s51, %s52
      %p61 = scmp.eq.s32.totalorder %s20, 0
      %p62 = por %p60, %p61
      %p63 = scmp.ne.s32.totalorder %s51, %s52
      %p64 = scmp.eq.s32.totalorder %s21, 1
      %p65 = por %p63, %p64
      %p67 = scmp.ne.s32.totalorder %s52, %s66
      %p68 = scmp.eq.s32.totalorder %s21, 0
      %p69 = por %p67, %p68
      %s71 = sadd.s32 %s70, 1
      %p74 = scmp.eq.s32.totalorder %s15, 1
      %p75 = scmp.ne.s32.totalorder %s70, %s72
      %p76 = scmp.eq.s32.totalorder %s15, 0
      %p77 = por %p75, %p76
      %p78 = scmp.ne.s32.totalorder %s70, %s72
      %p79 = scmp.eq.s32.totalorder %s20, 1
      %p80 = por %p78, %p79
      %p81 = scmp.ne.s32.totalorder %s72, %s73
      %p82 = scmp.eq.s32.totalorder %s20, 0
      %p83 = por %p81, %p82
      %p84 = scmp.ne.s32.totalorder %s72, %s73
      %p85 = scmp.eq.s32.totalorder %s21, 1
      %p86 = por %p84, %p85
      %p88 = scmp.ne.s32.totalorder %s73, %s87
      %p89 = scmp.eq.s32.totalorder %s21, 0
      %p90 = por %p88, %p89
      %s92 = sadd.s32 %s91, 1
      %p95 = scmp.eq.s32.totalorder %s15, 1
      %p96 = scmp.ne.s32.totalorder %s91, %s93
      %p97 = scmp.eq.s32.totalorder %s15, 0
      %p98 = por %p96, %p97
      %p99 = scmp.ne.s32.totalorder %s91, %s93
      %p100 = scmp.eq.s32.totalorder %s20, 1
      %p101 = por %p99, %p100
      %p102 = scmp.ne.s32.totalorder %s93, %s94
      %p103 = scmp.eq.s32.totalorder %s20, 0
      %p104 = por %p102, %p103
      %p105 = scmp.ne.s32.totalorder %s93, %s94
      %p106 = scmp.eq.s32.totalorder %s21, 1
      %p107 = por %p105, %p106
      %p109 = scmp.ne.s32.totalorder %s94, %s108
      %p110 = scmp.eq.s32.totalorder %s21, 0
      %p111 = por %p109, %p110
      %s113 = sadd.s32 %s112, 1
      %p116 = scmp.eq.s32.totalorder %s15, 1
      %p117 = scmp.ne.s32.totalorder %s112, %s114
      %p118 = scmp.eq.s32.totalorder %s15, 0
      %p119 = por %p117, %p118
      %p120 = scmp.ne.s32.totalorder %s112, %s114
      %p121 = scmp.eq.s32.totalorder %s20, 1
      %p122 = por %p120, %p121
      %p123 = scmp.ne.s32.totalorder %s114, %s115
      %p124 = scmp.eq.s32.totalorder %s20, 0
      %p125 = por %p123, %p124
      %p126 = scmp.ne.s32.totalorder %s114, %s115
      %p127 = scmp.eq.s32.totalorder %s21, 1
      %p128 = por %p126, %p127
      %p130 = scmp.ne.s32.totalorder %s115, %s129
      %p131 = scmp.eq.s32.totalorder %s21, 0
      %p132 = por %p130, %p131
      %s134 = sadd.s32 %s133, 1
      %p137 = scmp.eq.s32.totalorder %s15, 1
      %p138 = scmp.ne.s32.totalorder %s133, %s135
      %p139 = scmp.eq.s32.totalorder %s15, 0
      %p140 = por %p138, %p139
      %p141 = scmp.ne.s32.totalorder %s133, %s135
      %p142 = scmp.eq.s32.totalorder %s20, 1
      %p143 = por %p141, %p142
      %p144 = scmp.ne.s32.totalorder %s135, %s136
      %p145 = scmp.eq.s32.totalorder %s20, 0
      %p146 = por %p144, %p145
      %p147 = scmp.ne.s32.totalorder %s135, %s136
      %p148 = scmp.eq.s32.totalorder %s21, 1
      %p149 = por %p147, %p148
      %p151 = scmp.ne.s32.totalorder %s136, %s150
      %p152 = scmp.eq.s32.totalorder %s21, 0
      %p153 = por %p151, %p152
      %s154 = ssub.s32 %s15, %s22
      %p155 = scmp.eq.s32.totalorder %s154, 0
      %s157 = sadd.s32 %s156, 1
      %s158 = scalar_select %p155, %s156, %s157
      %p161 = pneg %p155
      %p162 = scmp.eq.s32.totalorder %s15, 1
      %p163 = por %p161, %p162
      %p164 = scmp.ne.s32.totalorder %s156, %s159
      %p165 = scmp.eq.s32.totalorder %s15, 0
      %p166 = por %p164, %p165
      %p167 = scmp.ne.s32.totalorder %s156, %s159
      %p168 = scmp.eq.s32.totalorder %s20, 1
      %p169 = por %p167, %p168
      %p170 = scmp.ne.s32.totalorder %s159, %s160
      %p171 = scmp.eq.s32.totalorder %s20, 0
      %p172 = por %p170, %p171
      %p173 = scmp.ne.s32.totalorder %s159, %s160
      %p174 = scmp.eq.s32.totalorder %s21, 1
      %p175 = por %p173, %p174
      %p177 = scmp.ne.s32.totalorder %s160, %s176
      %p178 = scmp.eq.s32.totalorder %s21, 0
      %p179 = por %p177, %p178
      %p180 = scmp.le.s32.totalorder 1, %s15
      %p181 = scmp.lt.s32.totalorder %s15, 3
      %p182 = pnand %p180, %p181
      %p183 = pneg %p182
      // Predicated region
      $region9: #{masked_resnet_forward.1} parent=5 // pred_check
        _
      $region10: #{masked_resnet_forward.1} parent=5 // pred_check_branch
        %185 = sbr.rel (%p182) target = $region12
      $region11: #{masked_resnet_forward.1} parent=5 // pred_region
        %s186 = ssub.s32 %s15, 1
        // Predicated region
        $region13: #{masked_resnet_forward.1} parent=11 // pred_check
          %p187 = pneg %p62
        $region14: #{masked_resnet_forward.1} parent=11 // pred_check_branch
          %189 = sbr.rel (%p187) target = $region16
        $region15: #{masked_resnet_forward.1} parent=11 // pred_region
          _
        $region16: #{masked_resnet_forward.1} parent=11 // pred_fallthru
          _
        // Predicated region
        $region17: #{masked_resnet_forward.1} parent=11 // pred_check
          %p190 = pneg %p83
        $region18: #{masked_resnet_forward.1} parent=11 // pred_check_branch
          %192 = sbr.rel (%p190) target = $region20
        $region19: #{masked_resnet_forward.1} parent=11 // pred_region
          _
        $region20: #{masked_resnet_forward.1} parent=11 // pred_fallthru
          _
        // Predicated region
        $region21: #{masked_resnet_forward.1} parent=11 // pred_check
          %p193 = pneg %p104
        $region22: #{masked_resnet_forward.1} parent=11 // pred_check_branch
          %195 = sbr.rel (%p193) target = $region24
        $region23: #{masked_resnet_forward.1} parent=11 // pred_region
          _
        $region24: #{masked_resnet_forward.1} parent=11 // pred_fallthru
          _
        // Predicated region
        $region25: #{masked_resnet_forward.1} parent=11 // pred_check
          %p196 = pneg %p125
        $region26: #{masked_resnet_forward.1} parent=11 // pred_check_branch
          %198 = sbr.rel (%p196) target = $region28
        $region27: #{masked_resnet_forward.1} parent=11 // pred_region
          _
        $region28: #{masked_resnet_forward.1} parent=11 // pred_fallthru
          _
        // Predicated region
        $region29: #{masked_resnet_forward.1} parent=11 // pred_check
          %p199 = pneg %p146
        $region30: #{masked_resnet_forward.1} parent=11 // pred_check_branch
          %201 = sbr.rel (%p199) target = $region32
        $region31: #{masked_resnet_forward.1} parent=11 // pred_region
          _
        $region32: #{masked_resnet_forward.1} parent=11 // pred_fallthru
          _
      $region12: #{masked_resnet_forward.1} parent=5 // pred_fallthru
        _
      %p202 = scmp.lt.s32.totalorder %s15, 2
      // Predicated region
      $region33: #{masked_resnet_forward.1} parent=5 // pred_check
        %p203 = pneg %p202
      $region34: #{masked_resnet_forward.1} parent=5 // pred_check_branch
        %205 = sbr.rel (%p203) target = $region36
      $region35: #{masked_resnet_forward.1} parent=5 // pred_region
        // Predicated region
        $region37: #{masked_resnet_forward.1} parent=35 // pred_check
          %p206 = pneg %p35
        $region38: #{masked_resnet_forward.1} parent=35 // pred_check_branch
          %208 = sbr.rel (%p206) target = $region40
        $region39: #{masked_resnet_forward.1} parent=35 // pred_region
          %s209 = smul.u32 60, %s15
          %p210 = scmp.lt.s32.totalorder %s209, 119
          %s211 = scalar_select %p210, %s209, 119
          %s212 = smul.addr %s211, 8
          %s213 = scalar_lea.vmem %s0, %s212
          %s214 = smul.u32 60, %s15
        $region40: #{masked_resnet_forward.1} parent=35 // pred_fallthru
          _
      $region36: #{masked_resnet_forward.1} parent=5 // pred_fallthru
        _
      %p215 = scmp.le.s32.totalorder 1, %s15
      %p216 = scmp.lt.s32.totalorder %s15, 3
      %p217 = pnand %p215, %p216
      %p218 = pneg %p217
      // Predicated region
      $region41: #{masked_resnet_forward.1} parent=5 // pred_check
        _
      $region42: #{masked_resnet_forward.1} parent=5 // pred_check_branch
        %220 = sbr.rel (%p217) target = $region44
      $region43: #{masked_resnet_forward.1} parent=5 // pred_region
        %s221 = ssub.s32 %s15, 1
        %s222 = smul.u32 60, %s20
        %p223 = scmp.lt.s32.totalorder %s222, 119
        %s224 = scalar_select %p223, %s222, 119
        %s225 = smul.addr %s224, 8
        %s226 = scalar_lea.vmem %s0, %s225
        %p227 = pneg %p41
        %p228 = pneg %p38
        %p229 = pneg %p62
        %p230 = pneg %p59
        %p231 = pneg %p83
        %p232 = pneg %p80
        %p233 = pneg %p104
        %p234 = pneg %p101
        %p235 = pneg %p125
        %p236 = pneg %p122
        %p237 = pneg %p146
        %p238 = pneg %p143
        %p239 = pneg %p172
        %p240 = pneg %p169
        %s241 = sand.u32 %s159, 1
        %s242 = scalar_lea.sflag [#allocation4], %s241
        %s243 = sand.u32 %s159, 1
        %s244 = scalar_lea.vmem [#allocation3], %s243
        %s245 = smul.u32 60, %s20
        %p246 = scmp.lt.s32.totalorder %s245, 119
        %s247 = scalar_select %p246, %s245, 119
        %s248 = smul.addr %s247, 8
        %s249 = scalar_lea.vmem %s0, %s248
        %s250 = smul.u32 60, %s20
        %v251 = vld [vmem:[%s4] sm:$0xff]
        %v252 = vld [vmem:[%s4 + $0x8] sm:$0xff]
        %v253 = vld [vmem:[%s4 + $0x10] sm:$0xff]
        %v254 = vld [vmem:[%s4 + $0x18] sm:$0xff]
        %v255 = vld [vmem:[%s4 + $0x20] sm:$0xff]
        %v256 = vld [vmem:[%s4 + $0x28] sm:$0xff]
        %v257 = vld [vmem:[%s4 + $0x30] sm:$0xff]
        %v258 = vld [vmem:[%s4 + $0x38] sm:$0xff]
        %v259 = vld [vmem:[%s4 + $0x40] sm:$0xff]
        %v260 = vld [vmem:[%s4 + $0x48] sm:$0xff]
        %v261 = vld [vmem:[%s4 + $0x50] sm:$0xff]
        %v262 = vld [vmem:[%s4 + $0x58] sm:$0xff]
        %v263 = vld [vmem:[%s4 + $0x60] sm:$0xff]
        %v264 = vld [vmem:[%s4 + $0x68] sm:$0xff]
        %v265 = vld [vmem:[%s4 + $0x70] sm:$0xff]
        %v266 = vld [vmem:[%s4 + $0x78] sm:$0xff]
        %v267 = vld [vmem:[%s4 + $0x80] sm:$0xff]
        %v268 = vld [vmem:[%s4 + $0x88] sm:$0xff]
        %v269 = vld [vmem:[%s4 + $0x90] sm:$0xff]
        %v270 = vld [vmem:[%s4 + $0x98] sm:$0xff]
        %v271 = vld [vmem:[%s4 + $0xa0] sm:$0xff]
        %v272 = vld [vmem:[%s4 + $0xa8] sm:$0xff]
        %v273 = vld [vmem:[%s4 + $0xb0] sm:$0xff]
        %v274 = vld [vmem:[%s4 + $0xb8] sm:$0xff]
        %v275 = vld [vmem:[%s4 + $0xc0] sm:$0xff]
        %v276 = vld [vmem:[%s4 + $0xc8] sm:$0xff]
        %v277 = vld [vmem:[%s4 + $0xd0] sm:$0xff]
        %v278 = vld [vmem:[%s4 + $0xd8] sm:$0xff]
        %v279 = vld [vmem:[%s4 + $0xe0] sm:$0xff]
        %v280 = vld [vmem:[%s4 + $0xe8] sm:$0xff]
        %v281 = vld [vmem:[%s4 + $0xf0] sm:$0xff]
        %v282 = vld [vmem:[%s4 + $0xf8] sm:$0xff]
        %v283 = vld [vmem:[%s4 + $0x100] sm:$0xff]
        %v284 = vld [vmem:[%s4 + $0x108] sm:$0xff]
        %v285 = vld [vmem:[%s4 + $0x110] sm:$0xff]
        %v286 = vld [vmem:[%s4 + $0x118] sm:$0xff]
        %v287 = vld [vmem:[%s4 + $0x120] sm:$0xff]
        %v288 = vld [vmem:[%s4 + $0x128] sm:$0xff]
        %v289 = vld [vmem:[%s4 + $0x130] sm:$0xff]
        %v290 = vld [vmem:[%s4 + $0x138] sm:$0xff]
        %v291 = vld [vmem:[%s4 + $0x140] sm:$0xff]
        %v292 = vld [vmem:[%s4 + $0x148] sm:$0xff]
        %v293 = vld [vmem:[%s4 + $0x150] sm:$0xff]
        %v294 = vld [vmem:[%s4 + $0x158] sm:$0xff]
        %v295 = vld [vmem:[%s4 + $0x160] sm:$0xff]
        %v296 = vld [vmem:[%s4 + $0x168] sm:$0xff]
        %v297 = vld [vmem:[%s4 + $0x170] sm:$0xff]
        %v298 = vld [vmem:[%s4 + $0x178] sm:$0xff]
        %v299 = vld [vmem:[%s249 + $0x17] sm:$0xff]
        %v300 = vld [vmem:[%s249 + $0x1f] sm:$0xff]
        %v301 = vld [vmem:[%s249 + $0x27] sm:$0xff]
        %v302 = vld [vmem:[%s249 + $0x2f] sm:$0xff]
        %v303 = vld [vmem:[%s249 + $0x37] sm:$0xff]
        %v304 = vld [vmem:[%s249 + $0x3f] sm:$0xff]
        %v305 = vld [vmem:[%s249 + $0x47] sm:$0xff]
        %v306 = vld [vmem:[%s249 + $0x4f] sm:$0xff]
        %v307 = vld [vmem:[%s249 + $0x57] sm:$0xff]
        %v308 = vld [vmem:[%s249 + $0x5f] sm:$0xff]
        %v309 = vld [vmem:[%s249 + $0x67] sm:$0xff]
        %v310 = vld [vmem:[%s249 + $0x6f] sm:$0xff]
        %v311 = vld [vmem:[%s249 + $0x77] sm:$0xff]
        %v312 = vld [vmem:[%s249 + $0x7f] sm:$0xff]
        %v313 = vld [vmem:[%s249 + $0x87] sm:$0xff]
        %v314 = vld [vmem:[%s249 + $0x8f] sm:$0xff]
        %v315 = vld [vmem:[%s249 + $0x97] sm:$0xff]
        %v316 = vld [vmem:[%s249 + $0x9f] sm:$0xff]
        %v317 = vld [vmem:[%s249 + $0xa7] sm:$0xff]
        %v318 = vld [vmem:[%s249 + $0xaf] sm:$0xff]
        %v319 = vld [vmem:[%s249 + $0xb7] sm:$0xff]
        %v320 = vld [vmem:[%s249 + $0xbf] sm:$0xff]
        %v321 = vld [vmem:[%s249 + $0xc7] sm:$0xff]
        %v322 = vld [vmem:[%s249 + $0xcf] sm:$0xff]
        %v323 = vld [vmem:[%s249 + $0xd7] sm:$0xff]
        %v324 = vld [vmem:[%s249 + $0xdf] sm:$0xff]
        %v325 = vld [vmem:[%s249 + $0xe7] sm:$0xff]
        %v326 = vld [vmem:[%s249 + $0xef] sm:$0xff]
        %v327 = vld [vmem:[%s249 + $0xf7] sm:$0xff]
        %v328 = vld [vmem:[%s249 + $0xff] sm:$0xff]
        %v329 = vld [vmem:[%s249 + $0x107] sm:$0xff]
        %v330 = vld [vmem:[%s249 + $0x10f] sm:$0xff]
        %v331 = vld [vmem:[%s249 + $0x117] sm:$0xff]
        %v332 = vld [vmem:[%s249 + $0x11f] sm:$0xff]
        %v333 = vld [vmem:[%s249 + $0x127] sm:$0xff]
        %v334 = vld [vmem:[%s249 + $0x12f] sm:$0xff]
        %v335 = vld [vmem:[%s249 + $0x137] sm:$0xff]
        %v336 = vld [vmem:[%s249 + $0x13f] sm:$0xff]
        %v337 = vld [vmem:[%s249 + $0x147] sm:$0xff]
        %v338 = vld [vmem:[%s249 + $0x14f] sm:$0xff]
        %v339 = vld [vmem:[%s249 + $0x157] sm:$0xff]
        %v340 = vld [vmem:[%s249 + $0x15f] sm:$0xff]
        %v341 = vld [vmem:[%s249 + $0x167] sm:$0xff]
        %v342 = vld [vmem:[%s249 + $0x16f] sm:$0xff]
        %v343 = vld [vmem:[%s249 + $0x177] sm:$0xff]
        %v344 = vld [vmem:[%s249 + $0x17f] sm:$0xff]
        %v345 = vld [vmem:[%s249 + $0x187] sm:$0xff]
        %v346 = vld [vmem:[%s249 + $0x18f] sm:$0xff]
        %v347 = vld [vmem:[%s249 + $0x18] sm:$0xff]
        %v348 = vld [vmem:[%s249 + $0x20] sm:$0xff]
        %v349 = vld [vmem:[%s249 + $0x28] sm:$0xff]
        %v350 = vld [vmem:[%s249 + $0x30] sm:$0xff]
        %v351 = vld [vmem:[%s249 + $0x38] sm:$0xff]
        %v352 = vld [vmem:[%s249 + $0x40] sm:$0xff]
        %v353 = vld [vmem:[%s249 + $0x48] sm:$0xff]
        %v354 = vld [vmem:[%s249 + $0x50] sm:$0xff]
        %v355 = vld [vmem:[%s249 + $0x58] sm:$0xff]
        %v356 = vld [vmem:[%s249 + $0x60] sm:$0xff]
        %v357 = vld [vmem:[%s249 + $0x68] sm:$0xff]
        %v358 = vld [vmem:[%s249 + $0x70] sm:$0xff]
        %v359 = vld [vmem:[%s249 + $0x78] sm:$0xff]
        %v360 = vld [vmem:[%s249 + $0x80] sm:$0xff]
        %v361 = vld [vmem:[%s249 + $0x88] sm:$0xff]
        %v362 = vld [vmem:[%s249 + $0x90] sm:$0xff]
        %v363 = vld [vmem:[%s249 + $0x98] sm:$0xff]
        %v364 = vld [vmem:[%s249 + $0xa0] sm:$0xff]
        %v365 = vld [vmem:[%s249 + $0xa8] sm:$0xff]
        %v366 = vld [vmem:[%s249 + $0xb0] sm:$0xff]
        %v367 = vld [vmem:[%s249 + $0xb8] sm:$0xff]
        %v368 = vld [vmem:[%s249 + $0xc0] sm:$0xff]
        %v369 = vld [vmem:[%s249 + $0xc8] sm:$0xff]
        %v370 = vld [vmem:[%s249 + $0xd0] sm:$0xff]
        %v371 = vld [vmem:[%s249 + $0xd8] sm:$0xff]
        %v372 = vld [vmem:[%s249 + $0xe0] sm:$0xff]
        %v373 = vld [vmem:[%s249 + $0xe8] sm:$0xff]
        %v374 = vld [vmem:[%s249 + $0xf0] sm:$0xff]
        %v375 = vld [vmem:[%s249 + $0xf8] sm:$0xff]
        %v376 = vld [vmem:[%s249 + $0x100] sm:$0xff]
        %v377 = vld [vmem:[%s249 + $0x108] sm:$0xff]
        %v378 = vld [vmem:[%s249 + $0x110] sm:$0xff]
        %v379 = vld [vmem:[%s249 + $0x118] sm:$0xff]
        %v380 = vld [vmem:[%s249 + $0x120] sm:$0xff]
        %v381 = vld [vmem:[%s249 + $0x128] sm:$0xff]
        %v382 = vld [vmem:[%s249 + $0x130] sm:$0xff]
        %v383 = vld [vmem:[%s249 + $0x138] sm:$0xff]
        %v384 = vld [vmem:[%s249 + $0x140] sm:$0xff]
        %v385 = vld [vmem:[%s249 + $0x148] sm:$0xff]
        %v386 = vld [vmem:[%s249 + $0x150] sm:$0xff]
        %v387 = vld [vmem:[%s249 + $0x158] sm:$0xff]
        %v388 = vld [vmem:[%s249 + $0x160] sm:$0xff]
        %v389 = vld [vmem:[%s249 + $0x168] sm:$0xff]
        %v390 = vld [vmem:[%s249 + $0x170] sm:$0xff]
        %v391 = vld [vmem:[%s249 + $0x178] sm:$0xff]
        %v392 = vld [vmem:[%s249 + $0x180] sm:$0xff]
        %v393 = vld [vmem:[%s249 + $0x188] sm:$0xff]
        %v394 = vld [vmem:[%s249 + $0x190] sm:$0xff]
        %v395 = vld [vmem:[%s249 + $0x19] sm:$0xff]
        %v396 = vld [vmem:[%s249 + $0x21] sm:$0xff]
        %v397 = vld [vmem:[%s249 + $0x29] sm:$0xff]
        %v398 = vld [vmem:[%s249 + $0x31] sm:$0xff]
        %v399 = vld [vmem:[%s249 + $0x39] sm:$0xff]
        %v400 = vld [vmem:[%s249 + $0x41] sm:$0xff]
        %v401 = vld [vmem:[%s249 + $0x49] sm:$0xff]
        %v402 = vld [vmem:[%s249 + $0x51] sm:$0xff]
        %v403 = vld [vmem:[%s249 + $0x59] sm:$0xff]
        %v404 = vld [vmem:[%s249 + $0x61] sm:$0xff]
        %v405 = vld [vmem:[%s249 + $0x69] sm:$0xff]
        %v406 = vld [vmem:[%s249 + $0x71] sm:$0xff]
        %v407 = vld [vmem:[%s249 + $0x79] sm:$0xff]
        %v408 = vld [vmem:[%s249 + $0x81] sm:$0xff]
        %v409 = vld [vmem:[%s249 + $0x89] sm:$0xff]
        %v410 = vld [vmem:[%s249 + $0x91] sm:$0xff]
        %v411 = vld [vmem:[%s249 + $0x99] sm:$0xff]
        %v412 = vld [vmem:[%s249 + $0xa1] sm:$0xff]
        %v413 = vld [vmem:[%s249 + $0xa9] sm:$0xff]
        %v414 = vld [vmem:[%s249 + $0xb1] sm:$0xff]
        %v415 = vld [vmem:[%s249 + $0xb9] sm:$0xff]
        %v416 = vld [vmem:[%s249 + $0xc1] sm:$0xff]
        %v417 = vld [vmem:[%s249 + $0xc9] sm:$0xff]
        %v418 = vld [vmem:[%s249 + $0xd1] sm:$0xff]
        %v419 = vld [vmem:[%s249 + $0xd9] sm:$0xff]
        %v420 = vld [vmem:[%s249 + $0xe1] sm:$0xff]
        %v421 = vld [vmem:[%s249 + $0xe9] sm:$0xff]
        %v422 = vld [vmem:[%s249 + $0xf1] sm:$0xff]
        %v423 = vld [vmem:[%s249 + $0xf9] sm:$0xff]
        %v424 = vld [vmem:[%s249 + $0x101] sm:$0xff]
        %v425 = vld [vmem:[%s249 + $0x109] sm:$0xff]
        %v426 = vld [vmem:[%s249 + $0x111] sm:$0xff]
        %v427 = vld [vmem:[%s249 + $0x119] sm:$0xff]
        %v428 = vld [vmem:[%s249 + $0x121] sm:$0xff]
        %v429 = vld [vmem:[%s249 + $0x129] sm:$0xff]
        %v430 = vld [vmem:[%s249 + $0x131] sm:$0xff]
        %v431 = vld [vmem:[%s249 + $0x139] sm:$0xff]
        %v432 = vld [vmem:[%s249 + $0x141] sm:$0xff]
        %v433 = vld [vmem:[%s249 + $0x149] sm:$0xff]
        %v434 = vld [vmem:[%s249 + $0x151] sm:$0xff]
        %v435 = vld [vmem:[%s249 + $0x159] sm:$0xff]
        %v436 = vld [vmem:[%s249 + $0x161] sm:$0xff]
        %v437 = vld [vmem:[%s249 + $0x169] sm:$0xff]
        %v438 = vld [vmem:[%s249 + $0x171] sm:$0xff]
        %v439 = vld [vmem:[%s249 + $0x179] sm:$0xff]
        %v440 = vld [vmem:[%s249 + $0x181] sm:$0xff]
        %v441 = vld [vmem:[%s249 + $0x189] sm:$0xff]
        %v442 = vld [vmem:[%s249 + $0x191] sm:$0xff]
        %v443 = vld [vmem:[%s249 + $0x197] sm:$0xff]
        %v444 = vld [vmem:[%s249 + $0x19f] sm:$0xff]
        %v445 = vld [vmem:[%s249 + $0x1a7] sm:$0xff]
        %v446 = vld [vmem:[%s249 + $0x198] sm:$0xff]
        %v447 = vld [vmem:[%s249 + $0x1a0] sm:$0xff]
        %v448 = vld [vmem:[%s249 + $0x1a8] sm:$0xff]
        %v449 = vld [vmem:[%s249 + $0x199] sm:$0xff]
        %v450 = vld [vmem:[%s249 + $0x1a1] sm:$0xff]
        %v451 = vld [vmem:[%s249 + $0x1a9] sm:$0xff]
        %v452 = vld [vmem:[%s249 + $0x1af] sm:$0xff]
        %v453 = vld [vmem:[%s249 + $0x1b7] sm:$0xff]
        %v454 = vld [vmem:[%s249 + $0x1bf] sm:$0xff]
        %v455 = vld [vmem:[%s249 + $0x1b0] sm:$0xff]
        %v456 = vld [vmem:[%s249 + $0x1b8] sm:$0xff]
        %v457 = vld [vmem:[%s249 + $0x1c0] sm:$0xff]
        %v458 = vld [vmem:[%s249 + $0x1b1] sm:$0xff]
        %v459 = vld [vmem:[%s249 + $0x1b9] sm:$0xff]
        %v460 = vld [vmem:[%s249 + $0x1c1] sm:$0xff]
        %509 = vrot.lane.b32.xlu0 %v347, 4
        %v510 = vpop.permute.xlu0 %509
        %511 = vrot.lane.b32.xlu0 %v348, 4
        %v512 = vpop.permute.xlu0 %511
        %513 = vrot.lane.b32.xlu0 %v349, 4
        %v514 = vpop.permute.xlu0 %513
        %515 = vrot.lane.b32.xlu0 %v350, 4
        %v516 = vpop.permute.xlu0 %515
        %517 = vrot.lane.b32.xlu0 %v351, 4
        %v518 = vpop.permute.xlu0 %517
        %519 = vrot.lane.b32.xlu0 %v352, 4
        %v520 = vpop.permute.xlu0 %519
        %521 = vrot.lane.b32.xlu0 %v353, 4
        %v522 = vpop.permute.xlu0 %521
        %523 = vrot.lane.b32.xlu0 %v354, 4
        %v524 = vpop.permute.xlu0 %523
        %525 = vrot.lane.b32.xlu0 %v355, 4
        %v526 = vpop.permute.xlu0 %525
        %527 = vrot.lane.b32.xlu0 %v356, 4
        %v528 = vpop.permute.xlu0 %527
        %529 = vrot.lane.b32.xlu0 %v357, 4
        %v530 = vpop.permute.xlu0 %529
        %531 = vrot.lane.b32.xlu0 %v358, 4
        %v532 = vpop.permute.xlu0 %531
        %533 = vrot.lane.b32.xlu0 %v359, 4
        %v534 = vpop.permute.xlu0 %533
        %535 = vrot.lane.b32.xlu0 %v360, 4
        %v536 = vpop.permute.xlu0 %535
        %537 = vrot.lane.b32.xlu0 %v361, 4
        %v538 = vpop.permute.xlu0 %537
        %539 = vrot.lane.b32.xlu0 %v362, 4
        %v540 = vpop.permute.xlu0 %539
        %541 = vrot.lane.b32.xlu0 %v363, 4
        %v542 = vpop.permute.xlu0 %541
        %543 = vrot.lane.b32.xlu0 %v364, 4
        %v544 = vpop.permute.xlu0 %543
        %545 = vrot.lane.b32.xlu0 %v365, 4
        %v546 = vpop.permute.xlu0 %545
        %547 = vrot.lane.b32.xlu0 %v366, 4
        %v548 = vpop.permute.xlu0 %547
        %549 = vrot.lane.b32.xlu0 %v367, 4
        %v550 = vpop.permute.xlu0 %549
        %551 = vrot.lane.b32.xlu0 %v368, 4
        %v552 = vpop.permute.xlu0 %551
        %553 = vrot.lane.b32.xlu0 %v369, 4
        %v554 = vpop.permute.xlu0 %553
        %555 = vrot.lane.b32.xlu0 %v370, 4
        %v556 = vpop.permute.xlu0 %555
        %557 = vrot.lane.b32.xlu0 %v371, 4
        %v558 = vpop.permute.xlu0 %557
        %559 = vrot.lane.b32.xlu0 %v372, 4
        %v560 = vpop.permute.xlu0 %559
        %561 = vrot.lane.b32.xlu0 %v373, 4
        %v562 = vpop.permute.xlu0 %561
        %563 = vrot.lane.b32.xlu0 %v374, 4
        %v564 = vpop.permute.xlu0 %563
        %565 = vrot.lane.b32.xlu0 %v375, 4
        %v566 = vpop.permute.xlu0 %565
        %567 = vrot.lane.b32.xlu0 %v376, 4
        %v568 = vpop.permute.xlu0 %567
        %569 = vrot.lane.b32.xlu0 %v377, 4
        %v570 = vpop.permute.xlu0 %569
        %571 = vrot.lane.b32.xlu0 %v378, 4
        %v572 = vpop.permute.xlu0 %571
        %573 = vrot.lane.b32.xlu0 %v379, 4
        %v574 = vpop.permute.xlu0 %573
        %575 = vrot.lane.b32.xlu0 %v380, 4
        %v576 = vpop.permute.xlu0 %575
        %577 = vrot.lane.b32.xlu0 %v381, 4
        %v578 = vpop.permute.xlu0 %577
        %579 = vrot.lane.b32.xlu0 %v382, 4
        %v580 = vpop.permute.xlu0 %579
        %581 = vrot.lane.b32.xlu0 %v383, 4
        %v582 = vpop.permute.xlu0 %581
        %583 = vrot.lane.b32.xlu0 %v384, 4
        %v584 = vpop.permute.xlu0 %583
        %585 = vrot.lane.b32.xlu0 %v385, 4
        %v586 = vpop.permute.xlu0 %585
        %587 = vrot.lane.b32.xlu0 %v386, 4
        %v588 = vpop.permute.xlu0 %587
        %589 = vrot.lane.b32.xlu0 %v387, 4
        %v590 = vpop.permute.xlu0 %589
        %591 = vrot.lane.b32.xlu0 %v388, 4
        %v592 = vpop.permute.xlu0 %591
        %593 = vrot.lane.b32.xlu0 %v389, 4
        %v594 = vpop.permute.xlu0 %593
        %595 = vrot.lane.b32.xlu0 %v390, 4
        %v596 = vpop.permute.xlu0 %595
        %597 = vrot.lane.b32.xlu0 %v391, 4
        %v598 = vpop.permute.xlu0 %597
        %599 = vrot.lane.b32.xlu0 %v392, 4
        %v600 = vpop.permute.xlu0 %599
        %601 = vrot.lane.b32.xlu0 %v393, 4
        %v602 = vpop.permute.xlu0 %601
        %603 = vrot.lane.b32.xlu0 %v394, 4
        %v604 = vpop.permute.xlu0 %603
        %701 = vrot.lane.b32.xlu0 %v395, 8
        %v702 = vpop.permute.xlu0 %701
        %703 = vrot.lane.b32.xlu0 %v396, 8
        %v704 = vpop.permute.xlu0 %703
        %705 = vrot.lane.b32.xlu0 %v397, 8
        %v706 = vpop.permute.xlu0 %705
        %707 = vrot.lane.b32.xlu0 %v398, 8
        %v708 = vpop.permute.xlu0 %707
        %709 = vrot.lane.b32.xlu0 %v399, 8
        %v710 = vpop.permute.xlu0 %709
        %711 = vrot.lane.b32.xlu0 %v400, 8
        %v712 = vpop.permute.xlu0 %711
        %713 = vrot.lane.b32.xlu0 %v401, 8
        %v714 = vpop.permute.xlu0 %713
        %715 = vrot.lane.b32.xlu0 %v402, 8
        %v716 = vpop.permute.xlu0 %715
        %717 = vrot.lane.b32.xlu0 %v403, 8
        %v718 = vpop.permute.xlu0 %717
        %719 = vrot.lane.b32.xlu0 %v404, 8
        %v720 = vpop.permute.xlu0 %719
        %721 = vrot.lane.b32.xlu0 %v405, 8
        %v722 = vpop.permute.xlu0 %721
        %723 = vrot.lane.b32.xlu0 %v406, 8
        %v724 = vpop.permute.xlu0 %723
        %725 = vrot.lane.b32.xlu0 %v407, 8
        %v726 = vpop.permute.xlu0 %725
        %727 = vrot.lane.b32.xlu0 %v408, 8
        %v728 = vpop.permute.xlu0 %727
        %729 = vrot.lane.b32.xlu0 %v409, 8
        %v730 = vpop.permute.xlu0 %729
        %731 = vrot.lane.b32.xlu0 %v410, 8
        %v732 = vpop.permute.xlu0 %731
        %733 = vrot.lane.b32.xlu0 %v411, 8
        %v734 = vpop.permute.xlu0 %733
        %735 = vrot.lane.b32.xlu0 %v412, 8
        %v736 = vpop.permute.xlu0 %735
        %737 = vrot.lane.b32.xlu0 %v413, 8
        %v738 = vpop.permute.xlu0 %737
        %739 = vrot.lane.b32.xlu0 %v414, 8
        %v740 = vpop.permute.xlu0 %739
        %741 = vrot.lane.b32.xlu0 %v415, 8
        %v742 = vpop.permute.xlu0 %741
        %743 = vrot.lane.b32.xlu0 %v416, 8
        %v744 = vpop.permute.xlu0 %743
        %745 = vrot.lane.b32.xlu0 %v417, 8
        %v746 = vpop.permute.xlu0 %745
        %747 = vrot.lane.b32.xlu0 %v418, 8
        %v748 = vpop.permute.xlu0 %747
        %749 = vrot.lane.b32.xlu0 %v419, 8
        %v750 = vpop.permute.xlu0 %749
        %751 = vrot.lane.b32.xlu0 %v420, 8
        %v752 = vpop.permute.xlu0 %751
        %753 = vrot.lane.b32.xlu0 %v421, 8
        %v754 = vpop.permute.xlu0 %753
        %755 = vrot.lane.b32.xlu0 %v422, 8
        %v756 = vpop.permute.xlu0 %755
        %757 = vrot.lane.b32.xlu0 %v423, 8
        %v758 = vpop.permute.xlu0 %757
        %759 = vrot.lane.b32.xlu0 %v424, 8
        %v760 = vpop.permute.xlu0 %759
        %761 = vrot.lane.b32.xlu0 %v425, 8
        %v762 = vpop.permute.xlu0 %761
        %763 = vrot.lane.b32.xlu0 %v426, 8
        %v764 = vpop.permute.xlu0 %763
        %765 = vrot.lane.b32.xlu0 %v427, 8
        %v766 = vpop.permute.xlu0 %765
        %767 = vrot.lane.b32.xlu0 %v428, 8
        %v768 = vpop.permute.xlu0 %767
        %769 = vrot.lane.b32.xlu0 %v429, 8
        %v770 = vpop.permute.xlu0 %769
        %771 = vrot.lane.b32.xlu0 %v430, 8
        %v772 = vpop.permute.xlu0 %771
        %773 = vrot.lane.b32.xlu0 %v431, 8
        %v774 = vpop.permute.xlu0 %773
        %775 = vrot.lane.b32.xlu0 %v432, 8
        %v776 = vpop.permute.xlu0 %775
        %777 = vrot.lane.b32.xlu0 %v433, 8
        %v778 = vpop.permute.xlu0 %777
        %779 = vrot.lane.b32.xlu0 %v434, 8
        %v780 = vpop.permute.xlu0 %779
        %781 = vrot.lane.b32.xlu0 %v435, 8
        %v782 = vpop.permute.xlu0 %781
        %783 = vrot.lane.b32.xlu0 %v436, 8
        %v784 = vpop.permute.xlu0 %783
        %785 = vrot.lane.b32.xlu0 %v437, 8
        %v786 = vpop.permute.xlu0 %785
        %787 = vrot.lane.b32.xlu0 %v438, 8
        %v788 = vpop.permute.xlu0 %787
        %789 = vrot.lane.b32.xlu0 %v439, 8
        %v790 = vpop.permute.xlu0 %789
        %791 = vrot.lane.b32.xlu0 %v440, 8
        %v792 = vpop.permute.xlu0 %791
        %793 = vrot.lane.b32.xlu0 %v441, 8
        %v794 = vpop.permute.xlu0 %793
        %795 = vrot.lane.b32.xlu0 %v442, 8
        %v796 = vpop.permute.xlu0 %795
        %893 = vrot.lane.b32.xlu0 %v302, 12
        %v894 = vpop.permute.xlu0 %893
        %895 = vrot.lane.b32.xlu0 %v303, 12
        %v896 = vpop.permute.xlu0 %895
        %897 = vrot.lane.b32.xlu0 %v304, 12
        %v898 = vpop.permute.xlu0 %897
        %899 = vrot.lane.b32.xlu0 %v305, 12
        %v900 = vpop.permute.xlu0 %899
        %901 = vrot.lane.b32.xlu0 %v306, 12
        %v902 = vpop.permute.xlu0 %901
        %903 = vrot.lane.b32.xlu0 %v307, 12
        %v904 = vpop.permute.xlu0 %903
        %905 = vrot.lane.b32.xlu0 %v308, 12
        %v906 = vpop.permute.xlu0 %905
        %907 = vrot.lane.b32.xlu0 %v309, 12
        %v908 = vpop.permute.xlu0 %907
        %909 = vrot.lane.b32.xlu0 %v310, 12
        %v910 = vpop.permute.xlu0 %909
        %911 = vrot.lane.b32.xlu0 %v311, 12
        %v912 = vpop.permute.xlu0 %911
        %913 = vrot.lane.b32.xlu0 %v312, 12
        %v914 = vpop.permute.xlu0 %913
        %915 = vrot.lane.b32.xlu0 %v313, 12
        %v916 = vpop.permute.xlu0 %915
        %917 = vrot.lane.b32.xlu0 %v314, 12
        %v918 = vpop.permute.xlu0 %917
        %919 = vrot.lane.b32.xlu0 %v315, 12
        %v920 = vpop.permute.xlu0 %919
        %921 = vrot.lane.b32.xlu0 %v316, 12
        %v922 = vpop.permute.xlu0 %921
        %923 = vrot.lane.b32.xlu0 %v317, 12
        %v924 = vpop.permute.xlu0 %923
        %925 = vrot.lane.b32.xlu0 %v318, 12
        %v926 = vpop.permute.xlu0 %925
        %927 = vrot.lane.b32.xlu0 %v319, 12
        %v928 = vpop.permute.xlu0 %927
        %929 = vrot.lane.b32.xlu0 %v320, 12
        %v930 = vpop.permute.xlu0 %929
        %931 = vrot.lane.b32.xlu0 %v321, 12
        %v932 = vpop.permute.xlu0 %931
        %933 = vrot.lane.b32.xlu0 %v322, 12
        %v934 = vpop.permute.xlu0 %933
        %935 = vrot.lane.b32.xlu0 %v323, 12
        %v936 = vpop.permute.xlu0 %935
        %937 = vrot.lane.b32.xlu0 %v324, 12
        %v938 = vpop.permute.xlu0 %937
        %939 = vrot.lane.b32.xlu0 %v325, 12
        %v940 = vpop.permute.xlu0 %939
        %941 = vrot.lane.b32.xlu0 %v326, 12
        %v942 = vpop.permute.xlu0 %941
        %943 = vrot.lane.b32.xlu0 %v327, 12
        %v944 = vpop.permute.xlu0 %943
        %945 = vrot.lane.b32.xlu0 %v328, 12
        %v946 = vpop.permute.xlu0 %945
        %947 = vrot.lane.b32.xlu0 %v329, 12
        %v948 = vpop.permute.xlu0 %947
        %949 = vrot.lane.b32.xlu0 %v330, 12
        %v950 = vpop.permute.xlu0 %949
        %951 = vrot.lane.b32.xlu0 %v331, 12
        %v952 = vpop.permute.xlu0 %951
        %953 = vrot.lane.b32.xlu0 %v332, 12
        %v954 = vpop.permute.xlu0 %953
        %955 = vrot.lane.b32.xlu0 %v333, 12
        %v956 = vpop.permute.xlu0 %955
        %957 = vrot.lane.b32.xlu0 %v334, 12
        %v958 = vpop.permute.xlu0 %957
        %959 = vrot.lane.b32.xlu0 %v335, 12
        %v960 = vpop.permute.xlu0 %959
        %961 = vrot.lane.b32.xlu0 %v336, 12
        %v962 = vpop.permute.xlu0 %961
        %963 = vrot.lane.b32.xlu0 %v337, 12
        %v964 = vpop.permute.xlu0 %963
        %965 = vrot.lane.b32.xlu0 %v338, 12
        %v966 = vpop.permute.xlu0 %965
        %967 = vrot.lane.b32.xlu0 %v339, 12
        %v968 = vpop.permute.xlu0 %967
        %969 = vrot.lane.b32.xlu0 %v340, 12
        %v970 = vpop.permute.xlu0 %969
        %971 = vrot.lane.b32.xlu0 %v341, 12
        %v972 = vpop.permute.xlu0 %971
        %973 = vrot.lane.b32.xlu0 %v342, 12
        %v974 = vpop.permute.xlu0 %973
        %975 = vrot.lane.b32.xlu0 %v343, 12
        %v976 = vpop.permute.xlu0 %975
        %977 = vrot.lane.b32.xlu0 %v344, 12
        %v978 = vpop.permute.xlu0 %977
        %979 = vrot.lane.b32.xlu0 %v345, 12
        %v980 = vpop.permute.xlu0 %979
        %981 = vrot.lane.b32.xlu0 %v346, 12
        %v982 = vpop.permute.xlu0 %981
        %983 = vrot.lane.b32.xlu0 %v443, 12
        %v984 = vpop.permute.xlu0 %983
        %985 = vrot.lane.b32.xlu0 %v444, 12
        %v986 = vpop.permute.xlu0 %985
        %987 = vrot.lane.b32.xlu0 %v445, 12
        %v988 = vpop.permute.xlu0 %987
        %1040 = vrot.lane.b32.xlu0 %v350, 16
        %v1041 = vpop.permute.xlu0 %1040
        %1042 = vrot.lane.b32.xlu0 %v351, 16
        %v1043 = vpop.permute.xlu0 %1042
        %1044 = vrot.lane.b32.xlu0 %v352, 16
        %v1045 = vpop.permute.xlu0 %1044
        %1046 = vrot.lane.b32.xlu0 %v353, 16
        %v1047 = vpop.permute.xlu0 %1046
        %1048 = vrot.lane.b32.xlu0 %v354, 16
        %v1049 = vpop.permute.xlu0 %1048
        %1050 = vrot.lane.b32.xlu0 %v355, 16
        %v1051 = vpop.permute.xlu0 %1050
        %1052 = vrot.lane.b32.xlu0 %v356, 16
        %v1053 = vpop.permute.xlu0 %1052
        %1054 = vrot.lane.b32.xlu0 %v357, 16
        %v1055 = vpop.permute.xlu0 %1054
        %1056 = vrot.lane.b32.xlu0 %v358, 16
        %v1057 = vpop.permute.xlu0 %1056
        %1058 = vrot.lane.b32.xlu0 %v359, 16
        %v1059 = vpop.permute.xlu0 %1058
        %1060 = vrot.lane.b32.xlu0 %v360, 16
        %v1061 = vpop.permute.xlu0 %1060
        %1062 = vrot.lane.b32.xlu0 %v361, 16
        %v1063 = vpop.permute.xlu0 %1062
        %1064 = vrot.lane.b32.xlu0 %v362, 16
        %v1065 = vpop.permute.xlu0 %1064
        %1066 = vrot.lane.b32.xlu0 %v363, 16
        %v1067 = vpop.permute.xlu0 %1066
        %1068 = vrot.lane.b32.xlu0 %v364, 16
        %v1069 = vpop.permute.xlu0 %1068
        %1070 = vrot.lane.b32.xlu0 %v365, 16
        %v1071 = vpop.permute.xlu0 %1070
        %1072 = vrot.lane.b32.xlu0 %v366, 16
        %v1073 = vpop.permute.xlu0 %1072
        %1074 = vrot.lane.b32.xlu0 %v367, 16
        %v1075 = vpop.permute.xlu0 %1074
        %1076 = vrot.lane.b32.xlu0 %v368, 16
        %v1077 = vpop.permute.xlu0 %1076
        %1078 = vrot.lane.b32.xlu0 %v369, 16
        %v1079 = vpop.permute.xlu0 %1078
        %1080 = vrot.lane.b32.xlu0 %v370, 16
        %v1081 = vpop.permute.xlu0 %1080
        %1082 = vrot.lane.b32.xlu0 %v371, 16
        %v1083 = vpop.permute.xlu0 %1082
        %1084 = vrot.lane.b32.xlu0 %v372, 16
        %v1085 = vpop.permute.xlu0 %1084
        %1086 = vrot.lane.b32.xlu0 %v373, 16
        %v1087 = vpop.permute.xlu0 %1086
        %1088 = vrot.lane.b32.xlu0 %v374, 16
        %v1089 = vpop.permute.xlu0 %1088
        %1090 = vrot.lane.b32.xlu0 %v375, 16
        %v1091 = vpop.permute.xlu0 %1090
        %1092 = vrot.lane.b32.xlu0 %v376, 16
        %v1093 = vpop.permute.xlu0 %1092
        %1094 = vrot.lane.b32.xlu0 %v377, 16
        %v1095 = vpop.permute.xlu0 %1094
        %1096 = vrot.lane.b32.xlu0 %v378, 16
        %v1097 = vpop.permute.xlu0 %1096
        %1098 = vrot.lane.b32.xlu0 %v379, 16
        %v1099 = vpop.permute.xlu0 %1098
        %1100 = vrot.lane.b32.xlu0 %v380, 16
        %v1101 = vpop.permute.xlu0 %1100
        %1102 = vrot.lane.b32.xlu0 %v381, 16
        %v1103 = vpop.permute.xlu0 %1102
        %1104 = vrot.lane.b32.xlu0 %v382, 16
        %v1105 = vpop.permute.xlu0 %1104
        %1106 = vrot.lane.b32.xlu0 %v383, 16
        %v1107 = vpop.permute.xlu0 %1106
        %1108 = vrot.lane.b32.xlu0 %v384, 16
        %v1109 = vpop.permute.xlu0 %1108
        %1110 = vrot.lane.b32.xlu0 %v385, 16
        %v1111 = vpop.permute.xlu0 %1110
        %1112 = vrot.lane.b32.xlu0 %v386, 16
        %v1113 = vpop.permute.xlu0 %1112
        %1114 = vrot.lane.b32.xlu0 %v387, 16
        %v1115 = vpop.permute.xlu0 %1114
        %1116 = vrot.lane.b32.xlu0 %v388, 16
        %v1117 = vpop.permute.xlu0 %1116
        %1118 = vrot.lane.b32.xlu0 %v389, 16
        %v1119 = vpop.permute.xlu0 %1118
        %1120 = vrot.lane.b32.xlu0 %v390, 16
        %v1121 = vpop.permute.xlu0 %1120
        %1122 = vrot.lane.b32.xlu0 %v391, 16
        %v1123 = vpop.permute.xlu0 %1122
        %1124 = vrot.lane.b32.xlu0 %v392, 16
        %v1125 = vpop.permute.xlu0 %1124
        %1126 = vrot.lane.b32.xlu0 %v393, 16
        %v1127 = vpop.permute.xlu0 %1126
        %1128 = vrot.lane.b32.xlu0 %v394, 16
        %v1129 = vpop.permute.xlu0 %1128
        %1130 = vrot.lane.b32.xlu0 %v446, 16
        %v1131 = vpop.permute.xlu0 %1130
        %1132 = vrot.lane.b32.xlu0 %v447, 16
        %v1133 = vpop.permute.xlu0 %1132
        %1134 = vrot.lane.b32.xlu0 %v448, 16
        %v1135 = vpop.permute.xlu0 %1134
        %1187 = vrot.lane.b32.xlu0 %v398, 20
        %v1188 = vpop.permute.xlu0 %1187
        %1189 = vrot.lane.b32.xlu0 %v399, 20
        %v1190 = vpop.permute.xlu0 %1189
        %1191 = vrot.lane.b32.xlu0 %v400, 20
        %v1192 = vpop.permute.xlu0 %1191
        %1193 = vrot.lane.b32.xlu0 %v401, 20
        %v1194 = vpop.permute.xlu0 %1193
        %1195 = vrot.lane.b32.xlu0 %v402, 20
        %v1196 = vpop.permute.xlu0 %1195
        %1197 = vrot.lane.b32.xlu0 %v403, 20
        %v1198 = vpop.permute.xlu0 %1197
        %1199 = vrot.lane.b32.xlu0 %v404, 20
        %v1200 = vpop.permute.xlu0 %1199
        %1201 = vrot.lane.b32.xlu0 %v405, 20
        %v1202 = vpop.permute.xlu0 %1201
        %1203 = vrot.lane.b32.xlu0 %v406, 20
        %v1204 = vpop.permute.xlu0 %1203
        %1205 = vrot.lane.b32.xlu0 %v407, 20
        %v1206 = vpop.permute.xlu0 %1205
        %1207 = vrot.lane.b32.xlu0 %v408, 20
        %v1208 = vpop.permute.xlu0 %1207
        %1209 = vrot.lane.b32.xlu0 %v409, 20
        %v1210 = vpop.permute.xlu0 %1209
        %1211 = vrot.lane.b32.xlu0 %v410, 20
        %v1212 = vpop.permute.xlu0 %1211
        %1213 = vrot.lane.b32.xlu0 %v411, 20
        %v1214 = vpop.permute.xlu0 %1213
        %1215 = vrot.lane.b32.xlu0 %v412, 20
        %v1216 = vpop.permute.xlu0 %1215
        %1217 = vrot.lane.b32.xlu0 %v413, 20
        %v1218 = vpop.permute.xlu0 %1217
        %1219 = vrot.lane.b32.xlu0 %v414, 20
        %v1220 = vpop.permute.xlu0 %1219
        %1221 = vrot.lane.b32.xlu0 %v415, 20
        %v1222 = vpop.permute.xlu0 %1221
        %1223 = vrot.lane.b32.xlu0 %v416, 20
        %v1224 = vpop.permute.xlu0 %1223
        %1225 = vrot.lane.b32.xlu0 %v417, 20
        %v1226 = vpop.permute.xlu0 %1225
        %1227 = vrot.lane.b32.xlu0 %v418, 20
        %v1228 = vpop.permute.xlu0 %1227
        %1229 = vrot.lane.b32.xlu0 %v419, 20
        %v1230 = vpop.permute.xlu0 %1229
        %1231 = vrot.lane.b32.xlu0 %v420, 20
        %v1232 = vpop.permute.xlu0 %1231
        %1233 = vrot.lane.b32.xlu0 %v421, 20
        %v1234 = vpop.permute.xlu0 %1233
        %1235 = vrot.lane.b32.xlu0 %v422, 20
        %v1236 = vpop.permute.xlu0 %1235
        %1237 = vrot.lane.b32.xlu0 %v423, 20
        %v1238 = vpop.permute.xlu0 %1237
        %1239 = vrot.lane.b32.xlu0 %v424, 20
        %v1240 = vpop.permute.xlu0 %1239
        %1241 = vrot.lane.b32.xlu0 %v425, 20
        %v1242 = vpop.permute.xlu0 %1241
        %1243 = vrot.lane.b32.xlu0 %v426, 20
        %v1244 = vpop.permute.xlu0 %1243
        %1245 = vrot.lane.b32.xlu0 %v427, 20
        %v1246 = vpop.permute.xlu0 %1245
        %1247 = vrot.lane.b32.xlu0 %v428, 20
        %v1248 = vpop.permute.xlu0 %1247
        %1249 = vrot.lane.b32.xlu0 %v429, 20
        %v1250 = vpop.permute.xlu0 %1249
        %1251 = vrot.lane.b32.xlu0 %v430, 20
        %v1252 = vpop.permute.xlu0 %1251
        %1253 = vrot.lane.b32.xlu0 %v431, 20
        %v1254 = vpop.permute.xlu0 %1253
        %1255 = vrot.lane.b32.xlu0 %v432, 20
        %v1256 = vpop.permute.xlu0 %1255
        %1257 = vrot.lane.b32.xlu0 %v433, 20
        %v1258 = vpop.permute.xlu0 %1257
        %1259 = vrot.lane.b32.xlu0 %v434, 20
        %v1260 = vpop.permute.xlu0 %1259
        %1261 = vrot.lane.b32.xlu0 %v435, 20
        %v1262 = vpop.permute.xlu0 %1261
        %1263 = vrot.lane.b32.xlu0 %v436, 20
        %v1264 = vpop.permute.xlu0 %1263
        %1265 = vrot.lane.b32.xlu0 %v437, 20
        %v1266 = vpop.permute.xlu0 %1265
        %1267 = vrot.lane.b32.xlu0 %v438, 20
        %v1268 = vpop.permute.xlu0 %1267
        %1269 = vrot.lane.b32.xlu0 %v439, 20
        %v1270 = vpop.permute.xlu0 %1269
        %1271 = vrot.lane.b32.xlu0 %v440, 20
        %v1272 = vpop.permute.xlu0 %1271
        %1273 = vrot.lane.b32.xlu0 %v441, 20
        %v1274 = vpop.permute.xlu0 %1273
        %1275 = vrot.lane.b32.xlu0 %v442, 20
        %v1276 = vpop.permute.xlu0 %1275
        %1277 = vrot.lane.b32.xlu0 %v449, 20
        %v1278 = vpop.permute.xlu0 %1277
        %1279 = vrot.lane.b32.xlu0 %v450, 20
        %v1280 = vpop.permute.xlu0 %1279
        %1281 = vrot.lane.b32.xlu0 %v451, 20
        %v1282 = vpop.permute.xlu0 %1281
        %1334 = vrot.lane.b32.xlu0 %v305, 24
        %v1335 = vpop.permute.xlu0 %1334
        %1336 = vrot.lane.b32.xlu0 %v306, 24
        %v1337 = vpop.permute.xlu0 %1336
        %1338 = vrot.lane.b32.xlu0 %v307, 24
        %v1339 = vpop.permute.xlu0 %1338
        %1340 = vrot.lane.b32.xlu0 %v308, 24
        %v1341 = vpop.permute.xlu0 %1340
        %1342 = vrot.lane.b32.xlu0 %v309, 24
        %v1343 = vpop.permute.xlu0 %1342
        %1344 = vrot.lane.b32.xlu0 %v310, 24
        %v1345 = vpop.permute.xlu0 %1344
        %1346 = vrot.lane.b32.xlu0 %v311, 24
        %v1347 = vpop.permute.xlu0 %1346
        %1348 = vrot.lane.b32.xlu0 %v312, 24
        %v1349 = vpop.permute.xlu0 %1348
        %1350 = vrot.lane.b32.xlu0 %v313, 24
        %v1351 = vpop.permute.xlu0 %1350
        %1352 = vrot.lane.b32.xlu0 %v314, 24
        %v1353 = vpop.permute.xlu0 %1352
        %1354 = vrot.lane.b32.xlu0 %v315, 24
        %v1355 = vpop.permute.xlu0 %1354
        %1356 = vrot.lane.b32.xlu0 %v316, 24
        %v1357 = vpop.permute.xlu0 %1356
        %1358 = vrot.lane.b32.xlu0 %v317, 24
        %v1359 = vpop.permute.xlu0 %1358
        %1360 = vrot.lane.b32.xlu0 %v318, 24
        %v1361 = vpop.permute.xlu0 %1360
        %1362 = vrot.lane.b32.xlu0 %v319, 24
        %v1363 = vpop.permute.xlu0 %1362
        %1364 = vrot.lane.b32.xlu0 %v320, 24
        %v1365 = vpop.permute.xlu0 %1364
        %1366 = vrot.lane.b32.xlu0 %v321, 24
        %v1367 = vpop.permute.xlu0 %1366
        %1368 = vrot.lane.b32.xlu0 %v322, 24
        %v1369 = vpop.permute.xlu0 %1368
        %1370 = vrot.lane.b32.xlu0 %v323, 24
        %v1371 = vpop.permute.xlu0 %1370
        %1372 = vrot.lane.b32.xlu0 %v324, 24
        %v1373 = vpop.permute.xlu0 %1372
        %1374 = vrot.lane.b32.xlu0 %v325, 24
        %v1375 = vpop.permute.xlu0 %1374
        %1376 = vrot.lane.b32.xlu0 %v326, 24
        %v1377 = vpop.permute.xlu0 %1376
        %1378 = vrot.lane.b32.xlu0 %v327, 24
        %v1379 = vpop.permute.xlu0 %1378
        %1380 = vrot.lane.b32.xlu0 %v328, 24
        %v1381 = vpop.permute.xlu0 %1380
        %1382 = vrot.lane.b32.xlu0 %v329, 24
        %v1383 = vpop.permute.xlu0 %1382
        %1384 = vrot.lane.b32.xlu0 %v330, 24
        %v1385 = vpop.permute.xlu0 %1384
        %1386 = vrot.lane.b32.xlu0 %v331, 24
        %v1387 = vpop.permute.xlu0 %1386
        %1388 = vrot.lane.b32.xlu0 %v332, 24
        %v1389 = vpop.permute.xlu0 %1388
        %1390 = vrot.lane.b32.xlu0 %v333, 24
        %v1391 = vpop.permute.xlu0 %1390
        %1392 = vrot.lane.b32.xlu0 %v334, 24
        %v1393 = vpop.permute.xlu0 %1392
        %1394 = vrot.lane.b32.xlu0 %v335, 24
        %v1395 = vpop.permute.xlu0 %1394
        %1396 = vrot.lane.b32.xlu0 %v336, 24
        %v1397 = vpop.permute.xlu0 %1396
        %1398 = vrot.lane.b32.xlu0 %v337, 24
        %v1399 = vpop.permute.xlu0 %1398
        %1400 = vrot.lane.b32.xlu0 %v338, 24
        %v1401 = vpop.permute.xlu0 %1400
        %1402 = vrot.lane.b32.xlu0 %v339, 24
        %v1403 = vpop.permute.xlu0 %1402
        %1404 = vrot.lane.b32.xlu0 %v340, 24
        %v1405 = vpop.permute.xlu0 %1404
        %1406 = vrot.lane.b32.xlu0 %v341, 24
        %v1407 = vpop.permute.xlu0 %1406
        %1408 = vrot.lane.b32.xlu0 %v342, 24
        %v1409 = vpop.permute.xlu0 %1408
        %1410 = vrot.lane.b32.xlu0 %v343, 24
        %v1411 = vpop.permute.xlu0 %1410
        %1412 = vrot.lane.b32.xlu0 %v344, 24
        %v1413 = vpop.permute.xlu0 %1412
        %1414 = vrot.lane.b32.xlu0 %v345, 24
        %v1415 = vpop.permute.xlu0 %1414
        %1416 = vrot.lane.b32.xlu0 %v346, 24
        %v1417 = vpop.permute.xlu0 %1416
        %1418 = vrot.lane.b32.xlu0 %v443, 24
        %v1419 = vpop.permute.xlu0 %1418
        %1420 = vrot.lane.b32.xlu0 %v444, 24
        %v1421 = vpop.permute.xlu0 %1420
        %1422 = vrot.lane.b32.xlu0 %v445, 24
        %v1423 = vpop.permute.xlu0 %1422
        %1424 = vrot.lane.b32.xlu0 %v452, 24
        %v1425 = vpop.permute.xlu0 %1424
        %1426 = vrot.lane.b32.xlu0 %v453, 24
        %v1427 = vpop.permute.xlu0 %1426
        %1428 = vrot.lane.b32.xlu0 %v454, 24
        %v1429 = vpop.permute.xlu0 %1428
        %1481 = vrot.lane.b32.xlu0 %v353, 28
        %v1482 = vpop.permute.xlu0 %1481
        %1483 = vrot.lane.b32.xlu0 %v354, 28
        %v1484 = vpop.permute.xlu0 %1483
        %1485 = vrot.lane.b32.xlu0 %v355, 28
        %v1486 = vpop.permute.xlu0 %1485
        %1487 = vrot.lane.b32.xlu0 %v356, 28
        %v1488 = vpop.permute.xlu0 %1487
        %1489 = vrot.lane.b32.xlu0 %v357, 28
        %v1490 = vpop.permute.xlu0 %1489
        %1491 = vrot.lane.b32.xlu0 %v358, 28
        %v1492 = vpop.permute.xlu0 %1491
        %1493 = vrot.lane.b32.xlu0 %v359, 28
        %v1494 = vpop.permute.xlu0 %1493
        %1495 = vrot.lane.b32.xlu0 %v360, 28
        %v1496 = vpop.permute.xlu0 %1495
        %1497 = vrot.lane.b32.xlu0 %v361, 28
        %v1498 = vpop.permute.xlu0 %1497
        %1499 = vrot.lane.b32.xlu0 %v362, 28
        %v1500 = vpop.permute.xlu0 %1499
        %1501 = vrot.lane.b32.xlu0 %v363, 28
        %v1502 = vpop.permute.xlu0 %1501
        %1503 = vrot.lane.b32.xlu0 %v364, 28
        %v1504 = vpop.permute.xlu0 %1503
        %1505 = vrot.lane.b32.xlu0 %v365, 28
        %v1506 = vpop.permute.xlu0 %1505
        %1507 = vrot.lane.b32.xlu0 %v366, 28
        %v1508 = vpop.permute.xlu0 %1507
        %1509 = vrot.lane.b32.xlu0 %v367, 28
        %v1510 = vpop.permute.xlu0 %1509
        %1511 = vrot.lane.b32.xlu0 %v368, 28
        %v1512 = vpop.permute.xlu0 %1511
        %1513 = vrot.lane.b32.xlu0 %v369, 28
        %v1514 = vpop.permute.xlu0 %1513
        %1515 = vrot.lane.b32.xlu0 %v370, 28
        %v1516 = vpop.permute.xlu0 %1515
        %1517 = vrot.lane.b32.xlu0 %v371, 28
        %v1518 = vpop.permute.xlu0 %1517
        %1519 = vrot.lane.b32.xlu0 %v372, 28
        %v1520 = vpop.permute.xlu0 %1519
        %1521 = vrot.lane.b32.xlu0 %v373, 28
        %v1522 = vpop.permute.xlu0 %1521
        %1523 = vrot.lane.b32.xlu0 %v374, 28
        %v1524 = vpop.permute.xlu0 %1523
        %1525 = vrot.lane.b32.xlu0 %v375, 28
        %v1526 = vpop.permute.xlu0 %1525
        %1527 = vrot.lane.b32.xlu0 %v376, 28
        %v1528 = vpop.permute.xlu0 %1527
        %1529 = vrot.lane.b32.xlu0 %v377, 28
        %v1530 = vpop.permute.xlu0 %1529
        %1531 = vrot.lane.b32.xlu0 %v378, 28
        %v1532 = vpop.permute.xlu0 %1531
        %1533 = vrot.lane.b32.xlu0 %v379, 28
        %v1534 = vpop.permute.xlu0 %1533
        %1535 = vrot.lane.b32.xlu0 %v380, 28
        %v1536 = vpop.permute.xlu0 %1535
        %1537 = vrot.lane.b32.xlu0 %v381, 28
        %v1538 = vpop.permute.xlu0 %1537
        %1539 = vrot.lane.b32.xlu0 %v382, 28
        %v1540 = vpop.permute.xlu0 %1539
        %1541 = vrot.lane.b32.xlu0 %v383, 28
        %v1542 = vpop.permute.xlu0 %1541
        %1543 = vrot.lane.b32.xlu0 %v384, 28
        %v1544 = vpop.permute.xlu0 %1543
        %1545 = vrot.lane.b32.xlu0 %v385, 28
        %v1546 = vpop.permute.xlu0 %1545
        %1547 = vrot.lane.b32.xlu0 %v386, 28
        %v1548 = vpop.permute.xlu0 %1547
        %1549 = vrot.lane.b32.xlu0 %v387, 28
        %v1550 = vpop.permute.xlu0 %1549
        %1551 = vrot.lane.b32.xlu0 %v388, 28
        %v1552 = vpop.permute.xlu0 %1551
        %1553 = vrot.lane.b32.xlu0 %v389, 28
        %v1554 = vpop.permute.xlu0 %1553
        %1555 = vrot.lane.b32.xlu0 %v390, 28
        %v1556 = vpop.permute.xlu0 %1555
        %1557 = vrot.lane.b32.xlu0 %v391, 28
        %v1558 = vpop.permute.xlu0 %1557
        %1559 = vrot.lane.b32.xlu0 %v392, 28
        %v1560 = vpop.permute.xlu0 %1559
        %1561 = vrot.lane.b32.xlu0 %v393, 28
        %v1562 = vpop.permute.xlu0 %1561
        %1563 = vrot.lane.b32.xlu0 %v394, 28
        %v1564 = vpop.permute.xlu0 %1563
        %1565 = vrot.lane.b32.xlu0 %v446, 28
        %v1566 = vpop.permute.xlu0 %1565
        %1567 = vrot.lane.b32.xlu0 %v447, 28
        %v1568 = vpop.permute.xlu0 %1567
        %1569 = vrot.lane.b32.xlu0 %v448, 28
        %v1570 = vpop.permute.xlu0 %1569
        %1571 = vrot.lane.b32.xlu0 %v455, 28
        %v1572 = vpop.permute.xlu0 %1571
        %1573 = vrot.lane.b32.xlu0 %v456, 28
        %v1574 = vpop.permute.xlu0 %1573
        %1575 = vrot.lane.b32.xlu0 %v457, 28
        %v1576 = vpop.permute.xlu0 %1575
        %1628 = vrot.lane.b32.xlu0 %v401, 32
        %v1629 = vpop.permute.xlu0 %1628
        %1630 = vrot.lane.b32.xlu0 %v402, 32
        %v1631 = vpop.permute.xlu0 %1630
        %1632 = vrot.lane.b32.xlu0 %v403, 32
        %v1633 = vpop.permute.xlu0 %1632
        %1634 = vrot.lane.b32.xlu0 %v404, 32
        %v1635 = vpop.permute.xlu0 %1634
        %1636 = vrot.lane.b32.xlu0 %v405, 32
        %v1637 = vpop.permute.xlu0 %1636
        %1638 = vrot.lane.b32.xlu0 %v406, 32
        %v1639 = vpop.permute.xlu0 %1638
        %1640 = vrot.lane.b32.xlu0 %v407, 32
        %v1641 = vpop.permute.xlu0 %1640
        %1642 = vrot.lane.b32.xlu0 %v408, 32
        %v1643 = vpop.permute.xlu0 %1642
        %1644 = vrot.lane.b32.xlu0 %v409, 32
        %v1645 = vpop.permute.xlu0 %1644
        %1646 = vrot.lane.b32.xlu0 %v410, 32
        %v1647 = vpop.permute.xlu0 %1646
        %1648 = vrot.lane.b32.xlu0 %v411, 32
        %v1649 = vpop.permute.xlu0 %1648
        %1650 = vrot.lane.b32.xlu0 %v412, 32
        %v1651 = vpop.permute.xlu0 %1650
        %1652 = vrot.lane.b32.xlu0 %v413, 32
        %v1653 = vpop.permute.xlu0 %1652
        %1654 = vrot.lane.b32.xlu0 %v414, 32
        %v1655 = vpop.permute.xlu0 %1654
        %1656 = vrot.lane.b32.xlu0 %v415, 32
        %v1657 = vpop.permute.xlu0 %1656
        %1658 = vrot.lane.b32.xlu0 %v416, 32
        %v1659 = vpop.permute.xlu0 %1658
        %1660 = vrot.lane.b32.xlu0 %v417, 32
        %v1661 = vpop.permute.xlu0 %1660
        %1662 = vrot.lane.b32.xlu0 %v418, 32
        %v1663 = vpop.permute.xlu0 %1662
        %1664 = vrot.lane.b32.xlu0 %v419, 32
        %v1665 = vpop.permute.xlu0 %1664
        %1666 = vrot.lane.b32.xlu0 %v420, 32
        %v1667 = vpop.permute.xlu0 %1666
        %1668 = vrot.lane.b32.xlu0 %v421, 32
        %v1669 = vpop.permute.xlu0 %1668
        %1670 = vrot.lane.b32.xlu0 %v422, 32
        %v1671 = vpop.permute.xlu0 %1670
        %1672 = vrot.lane.b32.xlu0 %v423, 32
        %v1673 = vpop.permute.xlu0 %1672
        %1674 = vrot.lane.b32.xlu0 %v424, 32
        %v1675 = vpop.permute.xlu0 %1674
        %1676 = vrot.lane.b32.xlu0 %v425, 32
        %v1677 = vpop.permute.xlu0 %1676
        %1678 = vrot.lane.b32.xlu0 %v426, 32
        %v1679 = vpop.permute.xlu0 %1678
        %1680 = vrot.lane.b32.xlu0 %v427, 32
        %v1681 = vpop.permute.xlu0 %1680
        %1682 = vrot.lane.b32.xlu0 %v428, 32
        %v1683 = vpop.permute.xlu0 %1682
        %1684 = vrot.lane.b32.xlu0 %v429, 32
        %v1685 = vpop.permute.xlu0 %1684
        %1686 = vrot.lane.b32.xlu0 %v430, 32
        %v1687 = vpop.permute.xlu0 %1686
        %1688 = vrot.lane.b32.xlu0 %v431, 32
        %v1689 = vpop.permute.xlu0 %1688
        %1690 = vrot.lane.b32.xlu0 %v432, 32
        %v1691 = vpop.permute.xlu0 %1690
        %1692 = vrot.lane.b32.xlu0 %v433, 32
        %v1693 = vpop.permute.xlu0 %1692
        %1694 = vrot.lane.b32.xlu0 %v434, 32
        %v1695 = vpop.permute.xlu0 %1694
        %1696 = vrot.lane.b32.xlu0 %v435, 32
        %v1697 = vpop.permute.xlu0 %1696
        %1698 = vrot.lane.b32.xlu0 %v436, 32
        %v1699 = vpop.permute.xlu0 %1698
        %1700 = vrot.lane.b32.xlu0 %v437, 32
        %v1701 = vpop.permute.xlu0 %1700
        %1702 = vrot.lane.b32.xlu0 %v438, 32
        %v1703 = vpop.permute.xlu0 %1702
        %1704 = vrot.lane.b32.xlu0 %v439, 32
        %v1705 = vpop.permute.xlu0 %1704
        %1706 = vrot.lane.b32.xlu0 %v440, 32
        %v1707 = vpop.permute.xlu0 %1706
        %1708 = vrot.lane.b32.xlu0 %v441, 32
        %v1709 = vpop.permute.xlu0 %1708
        %1710 = vrot.lane.b32.xlu0 %v442, 32
        %v1711 = vpop.permute.xlu0 %1710
        %1712 = vrot.lane.b32.xlu0 %v449, 32
        %v1713 = vpop.permute.xlu0 %1712
        %1714 = vrot.lane.b32.xlu0 %v450, 32
        %v1715 = vpop.permute.xlu0 %1714
        %1716 = vrot.lane.b32.xlu0 %v451, 32
        %v1717 = vpop.permute.xlu0 %1716
        %1718 = vrot.lane.b32.xlu0 %v458, 32
        %v1719 = vpop.permute.xlu0 %1718
        %1720 = vrot.lane.b32.xlu0 %v459, 32
        %v1721 = vpop.permute.xlu0 %1720
        %1722 = vrot.lane.b32.xlu0 %v460, 32
        %v1723 = vpop.permute.xlu0 %1722
        %1820 = vrot.lane.b32.xlu0 %v251, 36
        %v1821 = vpop.permute.xlu0 %1820
        %1822 = vrot.lane.b32.xlu0 %v252, 36
        %v1823 = vpop.permute.xlu0 %1822
        %1824 = vrot.lane.b32.xlu0 %v253, 36
        %v1825 = vpop.permute.xlu0 %1824
        %1826 = vrot.lane.b32.xlu0 %v254, 36
        %v1827 = vpop.permute.xlu0 %1826
        %1828 = vrot.lane.b32.xlu0 %v255, 36
        %v1829 = vpop.permute.xlu0 %1828
        %1830 = vrot.lane.b32.xlu0 %v256, 36
        %v1831 = vpop.permute.xlu0 %1830
        %1832 = vrot.lane.b32.xlu0 %v257, 36
        %v1833 = vpop.permute.xlu0 %1832
        %1834 = vrot.lane.b32.xlu0 %v258, 36
        %v1835 = vpop.permute.xlu0 %1834
        %1836 = vrot.lane.b32.xlu0 %v259, 36
        %v1837 = vpop.permute.xlu0 %1836
        %1838 = vrot.lane.b32.xlu0 %v260, 36
        %v1839 = vpop.permute.xlu0 %1838
        %1840 = vrot.lane.b32.xlu0 %v261, 36
        %v1841 = vpop.permute.xlu0 %1840
        %1842 = vrot.lane.b32.xlu0 %v262, 36
        %v1843 = vpop.permute.xlu0 %1842
        %1844 = vrot.lane.b32.xlu0 %v263, 36
        %v1845 = vpop.permute.xlu0 %1844
        %1846 = vrot.lane.b32.xlu0 %v264, 36
        %v1847 = vpop.permute.xlu0 %1846
        %1848 = vrot.lane.b32.xlu0 %v265, 36
        %v1849 = vpop.permute.xlu0 %1848
        %1850 = vrot.lane.b32.xlu0 %v266, 36
        %v1851 = vpop.permute.xlu0 %1850
        %1852 = vrot.lane.b32.xlu0 %v267, 36
        %v1853 = vpop.permute.xlu0 %1852
        %1854 = vrot.lane.b32.xlu0 %v268, 36
        %v1855 = vpop.permute.xlu0 %1854
        %1856 = vrot.lane.b32.xlu0 %v269, 36
        %v1857 = vpop.permute.xlu0 %1856
        %1858 = vrot.lane.b32.xlu0 %v270, 36
        %v1859 = vpop.permute.xlu0 %1858
        %1860 = vrot.lane.b32.xlu0 %v271, 36
        %v1861 = vpop.permute.xlu0 %1860
        %1862 = vrot.lane.b32.xlu0 %v272, 36
        %v1863 = vpop.permute.xlu0 %1862
        %1864 = vrot.lane.b32.xlu0 %v273, 36
        %v1865 = vpop.permute.xlu0 %1864
        %1866 = vrot.lane.b32.xlu0 %v274, 36
        %v1867 = vpop.permute.xlu0 %1866
        %1868 = vrot.lane.b32.xlu0 %v275, 36
        %v1869 = vpop.permute.xlu0 %1868
        %1870 = vrot.lane.b32.xlu0 %v276, 36
        %v1871 = vpop.permute.xlu0 %1870
        %1872 = vrot.lane.b32.xlu0 %v277, 36
        %v1873 = vpop.permute.xlu0 %1872
        %1874 = vrot.lane.b32.xlu0 %v278, 36
        %v1875 = vpop.permute.xlu0 %1874
        %1876 = vrot.lane.b32.xlu0 %v279, 36
        %v1877 = vpop.permute.xlu0 %1876
        %1878 = vrot.lane.b32.xlu0 %v280, 36
        %v1879 = vpop.permute.xlu0 %1878
        %1880 = vrot.lane.b32.xlu0 %v281, 36
        %v1881 = vpop.permute.xlu0 %1880
        %1882 = vrot.lane.b32.xlu0 %v282, 36
        %v1883 = vpop.permute.xlu0 %1882
        %1884 = vrot.lane.b32.xlu0 %v283, 36
        %v1885 = vpop.permute.xlu0 %1884
        %1886 = vrot.lane.b32.xlu0 %v284, 36
        %v1887 = vpop.permute.xlu0 %1886
        %1888 = vrot.lane.b32.xlu0 %v285, 36
        %v1889 = vpop.permute.xlu0 %1888
        %1890 = vrot.lane.b32.xlu0 %v286, 36
        %v1891 = vpop.permute.xlu0 %1890
        %1892 = vrot.lane.b32.xlu0 %v287, 36
        %v1893 = vpop.permute.xlu0 %1892
        %1894 = vrot.lane.b32.xlu0 %v288, 36
        %v1895 = vpop.permute.xlu0 %1894
        %1896 = vrot.lane.b32.xlu0 %v289, 36
        %v1897 = vpop.permute.xlu0 %1896
        %1898 = vrot.lane.b32.xlu0 %v290, 36
        %v1899 = vpop.permute.xlu0 %1898
        %1900 = vrot.lane.b32.xlu0 %v291, 36
        %v1901 = vpop.permute.xlu0 %1900
        %1902 = vrot.lane.b32.xlu0 %v292, 36
        %v1903 = vpop.permute.xlu0 %1902
        %1904 = vrot.lane.b32.xlu0 %v293, 36
        %v1905 = vpop.permute.xlu0 %1904
        %1906 = vrot.lane.b32.xlu0 %v294, 36
        %v1907 = vpop.permute.xlu0 %1906
        %1908 = vrot.lane.b32.xlu0 %v295, 36
        %v1909 = vpop.permute.xlu0 %1908
        %1910 = vrot.lane.b32.xlu0 %v296, 36
        %v1911 = vpop.permute.xlu0 %1910
        %1912 = vrot.lane.b32.xlu0 %v297, 36
        %v1913 = vpop.permute.xlu0 %1912
        %1914 = vrot.lane.b32.xlu0 %v298, 36
        %v1915 = vpop.permute.xlu0 %1914
        %vm1964 = vcmask 31744
        %v1965 = vsel %vm1964, %v299, %v510
        %v1966 = vsel %vm1964, %v300, %v512
        %v1967 = vsel %vm1964, %v301, %v514
        %v1968 = vsel %vm1964, %v302, %v516
        %v1969 = vsel %vm1964, %v303, %v518
        %v1970 = vsel %vm1964, %v304, %v520
        %v1971 = vsel %vm1964, %v305, %v522
        %v1972 = vsel %vm1964, %v306, %v524
        %v1973 = vsel %vm1964, %v307, %v526
        %v1974 = vsel %vm1964, %v308, %v528
        %v1975 = vsel %vm1964, %v309, %v530
        %v1976 = vsel %vm1964, %v310, %v532
        %v1977 = vsel %vm1964, %v311, %v534
        %v1978 = vsel %vm1964, %v312, %v536
        %v1979 = vsel %vm1964, %v313, %v538
        %v1980 = vsel %vm1964, %v314, %v540
        %v1981 = vsel %vm1964, %v315, %v542
        %v1982 = vsel %vm1964, %v316, %v544
        %v1983 = vsel %vm1964, %v317, %v546
        %v1984 = vsel %vm1964, %v318, %v548
        %v1985 = vsel %vm1964, %v319, %v550
        %v1986 = vsel %vm1964, %v320, %v552
        %v1987 = vsel %vm1964, %v321, %v554
        %v1988 = vsel %vm1964, %v322, %v556
        %v1989 = vsel %vm1964, %v323, %v558
        %v1990 = vsel %vm1964, %v324, %v560
        %v1991 = vsel %vm1964, %v325, %v562
        %v1992 = vsel %vm1964, %v326, %v564
        %v1993 = vsel %vm1964, %v327, %v566
        %v1994 = vsel %vm1964, %v328, %v568
        %v1995 = vsel %vm1964, %v329, %v570
        %v1996 = vsel %vm1964, %v330, %v572
        %v1997 = vsel %vm1964, %v331, %v574
        %v1998 = vsel %vm1964, %v332, %v576
        %v1999 = vsel %vm1964, %v333, %v578
        %v2000 = vsel %vm1964, %v334, %v580
        %v2001 = vsel %vm1964, %v335, %v582
        %v2002 = vsel %vm1964, %v336, %v584
        %v2003 = vsel %vm1964, %v337, %v586
        %v2004 = vsel %vm1964, %v338, %v588
        %v2005 = vsel %vm1964, %v339, %v590
        %v2006 = vsel %vm1964, %v340, %v592
        %v2007 = vsel %vm1964, %v341, %v594
        %v2008 = vsel %vm1964, %v342, %v596
        %v2009 = vsel %vm1964, %v343, %v598
        %v2010 = vsel %vm1964, %v344, %v600
        %v2011 = vsel %vm1964, %v345, %v602
        %v2012 = vsel %vm1964, %v346, %v604
        %vm2013 = vcmask 64512
        %v2014 = vsel %vm2013, %v1965, %v702
        %v2015 = vsel %vm2013, %v1966, %v704
        %v2016 = vsel %vm2013, %v1967, %v706
        %v2017 = vsel %vm2013, %v1968, %v708
        %v2018 = vsel %vm2013, %v1969, %v710
        %v2019 = vsel %vm2013, %v1970, %v712
        %v2020 = vsel %vm2013, %v1971, %v714
        %v2021 = vsel %vm2013, %v1972, %v716
        %v2022 = vsel %vm2013, %v1973, %v718
        %v2023 = vsel %vm2013, %v1974, %v720
        %v2024 = vsel %vm2013, %v1975, %v722
        %v2025 = vsel %vm2013, %v1976, %v724
        %v2026 = vsel %vm2013, %v1977, %v726
        %v2027 = vsel %vm2013, %v1978, %v728
        %v2028 = vsel %vm2013, %v1979, %v730
        %v2029 = vsel %vm2013, %v1980, %v732
        %v2030 = vsel %vm2013, %v1981, %v734
        %v2031 = vsel %vm2013, %v1982, %v736
        %v2032 = vsel %vm2013, %v1983, %v738
        %v2033 = vsel %vm2013, %v1984, %v740
        %v2034 = vsel %vm2013, %v1985, %v742
        %v2035 = vsel %vm2013, %v1986, %v744
        %v2036 = vsel %vm2013, %v1987, %v746
        %v2037 = vsel %vm2013, %v1988, %v748
        %v2038 = vsel %vm2013, %v1989, %v750
        %v2039 = vsel %vm2013, %v1990, %v752
        %v2040 = vsel %vm2013, %v1991, %v754
        %v2041 = vsel %vm2013, %v1992, %v756
        %v2042 = vsel %vm2013, %v1993, %v758
        %v2043 = vsel %vm2013, %v1994, %v760
        %v2044 = vsel %vm2013, %v1995, %v762
        %v2045 = vsel %vm2013, %v1996, %v764
        %v2046 = vsel %vm2013, %v1997, %v766
        %v2047 = vsel %vm2013, %v1998, %v768
        %v2048 = vsel %vm2013, %v1999, %v770
        %v2049 = vsel %vm2013, %v2000, %v772
        %v2050 = vsel %vm2013, %v2001, %v774
        %v2051 = vsel %vm2013, %v2002, %v776
        %v2052 = vsel %vm2013, %v2003, %v778
        %v2053 = vsel %vm2013, %v2004, %v780
        %v2054 = vsel %vm2013, %v2005, %v782
        %v2055 = vsel %vm2013, %v2006, %v784
        %v2056 = vsel %vm2013, %v2007, %v786
        %v2057 = vsel %vm2013, %v2008, %v788
        %v2058 = vsel %vm2013, %v2009, %v790
        %v2059 = vsel %vm2013, %v2010, %v792
        %v2060 = vsel %vm2013, %v2011, %v794
        %v2061 = vsel %vm2013, %v2012, %v796
        %vm2062 = vcmask 97280
        %v2063 = vsel %vm2062, %v2014, %v894
        %v2064 = vsel %vm2062, %v2015, %v896
        %v2065 = vsel %vm2062, %v2016, %v898
        %v2066 = vsel %vm2062, %v2017, %v900
        %v2067 = vsel %vm2062, %v2018, %v902
        %v2068 = vsel %vm2062, %v2019, %v904
        %v2069 = vsel %vm2062, %v2020, %v906
        %v2070 = vsel %vm2062, %v2021, %v908
        %v2071 = vsel %vm2062, %v2022, %v910
        %v2072 = vsel %vm2062, %v2023, %v912
        %v2073 = vsel %vm2062, %v2024, %v914
        %v2074 = vsel %vm2062, %v2025, %v916
        %v2075 = vsel %vm2062, %v2026, %v918
        %v2076 = vsel %vm2062, %v2027, %v920
        %v2077 = vsel %vm2062, %v2028, %v922
        %v2078 = vsel %vm2062, %v2029, %v924
        %v2079 = vsel %vm2062, %v2030, %v926
        %v2080 = vsel %vm2062, %v2031, %v928
        %v2081 = vsel %vm2062, %v2032, %v930
        %v2082 = vsel %vm2062, %v2033, %v932
        %v2083 = vsel %vm2062, %v2034, %v934
        %v2084 = vsel %vm2062, %v2035, %v936
        %v2085 = vsel %vm2062, %v2036, %v938
        %v2086 = vsel %vm2062, %v2037, %v940
        %v2087 = vsel %vm2062, %v2038, %v942
        %v2088 = vsel %vm2062, %v2039, %v944
        %v2089 = vsel %vm2062, %v2040, %v946
        %v2090 = vsel %vm2062, %v2041, %v948
        %v2091 = vsel %vm2062, %v2042, %v950
        %v2092 = vsel %vm2062, %v2043, %v952
        %v2093 = vsel %vm2062, %v2044, %v954
        %v2094 = vsel %vm2062, %v2045, %v956
        %v2095 = vsel %vm2062, %v2046, %v958
        %v2096 = vsel %vm2062, %v2047, %v960
        %v2097 = vsel %vm2062, %v2048, %v962
        %v2098 = vsel %vm2062, %v2049, %v964
        %v2099 = vsel %vm2062, %v2050, %v966
        %v2100 = vsel %vm2062, %v2051, %v968
        %v2101 = vsel %vm2062, %v2052, %v970
        %v2102 = vsel %vm2062, %v2053, %v972
        %v2103 = vsel %vm2062, %v2054, %v974
        %v2104 = vsel %vm2062, %v2055, %v976
        %v2105 = vsel %vm2062, %v2056, %v978
        %v2106 = vsel %vm2062, %v2057, %v980
        %v2107 = vsel %vm2062, %v2058, %v982
        %v2108 = vsel %vm2062, %v2059, %v984
        %v2109 = vsel %vm2062, %v2060, %v986
        %v2110 = vsel %vm2062, %v2061, %v988
        %vm2111 = vcmask 130048
        %v2112 = vsel %vm2111, %v2063, %v1041
        %v2113 = vsel %vm2111, %v2064, %v1043
        %v2114 = vsel %vm2111, %v2065, %v1045
        %v2115 = vsel %vm2111, %v2066, %v1047
        %v2116 = vsel %vm2111, %v2067, %v1049
        %v2117 = vsel %vm2111, %v2068, %v1051
        %v2118 = vsel %vm2111, %v2069, %v1053
        %v2119 = vsel %vm2111, %v2070, %v1055
        %v2120 = vsel %vm2111, %v2071, %v1057
        %v2121 = vsel %vm2111, %v2072, %v1059
        %v2122 = vsel %vm2111, %v2073, %v1061
        %v2123 = vsel %vm2111, %v2074, %v1063
        %v2124 = vsel %vm2111, %v2075, %v1065
        %v2125 = vsel %vm2111, %v2076, %v1067
        %v2126 = vsel %vm2111, %v2077, %v1069
        %v2127 = vsel %vm2111, %v2078, %v1071
        %v2128 = vsel %vm2111, %v2079, %v1073
        %v2129 = vsel %vm2111, %v2080, %v1075
        %v2130 = vsel %vm2111, %v2081, %v1077
        %v2131 = vsel %vm2111, %v2082, %v1079
        %v2132 = vsel %vm2111, %v2083, %v1081
        %v2133 = vsel %vm2111, %v2084, %v1083
        %v2134 = vsel %vm2111, %v2085, %v1085
        %v2135 = vsel %vm2111, %v2086, %v1087
        %v2136 = vsel %vm2111, %v2087, %v1089
        %v2137 = vsel %vm2111, %v2088, %v1091
        %v2138 = vsel %vm2111, %v2089, %v1093
        %v2139 = vsel %vm2111, %v2090, %v1095
        %v2140 = vsel %vm2111, %v2091, %v1097
        %v2141 = vsel %vm2111, %v2092, %v1099
        %v2142 = vsel %vm2111, %v2093, %v1101
        %v2143 = vsel %vm2111, %v2094, %v1103
        %v2144 = vsel %vm2111, %v2095, %v1105
        %v2145 = vsel %vm2111, %v2096, %v1107
        %v2146 = vsel %vm2111, %v2097, %v1109
        %v2147 = vsel %vm2111, %v2098, %v1111
        %v2148 = vsel %vm2111, %v2099, %v1113
        %v2149 = vsel %vm2111, %v2100, %v1115
        %v2150 = vsel %vm2111, %v2101, %v1117
        %v2151 = vsel %vm2111, %v2102, %v1119
        %v2152 = vsel %vm2111, %v2103, %v1121
        %v2153 = vsel %vm2111, %v2104, %v1123
        %v2154 = vsel %vm2111, %v2105, %v1125
        %v2155 = vsel %vm2111, %v2106, %v1127
        %v2156 = vsel %vm2111, %v2107, %v1129
        %v2157 = vsel %vm2111, %v2108, %v1131
        %v2158 = vsel %vm2111, %v2109, %v1133
        %v2159 = vsel %vm2111, %v2110, %v1135
        %vm2160 = vcmask 162816
        %v2161 = vsel %vm2160, %v2112, %v1188
        %v2162 = vsel %vm2160, %v2113, %v1190
        %v2163 = vsel %vm2160, %v2114, %v1192
        %v2164 = vsel %vm2160, %v2115, %v1194
        %v2165 = vsel %vm2160, %v2116, %v1196
        %v2166 = vsel %vm2160, %v2117, %v1198
        %v2167 = vsel %vm2160, %v2118, %v1200
        %v2168 = vsel %vm2160, %v2119, %v1202
        %v2169 = vsel %vm2160, %v2120, %v1204
        %v2170 = vsel %vm2160, %v2121, %v1206
        %v2171 = vsel %vm2160, %v2122, %v1208
        %v2172 = vsel %vm2160, %v2123, %v1210
        %v2173 = vsel %vm2160, %v2124, %v1212
        %v2174 = vsel %vm2160, %v2125, %v1214
        %v2175 = vsel %vm2160, %v2126, %v1216
        %v2176 = vsel %vm2160, %v2127, %v1218
        %v2177 = vsel %vm2160, %v2128, %v1220
        %v2178 = vsel %vm2160, %v2129, %v1222
        %v2179 = vsel %vm2160, %v2130, %v1224
        %v2180 = vsel %vm2160, %v2131, %v1226
        %v2181 = vsel %vm2160, %v2132, %v1228
        %v2182 = vsel %vm2160, %v2133, %v1230
        %v2183 = vsel %vm2160, %v2134, %v1232
        %v2184 = vsel %vm2160, %v2135, %v1234
        %v2185 = vsel %vm2160, %v2136, %v1236
        %v2186 = vsel %vm2160, %v2137, %v1238
        %v2187 = vsel %vm2160, %v2138, %v1240
        %v2188 = vsel %vm2160, %v2139, %v1242
        %v2189 = vsel %vm2160, %v2140, %v1244
        %v2190 = vsel %vm2160, %v2141, %v1246
        %v2191 = vsel %vm2160, %v2142, %v1248
        %v2192 = vsel %vm2160, %v2143, %v1250
        %v2193 = vsel %vm2160, %v2144, %v1252
        %v2194 = vsel %vm2160, %v2145, %v1254
        %v2195 = vsel %vm2160, %v2146, %v1256
        %v2196 = vsel %vm2160, %v2147, %v1258
        %v2197 = vsel %vm2160, %v2148, %v1260
        %v2198 = vsel %vm2160, %v2149, %v1262
        %v2199 = vsel %vm2160, %v2150, %v1264
        %v2200 = vsel %vm2160, %v2151, %v1266
        %v2201 = vsel %vm2160, %v2152, %v1268
        %v2202 = vsel %vm2160, %v2153, %v1270
        %v2203 = vsel %vm2160, %v2154, %v1272
        %v2204 = vsel %vm2160, %v2155, %v1274
        %v2205 = vsel %vm2160, %v2156, %v1276
        %v2206 = vsel %vm2160, %v2157, %v1278
        %v2207 = vsel %vm2160, %v2158, %v1280
        %v2208 = vsel %vm2160, %v2159, %v1282
        %vm2209 = vcmask 195584
        %v2210 = vsel %vm2209, %v2161, %v1335
        %v2211 = vsel %vm2209, %v2162, %v1337
        %v2212 = vsel %vm2209, %v2163, %v1339
        %v2213 = vsel %vm2209, %v2164, %v1341
        %v2214 = vsel %vm2209, %v2165, %v1343
        %v2215 = vsel %vm2209, %v2166, %v1345
        %v2216 = vsel %vm2209, %v2167, %v1347
        %v2217 = vsel %vm2209, %v2168, %v1349
        %v2218 = vsel %vm2209, %v2169, %v1351
        %v2219 = vsel %vm2209, %v2170, %v1353
        %v2220 = vsel %vm2209, %v2171, %v1355
        %v2221 = vsel %vm2209, %v2172, %v1357
        %v2222 = vsel %vm2209, %v2173, %v1359
        %v2223 = vsel %vm2209, %v2174, %v1361
        %v2224 = vsel %vm2209, %v2175, %v1363
        %v2225 = vsel %vm2209, %v2176, %v1365
        %v2226 = vsel %vm2209, %v2177, %v1367
        %v2227 = vsel %vm2209, %v2178, %v1369
        %v2228 = vsel %vm2209, %v2179, %v1371
        %v2229 = vsel %vm2209, %v2180, %v1373
        %v2230 = vsel %vm2209, %v2181, %v1375
        %v2231 = vsel %vm2209, %v2182, %v1377
        %v2232 = vsel %vm2209, %v2183, %v1379
        %v2233 = vsel %vm2209, %v2184, %v1381
        %v2234 = vsel %vm2209, %v2185, %v1383
        %v2235 = vsel %vm2209, %v2186, %v1385
        %v2236 = vsel %vm2209, %v2187, %v1387
        %v2237 = vsel %vm2209, %v2188, %v1389
        %v2238 = vsel %vm2209, %v2189, %v1391
        %v2239 = vsel %vm2209, %v2190, %v1393
        %v2240 = vsel %vm2209, %v2191, %v1395
        %v2241 = vsel %vm2209, %v2192, %v1397
        %v2242 = vsel %vm2209, %v2193, %v1399
        %v2243 = vsel %vm2209, %v2194, %v1401
        %v2244 = vsel %vm2209, %v2195, %v1403
        %v2245 = vsel %vm2209, %v2196, %v1405
        %v2246 = vsel %vm2209, %v2197, %v1407
        %v2247 = vsel %vm2209, %v2198, %v1409
        %v2248 = vsel %vm2209, %v2199, %v1411
        %v2249 = vsel %vm2209, %v2200, %v1413
        %v2250 = vsel %vm2209, %v2201, %v1415
        %v2251 = vsel %vm2209, %v2202, %v1417
        %v2252 = vsel %vm2209, %v2203, %v1419
        %v2253 = vsel %vm2209, %v2204, %v1421
        %v2254 = vsel %vm2209, %v2205, %v1423
        %v2255 = vsel %vm2209, %v2206, %v1425
        %v2256 = vsel %vm2209, %v2207, %v1427
        %v2257 = vsel %vm2209, %v2208, %v1429
        %vm2258 = vcmask 228352
        %v2259 = vsel %vm2258, %v2210, %v1482
        %v2260 = vsel %vm2258, %v2211, %v1484
        %v2261 = vsel %vm2258, %v2212, %v1486
        %v2262 = vsel %vm2258, %v2213, %v1488
        %v2263 = vsel %vm2258, %v2214, %v1490
        %v2264 = vsel %vm2258, %v2215, %v1492
        %v2265 = vsel %vm2258, %v2216, %v1494
        %v2266 = vsel %vm2258, %v2217, %v1496
        %v2267 = vsel %vm2258, %v2218, %v1498
        %v2268 = vsel %vm2258, %v2219, %v1500
        %v2269 = vsel %vm2258, %v2220, %v1502
        %v2270 = vsel %vm2258, %v2221, %v1504
        %v2271 = vsel %vm2258, %v2222, %v1506
        %v2272 = vsel %vm2258, %v2223, %v1508
        %v2273 = vsel %vm2258, %v2224, %v1510
        %v2274 = vsel %vm2258, %v2225, %v1512
        %v2275 = vsel %vm2258, %v2226, %v1514
        %v2276 = vsel %vm2258, %v2227, %v1516
        %v2277 = vsel %vm2258, %v2228, %v1518
        %v2278 = vsel %vm2258, %v2229, %v1520
        %v2279 = vsel %vm2258, %v2230, %v1522
        %v2280 = vsel %vm2258, %v2231, %v1524
        %v2281 = vsel %vm2258, %v2232, %v1526
        %v2282 = vsel %vm2258, %v2233, %v1528
        %v2283 = vsel %vm2258, %v2234, %v1530
        %v2284 = vsel %vm2258, %v2235, %v1532
        %v2285 = vsel %vm2258, %v2236, %v1534
        %v2286 = vsel %vm2258, %v2237, %v1536
        %v2287 = vsel %vm2258, %v2238, %v1538
        %v2288 = vsel %vm2258, %v2239, %v1540
        %v2289 = vsel %vm2258, %v2240, %v1542
        %v2290 = vsel %vm2258, %v2241, %v1544
        %v2291 = vsel %vm2258, %v2242, %v1546
        %v2292 = vsel %vm2258, %v2243, %v1548
        %v2293 = vsel %vm2258, %v2244, %v1550
        %v2294 = vsel %vm2258, %v2245, %v1552
        %v2295 = vsel %vm2258, %v2246, %v1554
        %v2296 = vsel %vm2258, %v2247, %v1556
        %v2297 = vsel %vm2258, %v2248, %v1558
        %v2298 = vsel %vm2258, %v2249, %v1560
        %v2299 = vsel %vm2258, %v2250, %v1562
        %v2300 = vsel %vm2258, %v2251, %v1564
        %v2301 = vsel %vm2258, %v2252, %v1566
        %v2302 = vsel %vm2258, %v2253, %v1568
        %v2303 = vsel %vm2258, %v2254, %v1570
        %v2304 = vsel %vm2258, %v2255, %v1572
        %v2305 = vsel %vm2258, %v2256, %v1574
        %v2306 = vsel %vm2258, %v2257, %v1576
        %vm2307 = vcmask 261120
        %v2308 = vsel %vm2307, %v2259, %v1629
        %v2309 = vsel %vm2307, %v2260, %v1631
        %v2310 = vsel %vm2307, %v2261, %v1633
        %v2311 = vsel %vm2307, %v2262, %v1635
        %v2312 = vsel %vm2307, %v2263, %v1637
        %v2313 = vsel %vm2307, %v2264, %v1639
        %v2314 = vsel %vm2307, %v2265, %v1641
        %v2315 = vsel %vm2307, %v2266, %v1643
        %v2316 = vsel %vm2307, %v2267, %v1645
        %v2317 = vsel %vm2307, %v2268, %v1647
        %v2318 = vsel %vm2307, %v2269, %v1649
        %v2319 = vsel %vm2307, %v2270, %v1651
        %v2320 = vsel %vm2307, %v2271, %v1653
        %v2321 = vsel %vm2307, %v2272, %v1655
        %v2322 = vsel %vm2307, %v2273, %v1657
        %v2323 = vsel %vm2307, %v2274, %v1659
        %v2324 = vsel %vm2307, %v2275, %v1661
        %v2325 = vsel %vm2307, %v2276, %v1663
        %v2326 = vsel %vm2307, %v2277, %v1665
        %v2327 = vsel %vm2307, %v2278, %v1667
        %v2328 = vsel %vm2307, %v2279, %v1669
        %v2329 = vsel %vm2307, %v2280, %v1671
        %v2330 = vsel %vm2307, %v2281, %v1673
        %v2331 = vsel %vm2307, %v2282, %v1675
        %v2332 = vsel %vm2307, %v2283, %v1677
        %v2333 = vsel %vm2307, %v2284, %v1679
        %v2334 = vsel %vm2307, %v2285, %v1681
        %v2335 = vsel %vm2307, %v2286, %v1683
        %v2336 = vsel %vm2307, %v2287, %v1685
        %v2337 = vsel %vm2307, %v2288, %v1687
        %v2338 = vsel %vm2307, %v2289, %v1689
        %v2339 = vsel %vm2307, %v2290, %v1691
        %v2340 = vsel %vm2307, %v2291, %v1693
        %v2341 = vsel %vm2307, %v2292, %v1695
        %v2342 = vsel %vm2307, %v2293, %v1697
        %v2343 = vsel %vm2307, %v2294, %v1699
        %v2344 = vsel %vm2307, %v2295, %v1701
        %v2345 = vsel %vm2307, %v2296, %v1703
        %v2346 = vsel %vm2307, %v2297, %v1705
        %v2347 = vsel %vm2307, %v2298, %v1707
        %v2348 = vsel %vm2307, %v2299, %v1709
        %v2349 = vsel %vm2307, %v2300, %v1711
        %v2350 = vsel %vm2307, %v2301, %v1713
        %v2351 = vsel %vm2307, %v2302, %v1715
        %v2352 = vsel %vm2307, %v2303, %v1717
        %v2353 = vsel %vm2307, %v2304, %v1719
        %v2354 = vsel %vm2307, %v2305, %v1721
        %v2355 = vsel %vm2307, %v2306, %v1723
        %vm2356 = vcmask 293888
        %v2357 = vsel %vm2356, %v2308, %v1821
        %v2358 = vsel %vm2356, %v2309, %v1823
        %v2359 = vsel %vm2356, %v2310, %v1825
        %v2360 = vsel %vm2356, %v2311, %v1827
        %v2361 = vsel %vm2356, %v2312, %v1829
        %v2362 = vsel %vm2356, %v2313, %v1831
        %v2363 = vsel %vm2356, %v2314, %v1833
        %v2364 = vsel %vm2356, %v2315, %v1835
        %v2365 = vsel %vm2356, %v2316, %v1837
        %v2366 = vsel %vm2356, %v2317, %v1839
        %v2367 = vsel %vm2356, %v2318, %v1841
        %v2368 = vsel %vm2356, %v2319, %v1843
        %v2369 = vsel %vm2356, %v2320, %v1845
        %v2370 = vsel %vm2356, %v2321, %v1847
        %v2371 = vsel %vm2356, %v2322, %v1849
        %v2372 = vsel %vm2356, %v2323, %v1851
        %v2373 = vsel %vm2356, %v2324, %v1853
        %v2374 = vsel %vm2356, %v2325, %v1855
        %v2375 = vsel %vm2356, %v2326, %v1857
        %v2376 = vsel %vm2356, %v2327, %v1859
        %v2377 = vsel %vm2356, %v2328, %v1861
        %v2378 = vsel %vm2356, %v2329, %v1863
        %v2379 = vsel %vm2356, %v2330, %v1865
        %v2380 = vsel %vm2356, %v2331, %v1867
        %v2381 = vsel %vm2356, %v2332, %v1869
        %v2382 = vsel %vm2356, %v2333, %v1871
        %v2383 = vsel %vm2356, %v2334, %v1873
        %v2384 = vsel %vm2356, %v2335, %v1875
        %v2385 = vsel %vm2356, %v2336, %v1877
        %v2386 = vsel %vm2356, %v2337, %v1879
        %v2387 = vsel %vm2356, %v2338, %v1881
        %v2388 = vsel %vm2356, %v2339, %v1883
        %v2389 = vsel %vm2356, %v2340, %v1885
        %v2390 = vsel %vm2356, %v2341, %v1887
        %v2391 = vsel %vm2356, %v2342, %v1889
        %v2392 = vsel %vm2356, %v2343, %v1891
        %v2393 = vsel %vm2356, %v2344, %v1893
        %v2394 = vsel %vm2356, %v2345, %v1895
        %v2395 = vsel %vm2356, %v2346, %v1897
        %v2396 = vsel %vm2356, %v2347, %v1899
        %v2397 = vsel %vm2356, %v2348, %v1901
        %v2398 = vsel %vm2356, %v2349, %v1903
        %v2399 = vsel %vm2356, %v2350, %v1905
        %v2400 = vsel %vm2356, %v2351, %v1907
        %v2401 = vsel %vm2356, %v2352, %v1909
        %v2402 = vsel %vm2356, %v2353, %v1911
        %v2403 = vsel %vm2356, %v2354, %v1913
        %v2404 = vsel %vm2356, %v2355, %v1915
        %v2405 = vld [vmem:[%s1] sm:$0xff]
        %v2406 = vld [vmem:[%s1 + $0x8] sm:$0xff]
        %v2407 = vld [vmem:[%s1 + $0x10] sm:$0xff]
        %v2408 = vld [vmem:[%s1 + $0x18] sm:$0xff]
        %v2409 = vld [vmem:[%s1 + $0x20] sm:$0x1f]
        %vm2410 = vcmask 302080
        %v2412 = vsel %vm2410, %v2357, 0
        %v2415 = vsel %vm2410, %v2358, 0
        %v2418 = vsel %vm2410, %v2359, 0
        %v2421 = vsel %vm2410, %v2360, 0
        %v2424 = vsel %vm2410, %v2361, 0
        %v2427 = vsel %vm2410, %v2362, 0
        %v2430 = vsel %vm2410, %v2363, 0
        %v2433 = vsel %vm2410, %v2364, 0
        %v2436 = vsel %vm2410, %v2365, 0
        %v2439 = vsel %vm2410, %v2366, 0
        %v2442 = vsel %vm2410, %v2367, 0
        %v2445 = vsel %vm2410, %v2368, 0
        %v2448 = vsel %vm2410, %v2369, 0
        %v2451 = vsel %vm2410, %v2370, 0
        %v2454 = vsel %vm2410, %v2371, 0
        %v2457 = vsel %vm2410, %v2372, 0
        %v2460 = vsel %vm2410, %v2373, 0
        %v2463 = vsel %vm2410, %v2374, 0
        %v2466 = vsel %vm2410, %v2375, 0
        %v2469 = vsel %vm2410, %v2376, 0
        %v2472 = vsel %vm2410, %v2377, 0
        %v2475 = vsel %vm2410, %v2378, 0
        %v2478 = vsel %vm2410, %v2379, 0
        %v2481 = vsel %vm2410, %v2380, 0
        %v2484 = vsel %vm2410, %v2381, 0
        %v2487 = vsel %vm2410, %v2382, 0
        %v2490 = vsel %vm2410, %v2383, 0
        %v2493 = vsel %vm2410, %v2384, 0
        %v2496 = vsel %vm2410, %v2385, 0
        %v2499 = vsel %vm2410, %v2386, 0
        %v2502 = vsel %vm2410, %v2387, 0
        %v2505 = vsel %vm2410, %v2388, 0
        %v2508 = vsel %vm2410, %v2389, 0
        %v2511 = vsel %vm2410, %v2390, 0
        %v2514 = vsel %vm2410, %v2391, 0
        %v2517 = vsel %vm2410, %v2392, 0
        %v2520 = vsel %vm2410, %v2393, 0
        %v2523 = vsel %vm2410, %v2394, 0
        %v2526 = vsel %vm2410, %v2395, 0
        %v2529 = vsel %vm2410, %v2396, 0
        %v2532 = vsel %vm2410, %v2397, 0
        %v2535 = vsel %vm2410, %v2398, 0
        %v2538 = vsel %vm2410, %v2399, 0
        %v2541 = vsel %vm2410, %v2400, 0
        %v2544 = vsel %vm2410, %v2401, 0
        %v2547 = vsel %vm2410, %v2402, 0
        %v2550 = vsel %vm2410, %v2403, 0
        %v2553 = vsel %vm2410, %v2404, 0
        %vm2555 = vcmask 1044480
        %v2557 = vsel %vm2555, %v2409, 0
        %2559 = vmatpush.msra.mxu0 0.0
        %2560 = vmatpush.msra.mxu0 0.0
        %2561 = vmatpush.msra.mxu0 0.0
        %2562 = vmatpush.msra.mxu0 0.0
        %2563 = vmatpush.msra.mxu0 0.0
        %2564 = vmatpush.msra.mxu0 0.0
        %2565 = vmatpush.msra.mxu0 0.0
        %2566 = vmatpush.msra.mxu0 0.0
        %2567 = vmatpush.msra.mxu0 0.0
        %2568 = vmatpush.msra.mxu0 0.0
        %2569 = vmatpush.msra.mxu0 0.0
        %2570 = vmatpush.msra.mxu0 %v2557
        %2571 = vmatpush.msra.mxu0 %v2408
        %2572 = vmatpush.msra.mxu0 %v2407
        %2573 = vmatpush.msra.mxu0 %v2406
        %2574 = vmatpush.msra.mxu0 %v2405
        %2575 = vmatmul.f32.gmra.mxu0 %v2412
        %v2576 = vpop.f32.mrf.mxu0
        %v2577 = vadd.f32 0.0, %v2576
        %2578 = vmatmul.f32.gmra.mxu0 %v2415
        %v2579 = vpop.f32.mrf.mxu0
        %v2580 = vadd.f32 0.0, %v2579
        %2581 = vmatmul.f32.gmra.mxu0 %v2418
        %v2582 = vpop.f32.mrf.mxu0
        %v2583 = vadd.f32 0.0, %v2582
        %2584 = vmatmul.f32.gmra.mxu0 %v2421
        %v2585 = vpop.f32.mrf.mxu0
        %v2586 = vadd.f32 0.0, %v2585
        %2587 = vmatmul.f32.gmra.mxu0 %v2424
        %v2588 = vpop.f32.mrf.mxu0
        %v2589 = vadd.f32 0.0, %v2588
        %2590 = vmatmul.f32.gmra.mxu0 %v2427
        %v2591 = vpop.f32.mrf.mxu0
        %v2592 = vadd.f32 0.0, %v2591
        %2593 = vmatmul.f32.gmra.mxu0 %v2430
        %v2594 = vpop.f32.mrf.mxu0
        %v2595 = vadd.f32 0.0, %v2594
        %2596 = vmatmul.f32.gmra.mxu0 %v2433
        %v2597 = vpop.f32.mrf.mxu0
        %v2598 = vadd.f32 0.0, %v2597
        %2599 = vmatmul.f32.gmra.mxu0 %v2436
        %v2600 = vpop.f32.mrf.mxu0
        %v2601 = vadd.f32 0.0, %v2600
        %2602 = vmatmul.f32.gmra.mxu0 %v2439
        %v2603 = vpop.f32.mrf.mxu0
        %v2604 = vadd.f32 0.0, %v2603
        %2605 = vmatmul.f32.gmra.mxu0 %v2442
        %v2606 = vpop.f32.mrf.mxu0
        %v2607 = vadd.f32 0.0, %v2606
        %2608 = vmatmul.f32.gmra.mxu0 %v2445
        %v2609 = vpop.f32.mrf.mxu0
        %v2610 = vadd.f32 0.0, %v2609
        %2611 = vmatmul.f32.gmra.mxu0 %v2448
        %v2612 = vpop.f32.mrf.mxu0
        %v2613 = vadd.f32 0.0, %v2612
        %2614 = vmatmul.f32.gmra.mxu0 %v2451
        %v2615 = vpop.f32.mrf.mxu0
        %v2616 = vadd.f32 0.0, %v2615
        %2617 = vmatmul.f32.gmra.mxu0 %v2454
        %v2618 = vpop.f32.mrf.mxu0
        %v2619 = vadd.f32 0.0, %v2618
        %2620 = vmatmul.f32.gmra.mxu0 %v2457
        %v2621 = vpop.f32.mrf.mxu0
        %v2622 = vadd.f32 0.0, %v2621
        %2623 = vmatmul.f32.gmra.mxu0 %v2460
        %v2624 = vpop.f32.mrf.mxu0
        %v2625 = vadd.f32 0.0, %v2624
        %2626 = vmatmul.f32.gmra.mxu0 %v2463
        %v2627 = vpop.f32.mrf.mxu0
        %v2628 = vadd.f32 0.0, %v2627
        %2629 = vmatmul.f32.gmra.mxu0 %v2466
        %v2630 = vpop.f32.mrf.mxu0
        %v2631 = vadd.f32 0.0, %v2630
        %2632 = vmatmul.f32.gmra.mxu0 %v2469
        %v2633 = vpop.f32.mrf.mxu0
        %v2634 = vadd.f32 0.0, %v2633
        %2635 = vmatmul.f32.gmra.mxu0 %v2472
        %v2636 = vpop.f32.mrf.mxu0
        %v2637 = vadd.f32 0.0, %v2636
        %2638 = vmatmul.f32.gmra.mxu0 %v2475
        %v2639 = vpop.f32.mrf.mxu0
        %v2640 = vadd.f32 0.0, %v2639
        %2641 = vmatmul.f32.gmra.mxu0 %v2478
        %v2642 = vpop.f32.mrf.mxu0
        %v2643 = vadd.f32 0.0, %v2642
        %2644 = vmatmul.f32.gmra.mxu0 %v2481
        %v2645 = vpop.f32.mrf.mxu0
        %v2646 = vadd.f32 0.0, %v2645
        %2647 = vmatmul.f32.gmra.mxu0 %v2484
        %v2648 = vpop.f32.mrf.mxu0
        %v2649 = vadd.f32 0.0, %v2648
        %2650 = vmatmul.f32.gmra.mxu0 %v2487
        %v2651 = vpop.f32.mrf.mxu0
        %v2652 = vadd.f32 0.0, %v2651
        %2653 = vmatmul.f32.gmra.mxu0 %v2490
        %v2654 = vpop.f32.mrf.mxu0
        %v2655 = vadd.f32 0.0, %v2654
        %2656 = vmatmul.f32.gmra.mxu0 %v2493
        %v2657 = vpop.f32.mrf.mxu0
        %v2658 = vadd.f32 0.0, %v2657
        %2659 = vmatmul.f32.gmra.mxu0 %v2496
        %v2660 = vpop.f32.mrf.mxu0
        %v2661 = vadd.f32 0.0, %v2660
        %2662 = vmatmul.f32.gmra.mxu0 %v2499
        %v2663 = vpop.f32.mrf.mxu0
        %v2664 = vadd.f32 0.0, %v2663
        %2665 = vmatmul.f32.gmra.mxu0 %v2502
        %v2666 = vpop.f32.mrf.mxu0
        %v2667 = vadd.f32 0.0, %v2666
        %2668 = vmatmul.f32.gmra.mxu0 %v2505
        %v2669 = vpop.f32.mrf.mxu0
        %v2670 = vadd.f32 0.0, %v2669
        %2671 = vmatmul.f32.gmra.mxu0 %v2508
        %v2672 = vpop.f32.mrf.mxu0
        %v2673 = vadd.f32 0.0, %v2672
        %2674 = vmatmul.f32.gmra.mxu0 %v2511
        %v2675 = vpop.f32.mrf.mxu0
        %v2676 = vadd.f32 0.0, %v2675
        %2677 = vmatmul.f32.gmra.mxu0 %v2514
        %v2678 = vpop.f32.mrf.mxu0
        %v2679 = vadd.f32 0.0, %v2678
        %2680 = vmatmul.f32.gmra.mxu0 %v2517
        %v2681 = vpop.f32.mrf.mxu0
        %v2682 = vadd.f32 0.0, %v2681
        %2683 = vmatmul.f32.gmra.mxu0 %v2520
        %v2684 = vpop.f32.mrf.mxu0
        %v2685 = vadd.f32 0.0, %v2684
        %2686 = vmatmul.f32.gmra.mxu0 %v2523
        %v2687 = vpop.f32.mrf.mxu0
        %v2688 = vadd.f32 0.0, %v2687
        %2689 = vmatmul.f32.gmra.mxu0 %v2526
        %v2690 = vpop.f32.mrf.mxu0
        %v2691 = vadd.f32 0.0, %v2690
        %2692 = vmatmul.f32.gmra.mxu0 %v2529
        %v2693 = vpop.f32.mrf.mxu0
        %v2694 = vadd.f32 0.0, %v2693
        %2695 = vmatmul.f32.gmra.mxu0 %v2532
        %v2696 = vpop.f32.mrf.mxu0
        %v2697 = vadd.f32 0.0, %v2696
        %2698 = vmatmul.f32.gmra.mxu0 %v2535
        %v2699 = vpop.f32.mrf.mxu0
        %v2700 = vadd.f32 0.0, %v2699
        %2701 = vmatmul.f32.gmra.mxu0 %v2538
        %v2702 = vpop.f32.mrf.mxu0
        %v2703 = vadd.f32 0.0, %v2702
        %2704 = vmatmul.f32.gmra.mxu0 %v2541
        %v2705 = vpop.f32.mrf.mxu0
        %v2706 = vadd.f32 0.0, %v2705
        %2707 = vmatmul.f32.gmra.mxu0 %v2544
        %v2708 = vpop.f32.mrf.mxu0
        %v2709 = vadd.f32 0.0, %v2708
        %2710 = vmatmul.f32.gmra.mxu0 %v2547
        %v2711 = vpop.f32.mrf.mxu0
        %v2712 = vadd.f32 0.0, %v2711
        %2713 = vmatmul.f32.gmra.mxu0 %v2550
        %v2714 = vpop.f32.mrf.mxu0
        %v2715 = vadd.f32 0.0, %v2714
        %2716 = vmatmul.f32.gmra.mxu0 %v2553
        %v2717 = vpop.f32.mrf.mxu0
        %v2718 = vadd.f32 0.0, %v2717
        %2719 = vdwg.mxu0
        %v2720 = vmax.f32 %v2577, 0.0
        %v2721 = vmax.f32 %v2580, 0.0
        %v2722 = vmax.f32 %v2583, 0.0
        %v2723 = vmax.f32 %v2586, 0.0
        %v2724 = vmax.f32 %v2589, 0.0
        %v2725 = vmax.f32 %v2592, 0.0
        %v2726 = vmax.f32 %v2595, 0.0
        %v2727 = vmax.f32 %v2598, 0.0
        %v2728 = vmax.f32 %v2601, 0.0
        %v2729 = vmax.f32 %v2604, 0.0
        %v2730 = vmax.f32 %v2607, 0.0
        %v2731 = vmax.f32 %v2610, 0.0
        %v2732 = vmax.f32 %v2613, 0.0
        %v2733 = vmax.f32 %v2616, 0.0
        %v2734 = vmax.f32 %v2619, 0.0
        %v2735 = vmax.f32 %v2622, 0.0
        %v2736 = vmax.f32 %v2625, 0.0
        %v2737 = vmax.f32 %v2628, 0.0
        %v2738 = vmax.f32 %v2631, 0.0
        %v2739 = vmax.f32 %v2634, 0.0
        %v2740 = vmax.f32 %v2637, 0.0
        %v2741 = vmax.f32 %v2640, 0.0
        %v2742 = vmax.f32 %v2643, 0.0
        %v2743 = vmax.f32 %v2646, 0.0
        %v2744 = vmax.f32 %v2649, 0.0
        %v2745 = vmax.f32 %v2652, 0.0
        %v2746 = vmax.f32 %v2655, 0.0
        %v2747 = vmax.f32 %v2658, 0.0
        %v2748 = vmax.f32 %v2661, 0.0
        %v2749 = vmax.f32 %v2664, 0.0
        %v2750 = vmax.f32 %v2667, 0.0
        %v2751 = vmax.f32 %v2670, 0.0
        %v2752 = vmax.f32 %v2673, 0.0
        %v2753 = vmax.f32 %v2676, 0.0
        %v2754 = vmax.f32 %v2679, 0.0
        %v2755 = vmax.f32 %v2682, 0.0
        %v2756 = vmax.f32 %v2685, 0.0
        %v2757 = vmax.f32 %v2688, 0.0
        %v2758 = vmax.f32 %v2691, 0.0
        %v2759 = vmax.f32 %v2694, 0.0
        %v2760 = vmax.f32 %v2697, 0.0
        %v2761 = vmax.f32 %v2700, 0.0
        %v2762 = vmax.f32 %v2703, 0.0
        %v2763 = vmax.f32 %v2706, 0.0
        %v2764 = vmax.f32 %v2709, 0.0
        %v2765 = vmax.f32 %v2712, 0.0
        %v2766 = vmax.f32 %v2715, 0.0
        %v2767 = vmax.f32 %v2718, 0.0
        %2768 = vset.pattern.permute.xlu0 0
        %2769 = vperm.xlu0 %2768, %v251
        %v2770 = vpop.permute.xlu0 %2769
        %2772 = vset.pattern.permute.xlu0 0
        %2773 = vperm.xlu0 %2772, %v252
        %v2774 = vpop.permute.xlu0 %2773
        %2776 = vset.pattern.permute.xlu0 0
        %2777 = vperm.xlu0 %2776, %v253
        %v2778 = vpop.permute.xlu0 %2777
        %2780 = vset.pattern.permute.xlu0 0
        %2781 = vperm.xlu0 %2780, %v254
        %v2782 = vpop.permute.xlu0 %2781
        %2784 = vset.pattern.permute.xlu0 0
        %2785 = vperm.xlu0 %2784, %v255
        %v2786 = vpop.permute.xlu0 %2785
        %2788 = vset.pattern.permute.xlu0 0
        %2789 = vperm.xlu0 %2788, %v256
        %v2790 = vpop.permute.xlu0 %2789
        %2792 = vset.pattern.permute.xlu0 0
        %2793 = vperm.xlu0 %2792, %v257
        %v2794 = vpop.permute.xlu0 %2793
        %2796 = vset.pattern.permute.xlu0 0
        %2797 = vperm.xlu0 %2796, %v258
        %v2798 = vpop.permute.xlu0 %2797
        %2800 = vset.pattern.permute.xlu0 0
        %2801 = vperm.xlu0 %2800, %v259
        %v2802 = vpop.permute.xlu0 %2801
        %2804 = vset.pattern.permute.xlu0 0
        %2805 = vperm.xlu0 %2804, %v260
        %v2806 = vpop.permute.xlu0 %2805
        %2808 = vset.pattern.permute.xlu0 0
        %2809 = vperm.xlu0 %2808, %v261
        %v2810 = vpop.permute.xlu0 %2809
        %2812 = vset.pattern.permute.xlu0 0
        %2813 = vperm.xlu0 %2812, %v262
        %v2814 = vpop.permute.xlu0 %2813
        %2816 = vset.pattern.permute.xlu0 0
        %2817 = vperm.xlu0 %2816, %v263
        %v2818 = vpop.permute.xlu0 %2817
        %2820 = vset.pattern.permute.xlu0 0
        %2821 = vperm.xlu0 %2820, %v264
        %v2822 = vpop.permute.xlu0 %2821
        %2824 = vset.pattern.permute.xlu0 0
        %2825 = vperm.xlu0 %2824, %v265
        %v2826 = vpop.permute.xlu0 %2825
        %2828 = vset.pattern.permute.xlu0 0
        %2829 = vperm.xlu0 %2828, %v266
        %v2830 = vpop.permute.xlu0 %2829
        %2832 = vset.pattern.permute.xlu0 0
        %2833 = vperm.xlu0 %2832, %v267
        %v2834 = vpop.permute.xlu0 %2833
        %2836 = vset.pattern.permute.xlu0 0
        %2837 = vperm.xlu0 %2836, %v268
        %v2838 = vpop.permute.xlu0 %2837
        %2840 = vset.pattern.permute.xlu0 0
        %2841 = vperm.xlu0 %2840, %v269
        %v2842 = vpop.permute.xlu0 %2841
        %2844 = vset.pattern.permute.xlu0 0
        %2845 = vperm.xlu0 %2844, %v270
        %v2846 = vpop.permute.xlu0 %2845
        %2848 = vset.pattern.permute.xlu0 0
        %2849 = vperm.xlu0 %2848, %v271
        %v2850 = vpop.permute.xlu0 %2849
        %2852 = vset.pattern.permute.xlu0 0
        %2853 = vperm.xlu0 %2852, %v272
        %v2854 = vpop.permute.xlu0 %2853
        %2856 = vset.pattern.permute.xlu0 0
        %2857 = vperm.xlu0 %2856, %v273
        %v2858 = vpop.permute.xlu0 %2857
        %2860 = vset.pattern.permute.xlu0 0
        %2861 = vperm.xlu0 %2860, %v274
        %v2862 = vpop.permute.xlu0 %2861
        %2864 = vset.pattern.permute.xlu0 0
        %2865 = vperm.xlu0 %2864, %v275
        %v2866 = vpop.permute.xlu0 %2865
        %2868 = vset.pattern.permute.xlu0 0
        %2869 = vperm.xlu0 %2868, %v276
        %v2870 = vpop.permute.xlu0 %2869
        %2872 = vset.pattern.permute.xlu0 0
        %2873 = vperm.xlu0 %2872, %v277
        %v2874 = vpop.permute.xlu0 %2873
        %2876 = vset.pattern.permute.xlu0 0
        %2877 = vperm.xlu0 %2876, %v278
        %v2878 = vpop.permute.xlu0 %2877
        %2880 = vset.pattern.permute.xlu0 0
        %2881 = vperm.xlu0 %2880, %v279
        %v2882 = vpop.permute.xlu0 %2881
        %2884 = vset.pattern.permute.xlu0 0
        %2885 = vperm.xlu0 %2884, %v280
        %v2886 = vpop.permute.xlu0 %2885
        %2888 = vset.pattern.permute.xlu0 0
        %2889 = vperm.xlu0 %2888, %v281
        %v2890 = vpop.permute.xlu0 %2889
        %2892 = vset.pattern.permute.xlu0 0
        %2893 = vperm.xlu0 %2892, %v282
        %v2894 = vpop.permute.xlu0 %2893
        %2896 = vset.pattern.permute.xlu0 0
        %2897 = vperm.xlu0 %2896, %v283
        %v2898 = vpop.permute.xlu0 %2897
        %2900 = vset.pattern.permute.xlu0 0
        %2901 = vperm.xlu0 %2900, %v284
        %v2902 = vpop.permute.xlu0 %2901
        %2904 = vset.pattern.permute.xlu0 0
        %2905 = vperm.xlu0 %2904, %v285
        %v2906 = vpop.permute.xlu0 %2905
        %2908 = vset.pattern.permute.xlu0 0
        %2909 = vperm.xlu0 %2908, %v286
        %v2910 = vpop.permute.xlu0 %2909
        %2912 = vset.pattern.permute.xlu0 0
        %2913 = vperm.xlu0 %2912, %v287
        %v2914 = vpop.permute.xlu0 %2913
        %2916 = vset.pattern.permute.xlu0 0
        %2917 = vperm.xlu0 %2916, %v288
        %v2918 = vpop.permute.xlu0 %2917
        %2920 = vset.pattern.permute.xlu0 0
        %2921 = vperm.xlu0 %2920, %v289
        %v2922 = vpop.permute.xlu0 %2921
        %2924 = vset.pattern.permute.xlu0 0
        %2925 = vperm.xlu0 %2924, %v290
        %v2926 = vpop.permute.xlu0 %2925
        %2928 = vset.pattern.permute.xlu0 0
        %2929 = vperm.xlu0 %2928, %v291
        %v2930 = vpop.permute.xlu0 %2929
        %2932 = vset.pattern.permute.xlu0 0
        %2933 = vperm.xlu0 %2932, %v292
        %v2934 = vpop.permute.xlu0 %2933
        %2936 = vset.pattern.permute.xlu0 0
        %2937 = vperm.xlu0 %2936, %v293
        %v2938 = vpop.permute.xlu0 %2937
        %2940 = vset.pattern.permute.xlu0 0
        %2941 = vperm.xlu0 %2940, %v294
        %v2942 = vpop.permute.xlu0 %2941
        %2944 = vset.pattern.permute.xlu0 0
        %2945 = vperm.xlu0 %2944, %v295
        %v2946 = vpop.permute.xlu0 %2945
        %2948 = vset.pattern.permute.xlu0 0
        %2949 = vperm.xlu0 %2948, %v296
        %v2950 = vpop.permute.xlu0 %2949
        %2952 = vset.pattern.permute.xlu0 0
        %2953 = vperm.xlu0 %2952, %v297
        %v2954 = vpop.permute.xlu0 %2953
        %2956 = vset.pattern.permute.xlu0 0
        %2957 = vperm.xlu0 %2956, %v298
        %v2958 = vpop.permute.xlu0 %2957
        %v2960 = vmul.f32 %v2720, %v2770
        %v2961 = vmul.f32 %v2721, %v2774
        %v2962 = vmul.f32 %v2722, %v2778
        %v2963 = vmul.f32 %v2723, %v2782
        %v2964 = vmul.f32 %v2724, %v2786
        %v2965 = vmul.f32 %v2725, %v2790
        %v2966 = vmul.f32 %v2726, %v2794
        %v2967 = vmul.f32 %v2727, %v2798
        %v2968 = vmul.f32 %v2728, %v2802
        %v2969 = vmul.f32 %v2729, %v2806
        %v2970 = vmul.f32 %v2730, %v2810
        %v2971 = vmul.f32 %v2731, %v2814
        %v2972 = vmul.f32 %v2732, %v2818
        %v2973 = vmul.f32 %v2733, %v2822
        %v2974 = vmul.f32 %v2734, %v2826
        %v2975 = vmul.f32 %v2735, %v2830
        %v2976 = vmul.f32 %v2736, %v2834
        %v2977 = vmul.f32 %v2737, %v2838
        %v2978 = vmul.f32 %v2738, %v2842
        %v2979 = vmul.f32 %v2739, %v2846
        %v2980 = vmul.f32 %v2740, %v2850
        %v2981 = vmul.f32 %v2741, %v2854
        %v2982 = vmul.f32 %v2742, %v2858
        %v2983 = vmul.f32 %v2743, %v2862
        %v2984 = vmul.f32 %v2744, %v2866
        %v2985 = vmul.f32 %v2745, %v2870
        %v2986 = vmul.f32 %v2746, %v2874
        %v2987 = vmul.f32 %v2747, %v2878
        %v2988 = vmul.f32 %v2748, %v2882
        %v2989 = vmul.f32 %v2749, %v2886
        %v2990 = vmul.f32 %v2750, %v2890
        %v2991 = vmul.f32 %v2751, %v2894
        %v2992 = vmul.f32 %v2752, %v2898
        %v2993 = vmul.f32 %v2753, %v2902
        %v2994 = vmul.f32 %v2754, %v2906
        %v2995 = vmul.f32 %v2755, %v2910
        %v2996 = vmul.f32 %v2756, %v2914
        %v2997 = vmul.f32 %v2757, %v2918
        %v2998 = vmul.f32 %v2758, %v2922
        %v2999 = vmul.f32 %v2759, %v2926
        %v3000 = vmul.f32 %v2760, %v2930
        %v3001 = vmul.f32 %v2761, %v2934
        %v3002 = vmul.f32 %v2762, %v2938
        %v3003 = vmul.f32 %v2763, %v2942
        %v3004 = vmul.f32 %v2764, %v2946
        %v3005 = vmul.f32 %v2765, %v2950
        %v3006 = vmul.f32 %v2766, %v2954
        %v3007 = vmul.f32 %v2767, %v2958
        %3008 = vst.msk [vmem:[#allocation2] sm:$0xff] %vm2013, 0.0
        %3009 = vst.msk [vmem:[#allocation2 + $0x8] sm:$0xff] %vm2013, 0.0
        %3010 = vst.msk [vmem:[#allocation2 + $0x10] sm:$0xff] %vm2013, 0.0
        %3011 = vst.msk [vmem:[#allocation2 + $0x18] sm:$0xff] %vm2013, 0.0
        %3012 = vst.msk [vmem:[#allocation2 + $0x20] sm:$0xff] %vm2013, 0.0
        %3013 = vst.msk [vmem:[#allocation2 + $0x28] sm:$0xff] %vm2013, 0.0
        %3014 = vst.msk [vmem:[#allocation2 + $0x1b0] sm:$0xff] %vm2013, 0.0
        %3015 = vst.msk [vmem:[#allocation2 + $0x1b8] sm:$0xff] %vm2013, 0.0
        %3016 = vst.msk [vmem:[#allocation2 + $0x1c0] sm:$0xff] %vm2013, 0.0
        %3017 = vst.msk [vmem:[#allocation2 + $0x1c8] sm:$0xff] %vm2013, 0.0
        %3018 = vst.msk [vmem:[#allocation2 + $0x1d0] sm:$0xff] %vm2013, 0.0
        %3019 = vst.msk [vmem:[#allocation2 + $0x1d8] sm:$0xff] %vm2013, 0.0
        %3020 = vst.msk [vmem:[#allocation2 + $0x30] sm:$0xff] %vm2013, %v2960
        %3021 = vst.msk [vmem:[#allocation2 + $0x38] sm:$0xff] %vm2013, %v2961
        %3022 = vst.msk [vmem:[#allocation2 + $0x40] sm:$0xff] %vm2013, %v2962
        %3023 = vst.msk [vmem:[#allocation2 + $0x48] sm:$0xff] %vm2013, %v2963
        %3024 = vst.msk [vmem:[#allocation2 + $0x50] sm:$0xff] %vm2013, %v2964
        %3025 = vst.msk [vmem:[#allocation2 + $0x58] sm:$0xff] %vm2013, %v2965
        %3026 = vst.msk [vmem:[#allocation2 + $0x60] sm:$0xff] %vm2013, %v2966
        %3027 = vst.msk [vmem:[#allocation2 + $0x68] sm:$0xff] %vm2013, %v2967
        %3028 = vst.msk [vmem:[#allocation2 + $0x70] sm:$0xff] %vm2013, %v2968
        %3029 = vst.msk [vmem:[#allocation2 + $0x78] sm:$0xff] %vm2013, %v2969
        %3030 = vst.msk [vmem:[#allocation2 + $0x80] sm:$0xff] %vm2013, %v2970
        %3031 = vst.msk [vmem:[#allocation2 + $0x88] sm:$0xff] %vm2013, %v2971
        %3032 = vst.msk [vmem:[#allocation2 + $0x90] sm:$0xff] %vm2013, %v2972
        %3033 = vst.msk [vmem:[#allocation2 + $0x98] sm:$0xff] %vm2013, %v2973
        %3034 = vst.msk [vmem:[#allocation2 + $0xa0] sm:$0xff] %vm2013, %v2974
        %3035 = vst.msk [vmem:[#allocation2 + $0xa8] sm:$0xff] %vm2013, %v2975
        %3036 = vst.msk [vmem:[#allocation2 + $0xb0] sm:$0xff] %vm2013, %v2976
        %3037 = vst.msk [vmem:[#allocation2 + $0xb8] sm:$0xff] %vm2013, %v2977
        %3038 = vst.msk [vmem:[#allocation2 + $0xc0] sm:$0xff] %vm2013, %v2978
        %3039 = vst.msk [vmem:[#allocation2 + $0xc8] sm:$0xff] %vm2013, %v2979
        %3040 = vst.msk [vmem:[#allocation2 + $0xd0] sm:$0xff] %vm2013, %v2980
        %3041 = vst.msk [vmem:[#allocation2 + $0xd8] sm:$0xff] %vm2013, %v2981
        %3042 = vst.msk [vmem:[#allocation2 + $0xe0] sm:$0xff] %vm2013, %v2982
        %3043 = vst.msk [vmem:[#allocation2 + $0xe8] sm:$0xff] %vm2013, %v2983
        %3044 = vst.msk [vmem:[#allocation2 + $0xf0] sm:$0xff] %vm2013, %v2984
        %3045 = vst.msk [vmem:[#allocation2 + $0xf8] sm:$0xff] %vm2013, %v2985
        %3046 = vst.msk [vmem:[#allocation2 + $0x100] sm:$0xff] %vm2013, %v2986
        %3047 = vst.msk [vmem:[#allocation2 + $0x108] sm:$0xff] %vm2013, %v2987
        %3048 = vst.msk [vmem:[#allocation2 + $0x110] sm:$0xff] %vm2013, %v2988
        %3049 = vst.msk [vmem:[#allocation2 + $0x118] sm:$0xff] %vm2013, %v2989
        %3050 = vst.msk [vmem:[#allocation2 + $0x120] sm:$0xff] %vm2013, %v2990
        %3051 = vst.msk [vmem:[#allocation2 + $0x128] sm:$0xff] %vm2013, %v2991
        %3052 = vst.msk [vmem:[#allocation2 + $0x130] sm:$0xff] %vm2013, %v2992
        %3053 = vst.msk [vmem:[#allocation2 + $0x138] sm:$0xff] %vm2013, %v2993
        %3054 = vst.msk [vmem:[#allocation2 + $0x140] sm:$0xff] %vm2013, %v2994
        %3055 = vst.msk [vmem:[#allocation2 + $0x148] sm:$0xff] %vm2013, %v2995
        %3056 = vst.msk [vmem:[#allocation2 + $0x150] sm:$0xff] %vm2013, %v2996
        %3057 = vst.msk [vmem:[#allocation2 + $0x158] sm:$0xff] %vm2013, %v2997
        %3058 = vst.msk [vmem:[#allocation2 + $0x160] sm:$0xff] %vm2013, %v2998
        %3059 = vst.msk [vmem:[#allocation2 + $0x168] sm:$0xff] %vm2013, %v2999
        %3060 = vst.msk [vmem:[#allocation2 + $0x170] sm:$0xff] %vm2013, %v3000
        %3061 = vst.msk [vmem:[#allocation2 + $0x178] sm:$0xff] %vm2013, %v3001
        %3062 = vst.msk [vmem:[#allocation2 + $0x180] sm:$0xff] %vm2013, %v3002
        %3063 = vst.msk [vmem:[#allocation2 + $0x188] sm:$0xff] %vm2013, %v3003
        %3064 = vst.msk [vmem:[#allocation2 + $0x190] sm:$0xff] %vm2013, %v3004
        %3065 = vst.msk [vmem:[#allocation2 + $0x198] sm:$0xff] %vm2013, %v3005
        %3066 = vst.msk [vmem:[#allocation2 + $0x1a0] sm:$0xff] %vm2013, %v3006
        %3067 = vst.msk [vmem:[#allocation2 + $0x1a8] sm:$0xff] %vm2013, %v3007
        %v3068 = vld [vmem:[#allocation2 + $0x17] sm:$0xff]
        %v3069 = vld [vmem:[#allocation2 + $0x1f] sm:$0xff]
        %v3070 = vld [vmem:[#allocation2 + $0x27] sm:$0xff]
        %v3071 = vld [vmem:[#allocation2 + $0x2f] sm:$0xff]
        %v3072 = vld [vmem:[#allocation2 + $0x37] sm:$0xff]
        %v3073 = vld [vmem:[#allocation2 + $0x3f] sm:$0xff]
        %v3074 = vld [vmem:[#allocation2 + $0x47] sm:$0xff]
        %v3075 = vld [vmem:[#allocation2 + $0x4f] sm:$0xff]
        %v3076 = vld [vmem:[#allocation2 + $0x57] sm:$0xff]
        %v3077 = vld [vmem:[#allocation2 + $0x5f] sm:$0xff]
        %v3078 = vld [vmem:[#allocation2 + $0x67] sm:$0xff]
        %v3079 = vld [vmem:[#allocation2 + $0x6f] sm:$0xff]
        %v3080 = vld [vmem:[#allocation2 + $0x77] sm:$0xff]
        %v3081 = vld [vmem:[#allocation2 + $0x7f] sm:$0xff]
        %v3082 = vld [vmem:[#allocation2 + $0x87] sm:$0xff]
        %v3083 = vld [vmem:[#allocation2 + $0x8f] sm:$0xff]
        %v3084 = vld [vmem:[#allocation2 + $0x97] sm:$0xff]
        %v3085 = vld [vmem:[#allocation2 + $0x9f] sm:$0xff]
        %v3086 = vld [vmem:[#allocation2 + $0xa7] sm:$0xff]
        %v3087 = vld [vmem:[#allocation2 + $0xaf] sm:$0xff]
        %v3088 = vld [vmem:[#allocation2 + $0xb7] sm:$0xff]
        %v3089 = vld [vmem:[#allocation2 + $0xbf] sm:$0xff]
        %v3090 = vld [vmem:[#allocation2 + $0xc7] sm:$0xff]
        %v3091 = vld [vmem:[#allocation2 + $0xcf] sm:$0xff]
        %v3092 = vld [vmem:[#allocation2 + $0xd7] sm:$0xff]
        %v3093 = vld [vmem:[#allocation2 + $0xdf] sm:$0xff]
        %v3094 = vld [vmem:[#allocation2 + $0xe7] sm:$0xff]
        %v3095 = vld [vmem:[#allocation2 + $0xef] sm:$0xff]
        %v3096 = vld [vmem:[#allocation2 + $0xf7] sm:$0xff]
        %v3097 = vld [vmem:[#allocation2 + $0xff] sm:$0xff]
        %v3098 = vld [vmem:[#allocation2 + $0x107] sm:$0xff]
        %v3099 = vld [vmem:[#allocation2 + $0x10f] sm:$0xff]
        %v3100 = vld [vmem:[#allocation2 + $0x117] sm:$0xff]
        %v3101 = vld [vmem:[#allocation2 + $0x11f] sm:$0xff]
        %v3102 = vld [vmem:[#allocation2 + $0x127] sm:$0xff]
        %v3103 = vld [vmem:[#allocation2 + $0x12f] sm:$0xff]
        %v3104 = vld [vmem:[#allocation2 + $0x137] sm:$0xff]
        %v3105 = vld [vmem:[#allocation2 + $0x13f] sm:$0xff]
        %v3106 = vld [vmem:[#allocation2 + $0x147] sm:$0xff]
        %v3107 = vld [vmem:[#allocation2 + $0x14f] sm:$0xff]
        %v3108 = vld [vmem:[#allocation2 + $0x157] sm:$0xff]
        %v3109 = vld [vmem:[#allocation2 + $0x15f] sm:$0xff]
        %v3110 = vld [vmem:[#allocation2 + $0x167] sm:$0xff]
        %v3111 = vld [vmem:[#allocation2 + $0x16f] sm:$0xff]
        %v3112 = vld [vmem:[#allocation2 + $0x177] sm:$0xff]
        %v3113 = vld [vmem:[#allocation2 + $0x17f] sm:$0xff]
        %v3114 = vld [vmem:[#allocation2 + $0x187] sm:$0xff]
        %v3115 = vld [vmem:[#allocation2 + $0x18f] sm:$0xff]
        %v3116 = vld [vmem:[#allocation2 + $0x18] sm:$0xff]
        %v3117 = vld [vmem:[#allocation2 + $0x20] sm:$0xff]
        %v3118 = vld [vmem:[#allocation2 + $0x28] sm:$0xff]
        %v3119 = vld [vmem:[#allocation2 + $0x30] sm:$0xff]
        %v3120 = vld [vmem:[#allocation2 + $0x38] sm:$0xff]
        %v3121 = vld [vmem:[#allocation2 + $0x40] sm:$0xff]
        %v3122 = vld [vmem:[#allocation2 + $0x48] sm:$0xff]
        %v3123 = vld [vmem:[#allocation2 + $0x50] sm:$0xff]
        %v3124 = vld [vmem:[#allocation2 + $0x58] sm:$0xff]
        %v3125 = vld [vmem:[#allocation2 + $0x60] sm:$0xff]
        %v3126 = vld [vmem:[#allocation2 + $0x68] sm:$0xff]
        %v3127 = vld [vmem:[#allocation2 + $0x70] sm:$0xff]
        %v3128 = vld [vmem:[#allocation2 + $0x78] sm:$0xff]
        %v3129 = vld [vmem:[#allocation2 + $0x80] sm:$0xff]
        %v3130 = vld [vmem:[#allocation2 + $0x88] sm:$0xff]
        %v3131 = vld [vmem:[#allocation2 + $0x90] sm:$0xff]
        %v3132 = vld [vmem:[#allocation2 + $0x98] sm:$0xff]
        %v3133 = vld [vmem:[#allocation2 + $0xa0] sm:$0xff]
        %v3134 = vld [vmem:[#allocation2 + $0xa8] sm:$0xff]
        %v3135 = vld [vmem:[#allocation2 + $0xb0] sm:$0xff]
        %v3136 = vld [vmem:[#allocation2 + $0xb8] sm:$0xff]
        %v3137 = vld [vmem:[#allocation2 + $0xc0] sm:$0xff]
        %v3138 = vld [vmem:[#allocation2 + $0xc8] sm:$0xff]
        %v3139 = vld [vmem:[#allocation2 + $0xd0] sm:$0xff]
        %v3140 = vld [vmem:[#allocation2 + $0xd8] sm:$0xff]
        %v3141 = vld [vmem:[#allocation2 + $0xe0] sm:$0xff]
        %v3142 = vld [vmem:[#allocation2 + $0xe8] sm:$0xff]
        %v3143 = vld [vmem:[#allocation2 + $0xf0] sm:$0xff]
        %v3144 = vld [vmem:[#allocation2 + $0xf8] sm:$0xff]
        %v3145 = vld [vmem:[#allocation2 + $0x100] sm:$0xff]
        %v3146 = vld [vmem:[#allocation2 + $0x108] sm:$0xff]
        %v3147 = vld [vmem:[#allocation2 + $0x110] sm:$0xff]
        %v3148 = vld [vmem:[#allocation2 + $0x118] sm:$0xff]
        %v3149 = vld [vmem:[#allocation2 + $0x120] sm:$0xff]
        %v3150 = vld [vmem:[#allocation2 + $0x128] sm:$0xff]
        %v3151 = vld [vmem:[#allocation2 + $0x130] sm:$0xff]
        %v3152 = vld [vmem:[#allocation2 + $0x138] sm:$0xff]
        %v3153 = vld [vmem:[#allocation2 + $0x140] sm:$0xff]
        %v3154 = vld [vmem:[#allocation2 + $0x148] sm:$0xff]
        %v3155 = vld [vmem:[#allocation2 + $0x150] sm:$0xff]
        %v3156 = vld [vmem:[#allocation2 + $0x158] sm:$0xff]
        %v3157 = vld [vmem:[#allocation2 + $0x160] sm:$0xff]
        %v3158 = vld [vmem:[#allocation2 + $0x168] sm:$0xff]
        %v3159 = vld [vmem:[#allocation2 + $0x170] sm:$0xff]
        %v3160 = vld [vmem:[#allocation2 + $0x178] sm:$0xff]
        %v3161 = vld [vmem:[#allocation2 + $0x180] sm:$0xff]
        %v3162 = vld [vmem:[#allocation2 + $0x188] sm:$0xff]
        %v3163 = vld [vmem:[#allocation2 + $0x190] sm:$0xff]
        %v3164 = vld [vmem:[#allocation2 + $0x19] sm:$0xff]
        %v3165 = vld [vmem:[#allocation2 + $0x21] sm:$0xff]
        %v3166 = vld [vmem:[#allocation2 + $0x29] sm:$0xff]
        %v3167 = vld [vmem:[#allocation2 + $0x31] sm:$0xff]
        %v3168 = vld [vmem:[#allocation2 + $0x39] sm:$0xff]
        %v3169 = vld [vmem:[#allocation2 + $0x41] sm:$0xff]
        %v3170 = vld [vmem:[#allocation2 + $0x49] sm:$0xff]
        %v3171 = vld [vmem:[#allocation2 + $0x51] sm:$0xff]
        %v3172 = vld [vmem:[#allocation2 + $0x59] sm:$0xff]
        %v3173 = vld [vmem:[#allocation2 + $0x61] sm:$0xff]
        %v3174 = vld [vmem:[#allocation2 + $0x69] sm:$0xff]
        %v3175 = vld [vmem:[#allocation2 + $0x71] sm:$0xff]
        %v3176 = vld [vmem:[#allocation2 + $0x79] sm:$0xff]
        %v3177 = vld [vmem:[#allocation2 + $0x81] sm:$0xff]
        %v3178 = vld [vmem:[#allocation2 + $0x89] sm:$0xff]
        %v3179 = vld [vmem:[#allocation2 + $0x91] sm:$0xff]
        %v3180 = vld [vmem:[#allocation2 + $0x99] sm:$0xff]
        %v3181 = vld [vmem:[#allocation2 + $0xa1] sm:$0xff]
        %v3182 = vld [vmem:[#allocation2 + $0xa9] sm:$0xff]
        %v3183 = vld [vmem:[#allocation2 + $0xb1] sm:$0xff]
        %v3184 = vld [vmem:[#allocation2 + $0xb9] sm:$0xff]
        %v3185 = vld [vmem:[#allocation2 + $0xc1] sm:$0xff]
        %v3186 = vld [vmem:[#allocation2 + $0xc9] sm:$0xff]
        %v3187 = vld [vmem:[#allocation2 + $0xd1] sm:$0xff]
        %v3188 = vld [vmem:[#allocation2 + $0xd9] sm:$0xff]
        %v3189 = vld [vmem:[#allocation2 + $0xe1] sm:$0xff]
        %v3190 = vld [vmem:[#allocation2 + $0xe9] sm:$0xff]
        %v3191 = vld [vmem:[#allocation2 + $0xf1] sm:$0xff]
        %v3192 = vld [vmem:[#allocation2 + $0xf9] sm:$0xff]
        %v3193 = vld [vmem:[#allocation2 + $0x101] sm:$0xff]
        %v3194 = vld [vmem:[#allocation2 + $0x109] sm:$0xff]
        %v3195 = vld [vmem:[#allocation2 + $0x111] sm:$0xff]
        %v3196 = vld [vmem:[#allocation2 + $0x119] sm:$0xff]
        %v3197 = vld [vmem:[#allocation2 + $0x121] sm:$0xff]
        %v3198 = vld [vmem:[#allocation2 + $0x129] sm:$0xff]
        %v3199 = vld [vmem:[#allocation2 + $0x131] sm:$0xff]
        %v3200 = vld [vmem:[#allocation2 + $0x139] sm:$0xff]
        %v3201 = vld [vmem:[#allocation2 + $0x141] sm:$0xff]
        %v3202 = vld [vmem:[#allocation2 + $0x149] sm:$0xff]
        %v3203 = vld [vmem:[#allocation2 + $0x151] sm:$0xff]
        %v3204 = vld [vmem:[#allocation2 + $0x159] sm:$0xff]
        %v3205 = vld [vmem:[#allocation2 + $0x161] sm:$0xff]
        %v3206 = vld [vmem:[#allocation2 + $0x169] sm:$0xff]
        %v3207 = vld [vmem:[#allocation2 + $0x171] sm:$0xff]
        %v3208 = vld [vmem:[#allocation2 + $0x179] sm:$0xff]
        %v3209 = vld [vmem:[#allocation2 + $0x181] sm:$0xff]
        %v3210 = vld [vmem:[#allocation2 + $0x189] sm:$0xff]
        %v3211 = vld [vmem:[#allocation2 + $0x191] sm:$0xff]
        %v3212 = vld [vmem:[#allocation2 + $0x197] sm:$0xff]
        %v3213 = vld [vmem:[#allocation2 + $0x19f] sm:$0xff]
        %v3214 = vld [vmem:[#allocation2 + $0x1a7] sm:$0xff]
        %v3215 = vld [vmem:[#allocation2 + $0x198] sm:$0xff]
        %v3216 = vld [vmem:[#allocation2 + $0x1a0] sm:$0xff]
        %v3217 = vld [vmem:[#allocation2 + $0x1a8] sm:$0xff]
        %v3218 = vld [vmem:[#allocation2 + $0x199] sm:$0xff]
        %v3219 = vld [vmem:[#allocation2 + $0x1a1] sm:$0xff]
        %v3220 = vld [vmem:[#allocation2 + $0x1a9] sm:$0xff]
        %v3221 = vld [vmem:[#allocation2 + $0x1af] sm:$0xff]
        %v3222 = vld [vmem:[#allocation2 + $0x1b7] sm:$0xff]
        %v3223 = vld [vmem:[#allocation2 + $0x1bf] sm:$0xff]
        %v3224 = vld [vmem:[#allocation2 + $0x1b0] sm:$0xff]
        %v3225 = vld [vmem:[#allocation2 + $0x1b8] sm:$0xff]
        %v3226 = vld [vmem:[#allocation2 + $0x1c0] sm:$0xff]
        %v3227 = vld [vmem:[#allocation2 + $0x1b1] sm:$0xff]
        %v3228 = vld [vmem:[#allocation2 + $0x1b9] sm:$0xff]
        %v3229 = vld [vmem:[#allocation2 + $0x1c1] sm:$0xff]
        %3278 = vrot.lane.b32.xlu0 %v3116, 8
        %v3279 = vpop.permute.xlu0 %3278
        %3280 = vrot.lane.b32.xlu0 %v3117, 8
        %v3281 = vpop.permute.xlu0 %3280
        %3282 = vrot.lane.b32.xlu0 %v3118, 8
        %v3283 = vpop.permute.xlu0 %3282
        %3284 = vrot.lane.b32.xlu0 %v3119, 8
        %v3285 = vpop.permute.xlu0 %3284
        %3286 = vrot.lane.b32.xlu0 %v3120, 8
        %v3287 = vpop.permute.xlu0 %3286
        %3288 = vrot.lane.b32.xlu0 %v3121, 8
        %v3289 = vpop.permute.xlu0 %3288
        %3290 = vrot.lane.b32.xlu0 %v3122, 8
        %v3291 = vpop.permute.xlu0 %3290
        %3292 = vrot.lane.b32.xlu0 %v3123, 8
        %v3293 = vpop.permute.xlu0 %3292
        %3294 = vrot.lane.b32.xlu0 %v3124, 8
        %v3295 = vpop.permute.xlu0 %3294
        %3296 = vrot.lane.b32.xlu0 %v3125, 8
        %v3297 = vpop.permute.xlu0 %3296
        %3298 = vrot.lane.b32.xlu0 %v3126, 8
        %v3299 = vpop.permute.xlu0 %3298
        %3300 = vrot.lane.b32.xlu0 %v3127, 8
        %v3301 = vpop.permute.xlu0 %3300
        %3302 = vrot.lane.b32.xlu0 %v3128, 8
        %v3303 = vpop.permute.xlu0 %3302
        %3304 = vrot.lane.b32.xlu0 %v3129, 8
        %v3305 = vpop.permute.xlu0 %3304
        %3306 = vrot.lane.b32.xlu0 %v3130, 8
        %v3307 = vpop.permute.xlu0 %3306
        %3308 = vrot.lane.b32.xlu0 %v3131, 8
        %v3309 = vpop.permute.xlu0 %3308
        %3310 = vrot.lane.b32.xlu0 %v3132, 8
        %v3311 = vpop.permute.xlu0 %3310
        %3312 = vrot.lane.b32.xlu0 %v3133, 8
        %v3313 = vpop.permute.xlu0 %3312
        %3314 = vrot.lane.b32.xlu0 %v3134, 8
        %v3315 = vpop.permute.xlu0 %3314
        %3316 = vrot.lane.b32.xlu0 %v3135, 8
        %v3317 = vpop.permute.xlu0 %3316
        %3318 = vrot.lane.b32.xlu0 %v3136, 8
        %v3319 = vpop.permute.xlu0 %3318
        %3320 = vrot.lane.b32.xlu0 %v3137, 8
        %v3321 = vpop.permute.xlu0 %3320
        %3322 = vrot.lane.b32.xlu0 %v3138, 8
        %v3323 = vpop.permute.xlu0 %3322
        %3324 = vrot.lane.b32.xlu0 %v3139, 8
        %v3325 = vpop.permute.xlu0 %3324
        %3326 = vrot.lane.b32.xlu0 %v3140, 8
        %v3327 = vpop.permute.xlu0 %3326
        %3328 = vrot.lane.b32.xlu0 %v3141, 8
        %v3329 = vpop.permute.xlu0 %3328
        %3330 = vrot.lane.b32.xlu0 %v3142, 8
        %v3331 = vpop.permute.xlu0 %3330
        %3332 = vrot.lane.b32.xlu0 %v3143, 8
        %v3333 = vpop.permute.xlu0 %3332
        %3334 = vrot.lane.b32.xlu0 %v3144, 8
        %v3335 = vpop.permute.xlu0 %3334
        %3336 = vrot.lane.b32.xlu0 %v3145, 8
        %v3337 = vpop.permute.xlu0 %3336
        %3338 = vrot.lane.b32.xlu0 %v3146, 8
        %v3339 = vpop.permute.xlu0 %3338
        %3340 = vrot.lane.b32.xlu0 %v3147, 8
        %v3341 = vpop.permute.xlu0 %3340
        %3342 = vrot.lane.b32.xlu0 %v3148, 8
        %v3343 = vpop.permute.xlu0 %3342
        %3344 = vrot.lane.b32.xlu0 %v3149, 8
        %v3345 = vpop.permute.xlu0 %3344
        %3346 = vrot.lane.b32.xlu0 %v3150, 8
        %v3347 = vpop.permute.xlu0 %3346
        %3348 = vrot.lane.b32.xlu0 %v3151, 8
        %v3349 = vpop.permute.xlu0 %3348
        %3350 = vrot.lane.b32.xlu0 %v3152, 8
        %v3351 = vpop.permute.xlu0 %3350
        %3352 = vrot.lane.b32.xlu0 %v3153, 8
        %v3353 = vpop.permute.xlu0 %3352
        %3354 = vrot.lane.b32.xlu0 %v3154, 8
        %v3355 = vpop.permute.xlu0 %3354
        %3356 = vrot.lane.b32.xlu0 %v3155, 8
        %v3357 = vpop.permute.xlu0 %3356
        %3358 = vrot.lane.b32.xlu0 %v3156, 8
        %v3359 = vpop.permute.xlu0 %3358
        %3360 = vrot.lane.b32.xlu0 %v3157, 8
        %v3361 = vpop.permute.xlu0 %3360
        %3362 = vrot.lane.b32.xlu0 %v3158, 8
        %v3363 = vpop.permute.xlu0 %3362
        %3364 = vrot.lane.b32.xlu0 %v3159, 8
        %v3365 = vpop.permute.xlu0 %3364
        %3366 = vrot.lane.b32.xlu0 %v3160, 8
        %v3367 = vpop.permute.xlu0 %3366
        %3368 = vrot.lane.b32.xlu0 %v3161, 8
        %v3369 = vpop.permute.xlu0 %3368
        %3370 = vrot.lane.b32.xlu0 %v3162, 8
        %v3371 = vpop.permute.xlu0 %3370
        %3372 = vrot.lane.b32.xlu0 %v3163, 8
        %v3373 = vpop.permute.xlu0 %3372
        %3470 = vrot.lane.b32.xlu0 %v3164, 16
        %v3471 = vpop.permute.xlu0 %3470
        %3472 = vrot.lane.b32.xlu0 %v3165, 16
        %v3473 = vpop.permute.xlu0 %3472
        %3474 = vrot.lane.b32.xlu0 %v3166, 16
        %v3475 = vpop.permute.xlu0 %3474
        %3476 = vrot.lane.b32.xlu0 %v3167, 16
        %v3477 = vpop.permute.xlu0 %3476
        %3478 = vrot.lane.b32.xlu0 %v3168, 16
        %v3479 = vpop.permute.xlu0 %3478
        %3480 = vrot.lane.b32.xlu0 %v3169, 16
        %v3481 = vpop.permute.xlu0 %3480
        %3482 = vrot.lane.b32.xlu0 %v3170, 16
        %v3483 = vpop.permute.xlu0 %3482
        %3484 = vrot.lane.b32.xlu0 %v3171, 16
        %v3485 = vpop.permute.xlu0 %3484
        %3486 = vrot.lane.b32.xlu0 %v3172, 16
        %v3487 = vpop.permute.xlu0 %3486
        %3488 = vrot.lane.b32.xlu0 %v3173, 16
        %v3489 = vpop.permute.xlu0 %3488
        %3490 = vrot.lane.b32.xlu0 %v3174, 16
        %v3491 = vpop.permute.xlu0 %3490
        %3492 = vrot.lane.b32.xlu0 %v3175, 16
        %v3493 = vpop.permute.xlu0 %3492
        %3494 = vrot.lane.b32.xlu0 %v3176, 16
        %v3495 = vpop.permute.xlu0 %3494
        %3496 = vrot.lane.b32.xlu0 %v3177, 16
        %v3497 = vpop.permute.xlu0 %3496
        %3498 = vrot.lane.b32.xlu0 %v3178, 16
        %v3499 = vpop.permute.xlu0 %3498
        %3500 = vrot.lane.b32.xlu0 %v3179, 16
        %v3501 = vpop.permute.xlu0 %3500
        %3502 = vrot.lane.b32.xlu0 %v3180, 16
        %v3503 = vpop.permute.xlu0 %3502
        %3504 = vrot.lane.b32.xlu0 %v3181, 16
        %v3505 = vpop.permute.xlu0 %3504
        %3506 = vrot.lane.b32.xlu0 %v3182, 16
        %v3507 = vpop.permute.xlu0 %3506
        %3508 = vrot.lane.b32.xlu0 %v3183, 16
        %v3509 = vpop.permute.xlu0 %3508
        %3510 = vrot.lane.b32.xlu0 %v3184, 16
        %v3511 = vpop.permute.xlu0 %3510
        %3512 = vrot.lane.b32.xlu0 %v3185, 16
        %v3513 = vpop.permute.xlu0 %3512
        %3514 = vrot.lane.b32.xlu0 %v3186, 16
        %v3515 = vpop.permute.xlu0 %3514
        %3516 = vrot.lane.b32.xlu0 %v3187, 16
        %v3517 = vpop.permute.xlu0 %3516
        %3518 = vrot.lane.b32.xlu0 %v3188, 16
        %v3519 = vpop.permute.xlu0 %3518
        %3520 = vrot.lane.b32.xlu0 %v3189, 16
        %v3521 = vpop.permute.xlu0 %3520
        %3522 = vrot.lane.b32.xlu0 %v3190, 16
        %v3523 = vpop.permute.xlu0 %3522
        %3524 = vrot.lane.b32.xlu0 %v3191, 16
        %v3525 = vpop.permute.xlu0 %3524
        %3526 = vrot.lane.b32.xlu0 %v3192, 16
        %v3527 = vpop.permute.xlu0 %3526
        %3528 = vrot.lane.b32.xlu0 %v3193, 16
        %v3529 = vpop.permute.xlu0 %3528
        %3530 = vrot.lane.b32.xlu0 %v3194, 16
        %v3531 = vpop.permute.xlu0 %3530
        %3532 = vrot.lane.b32.xlu0 %v3195, 16
        %v3533 = vpop.permute.xlu0 %3532
        %3534 = vrot.lane.b32.xlu0 %v3196, 16
        %v3535 = vpop.permute.xlu0 %3534
        %3536 = vrot.lane.b32.xlu0 %v3197, 16
        %v3537 = vpop.permute.xlu0 %3536
        %3538 = vrot.lane.b32.xlu0 %v3198, 16
        %v3539 = vpop.permute.xlu0 %3538
        %3540 = vrot.lane.b32.xlu0 %v3199, 16
        %v3541 = vpop.permute.xlu0 %3540
        %3542 = vrot.lane.b32.xlu0 %v3200, 16
        %v3543 = vpop.permute.xlu0 %3542
        %3544 = vrot.lane.b32.xlu0 %v3201, 16
        %v3545 = vpop.permute.xlu0 %3544
        %3546 = vrot.lane.b32.xlu0 %v3202, 16
        %v3547 = vpop.permute.xlu0 %3546
        %3548 = vrot.lane.b32.xlu0 %v3203, 16
        %v3549 = vpop.permute.xlu0 %3548
        %3550 = vrot.lane.b32.xlu0 %v3204, 16
        %v3551 = vpop.permute.xlu0 %3550
        %3552 = vrot.lane.b32.xlu0 %v3205, 16
        %v3553 = vpop.permute.xlu0 %3552
        %3554 = vrot.lane.b32.xlu0 %v3206, 16
        %v3555 = vpop.permute.xlu0 %3554
        %3556 = vrot.lane.b32.xlu0 %v3207, 16
        %v3557 = vpop.permute.xlu0 %3556
        %3558 = vrot.lane.b32.xlu0 %v3208, 16
        %v3559 = vpop.permute.xlu0 %3558
        %3560 = vrot.lane.b32.xlu0 %v3209, 16
        %v3561 = vpop.permute.xlu0 %3560
        %3562 = vrot.lane.b32.xlu0 %v3210, 16
        %v3563 = vpop.permute.xlu0 %3562
        %3564 = vrot.lane.b32.xlu0 %v3211, 16
        %v3565 = vpop.permute.xlu0 %3564
        %3662 = vrot.lane.b32.xlu0 %v3071, 24
        %v3663 = vpop.permute.xlu0 %3662
        %3664 = vrot.lane.b32.xlu0 %v3072, 24
        %v3665 = vpop.permute.xlu0 %3664
        %3666 = vrot.lane.b32.xlu0 %v3073, 24
        %v3667 = vpop.permute.xlu0 %3666
        %3668 = vrot.lane.b32.xlu0 %v3074, 24
        %v3669 = vpop.permute.xlu0 %3668
        %3670 = vrot.lane.b32.xlu0 %v3075, 24
        %v3671 = vpop.permute.xlu0 %3670
        %3672 = vrot.lane.b32.xlu0 %v3076, 24
        %v3673 = vpop.permute.xlu0 %3672
        %3674 = vrot.lane.b32.xlu0 %v3077, 24
        %v3675 = vpop.permute.xlu0 %3674
        %3676 = vrot.lane.b32.xlu0 %v3078, 24
        %v3677 = vpop.permute.xlu0 %3676
        %3678 = vrot.lane.b32.xlu0 %v3079, 24
        %v3679 = vpop.permute.xlu0 %3678
        %3680 = vrot.lane.b32.xlu0 %v3080, 24
        %v3681 = vpop.permute.xlu0 %3680
        %3682 = vrot.lane.b32.xlu0 %v3081, 24
        %v3683 = vpop.permute.xlu0 %3682
        %3684 = vrot.lane.b32.xlu0 %v3082, 24
        %v3685 = vpop.permute.xlu0 %3684
        %3686 = vrot.lane.b32.xlu0 %v3083, 24
        %v3687 = vpop.permute.xlu0 %3686
        %3688 = vrot.lane.b32.xlu0 %v3084, 24
        %v3689 = vpop.permute.xlu0 %3688
        %3690 = vrot.lane.b32.xlu0 %v3085, 24
        %v3691 = vpop.permute.xlu0 %3690
        %3692 = vrot.lane.b32.xlu0 %v3086, 24
        %v3693 = vpop.permute.xlu0 %3692
        %3694 = vrot.lane.b32.xlu0 %v3087, 24
        %v3695 = vpop.permute.xlu0 %3694
        %3696 = vrot.lane.b32.xlu0 %v3088, 24
        %v3697 = vpop.permute.xlu0 %3696
        %3698 = vrot.lane.b32.xlu0 %v3089, 24
        %v3699 = vpop.permute.xlu0 %3698
        %3700 = vrot.lane.b32.xlu0 %v3090, 24
        %v3701 = vpop.permute.xlu0 %3700
        %3702 = vrot.lane.b32.xlu0 %v3091, 24
        %v3703 = vpop.permute.xlu0 %3702
        %3704 = vrot.lane.b32.xlu0 %v3092, 24
        %v3705 = vpop.permute.xlu0 %3704
        %3706 = vrot.lane.b32.xlu0 %v3093, 24
        %v3707 = vpop.permute.xlu0 %3706
        %3708 = vrot.lane.b32.xlu0 %v3094, 24
        %v3709 = vpop.permute.xlu0 %3708
        %3710 = vrot.lane.b32.xlu0 %v3095, 24
        %v3711 = vpop.permute.xlu0 %3710
        %3712 = vrot.lane.b32.xlu0 %v3096, 24
        %v3713 = vpop.permute.xlu0 %3712
        %3714 = vrot.lane.b32.xlu0 %v3097, 24
        %v3715 = vpop.permute.xlu0 %3714
        %3716 = vrot.lane.b32.xlu0 %v3098, 24
        %v3717 = vpop.permute.xlu0 %3716
        %3718 = vrot.lane.b32.xlu0 %v3099, 24
        %v3719 = vpop.permute.xlu0 %3718
        %3720 = vrot.lane.b32.xlu0 %v3100, 24
        %v3721 = vpop.permute.xlu0 %3720
        %3722 = vrot.lane.b32.xlu0 %v3101, 24
        %v3723 = vpop.permute.xlu0 %3722
        %3724 = vrot.lane.b32.xlu0 %v3102, 24
        %v3725 = vpop.permute.xlu0 %3724
        %3726 = vrot.lane.b32.xlu0 %v3103, 24
        %v3727 = vpop.permute.xlu0 %3726
        %3728 = vrot.lane.b32.xlu0 %v3104, 24
        %v3729 = vpop.permute.xlu0 %3728
        %3730 = vrot.lane.b32.xlu0 %v3105, 24
        %v3731 = vpop.permute.xlu0 %3730
        %3732 = vrot.lane.b32.xlu0 %v3106, 24
        %v3733 = vpop.permute.xlu0 %3732
        %3734 = vrot.lane.b32.xlu0 %v3107, 24
        %v3735 = vpop.permute.xlu0 %3734
        %3736 = vrot.lane.b32.xlu0 %v3108, 24
        %v3737 = vpop.permute.xlu0 %3736
        %3738 = vrot.lane.b32.xlu0 %v3109, 24
        %v3739 = vpop.permute.xlu0 %3738
        %3740 = vrot.lane.b32.xlu0 %v3110, 24
        %v3741 = vpop.permute.xlu0 %3740
        %3742 = vrot.lane.b32.xlu0 %v3111, 24
        %v3743 = vpop.permute.xlu0 %3742
        %3744 = vrot.lane.b32.xlu0 %v3112, 24
        %v3745 = vpop.permute.xlu0 %3744
        %3746 = vrot.lane.b32.xlu0 %v3113, 24
        %v3747 = vpop.permute.xlu0 %3746
        %3748 = vrot.lane.b32.xlu0 %v3114, 24
        %v3749 = vpop.permute.xlu0 %3748
        %3750 = vrot.lane.b32.xlu0 %v3115, 24
        %v3751 = vpop.permute.xlu0 %3750
        %3752 = vrot.lane.b32.xlu0 %v3212, 24
        %v3753 = vpop.permute.xlu0 %3752
        %3754 = vrot.lane.b32.xlu0 %v3213, 24
        %v3755 = vpop.permute.xlu0 %3754
        %3756 = vrot.lane.b32.xlu0 %v3214, 24
        %v3757 = vpop.permute.xlu0 %3756
        %3809 = vrot.lane.b32.xlu0 %v3119, 32
        %v3810 = vpop.permute.xlu0 %3809
        %3811 = vrot.lane.b32.xlu0 %v3120, 32
        %v3812 = vpop.permute.xlu0 %3811
        %3813 = vrot.lane.b32.xlu0 %v3121, 32
        %v3814 = vpop.permute.xlu0 %3813
        %3815 = vrot.lane.b32.xlu0 %v3122, 32
        %v3816 = vpop.permute.xlu0 %3815
        %3817 = vrot.lane.b32.xlu0 %v3123, 32
        %v3818 = vpop.permute.xlu0 %3817
        %3819 = vrot.lane.b32.xlu0 %v3124, 32
        %v3820 = vpop.permute.xlu0 %3819
        %3821 = vrot.lane.b32.xlu0 %v3125, 32
        %v3822 = vpop.permute.xlu0 %3821
        %3823 = vrot.lane.b32.xlu0 %v3126, 32
        %v3824 = vpop.permute.xlu0 %3823
        %3825 = vrot.lane.b32.xlu0 %v3127, 32
        %v3826 = vpop.permute.xlu0 %3825
        %3827 = vrot.lane.b32.xlu0 %v3128, 32
        %v3828 = vpop.permute.xlu0 %3827
        %3829 = vrot.lane.b32.xlu0 %v3129, 32
        %v3830 = vpop.permute.xlu0 %3829
        %3831 = vrot.lane.b32.xlu0 %v3130, 32
        %v3832 = vpop.permute.xlu0 %3831
        %3833 = vrot.lane.b32.xlu0 %v3131, 32
        %v3834 = vpop.permute.xlu0 %3833
        %3835 = vrot.lane.b32.xlu0 %v3132, 32
        %v3836 = vpop.permute.xlu0 %3835
        %3837 = vrot.lane.b32.xlu0 %v3133, 32
        %v3838 = vpop.permute.xlu0 %3837
        %3839 = vrot.lane.b32.xlu0 %v3134, 32
        %v3840 = vpop.permute.xlu0 %3839
        %3841 = vrot.lane.b32.xlu0 %v3135, 32
        %v3842 = vpop.permute.xlu0 %3841
        %3843 = vrot.lane.b32.xlu0 %v3136, 32
        %v3844 = vpop.permute.xlu0 %3843
        %3845 = vrot.lane.b32.xlu0 %v3137, 32
        %v3846 = vpop.permute.xlu0 %3845
        %3847 = vrot.lane.b32.xlu0 %v3138, 32
        %v3848 = vpop.permute.xlu0 %3847
        %3849 = vrot.lane.b32.xlu0 %v3139, 32
        %v3850 = vpop.permute.xlu0 %3849
        %3851 = vrot.lane.b32.xlu0 %v3140, 32
        %v3852 = vpop.permute.xlu0 %3851
        %3853 = vrot.lane.b32.xlu0 %v3141, 32
        %v3854 = vpop.permute.xlu0 %3853
        %3855 = vrot.lane.b32.xlu0 %v3142, 32
        %v3856 = vpop.permute.xlu0 %3855
        %3857 = vrot.lane.b32.xlu0 %v3143, 32
        %v3858 = vpop.permute.xlu0 %3857
        %3859 = vrot.lane.b32.xlu0 %v3144, 32
        %v3860 = vpop.permute.xlu0 %3859
        %3861 = vrot.lane.b32.xlu0 %v3145, 32
        %v3862 = vpop.permute.xlu0 %3861
        %3863 = vrot.lane.b32.xlu0 %v3146, 32
        %v3864 = vpop.permute.xlu0 %3863
        %3865 = vrot.lane.b32.xlu0 %v3147, 32
        %v3866 = vpop.permute.xlu0 %3865
        %3867 = vrot.lane.b32.xlu0 %v3148, 32
        %v3868 = vpop.permute.xlu0 %3867
        %3869 = vrot.lane.b32.xlu0 %v3149, 32
        %v3870 = vpop.permute.xlu0 %3869
        %3871 = vrot.lane.b32.xlu0 %v3150, 32
        %v3872 = vpop.permute.xlu0 %3871
        %3873 = vrot.lane.b32.xlu0 %v3151, 32
        %v3874 = vpop.permute.xlu0 %3873
        %3875 = vrot.lane.b32.xlu0 %v3152, 32
        %v3876 = vpop.permute.xlu0 %3875
        %3877 = vrot.lane.b32.xlu0 %v3153, 32
        %v3878 = vpop.permute.xlu0 %3877
        %3879 = vrot.lane.b32.xlu0 %v3154, 32
        %v3880 = vpop.permute.xlu0 %3879
        %3881 = vrot.lane.b32.xlu0 %v3155, 32
        %v3882 = vpop.permute.xlu0 %3881
        %3883 = vrot.lane.b32.xlu0 %v3156, 32
        %v3884 = vpop.permute.xlu0 %3883
        %3885 = vrot.lane.b32.xlu0 %v3157, 32
        %v3886 = vpop.permute.xlu0 %3885
        %3887 = vrot.lane.b32.xlu0 %v3158, 32
        %v3888 = vpop.permute.xlu0 %3887
        %3889 = vrot.lane.b32.xlu0 %v3159, 32
        %v3890 = vpop.permute.xlu0 %3889
        %3891 = vrot.lane.b32.xlu0 %v3160, 32
        %v3892 = vpop.permute.xlu0 %3891
        %3893 = vrot.lane.b32.xlu0 %v3161, 32
        %v3894 = vpop.permute.xlu0 %3893
        %3895 = vrot.lane.b32.xlu0 %v3162, 32
        %v3896 = vpop.permute.xlu0 %3895
        %3897 = vrot.lane.b32.xlu0 %v3163, 32
        %v3898 = vpop.permute.xlu0 %3897
        %3899 = vrot.lane.b32.xlu0 %v3215, 32
        %v3900 = vpop.permute.xlu0 %3899
        %3901 = vrot.lane.b32.xlu0 %v3216, 32
        %v3902 = vpop.permute.xlu0 %3901
        %3903 = vrot.lane.b32.xlu0 %v3217, 32
        %v3904 = vpop.permute.xlu0 %3903
        %3956 = vrot.lane.b32.xlu0 %v3167, 40
        %v3957 = vpop.permute.xlu0 %3956
        %3958 = vrot.lane.b32.xlu0 %v3168, 40
        %v3959 = vpop.permute.xlu0 %3958
        %3960 = vrot.lane.b32.xlu0 %v3169, 40
        %v3961 = vpop.permute.xlu0 %3960
        %3962 = vrot.lane.b32.xlu0 %v3170, 40
        %v3963 = vpop.permute.xlu0 %3962
        %3964 = vrot.lane.b32.xlu0 %v3171, 40
        %v3965 = vpop.permute.xlu0 %3964
        %3966 = vrot.lane.b32.xlu0 %v3172, 40
        %v3967 = vpop.permute.xlu0 %3966
        %3968 = vrot.lane.b32.xlu0 %v3173, 40
        %v3969 = vpop.permute.xlu0 %3968
        %3970 = vrot.lane.b32.xlu0 %v3174, 40
        %v3971 = vpop.permute.xlu0 %3970
        %3972 = vrot.lane.b32.xlu0 %v3175, 40
        %v3973 = vpop.permute.xlu0 %3972
        %3974 = vrot.lane.b32.xlu0 %v3176, 40
        %v3975 = vpop.permute.xlu0 %3974
        %3976 = vrot.lane.b32.xlu0 %v3177, 40
        %v3977 = vpop.permute.xlu0 %3976
        %3978 = vrot.lane.b32.xlu0 %v3178, 40
        %v3979 = vpop.permute.xlu0 %3978
        %3980 = vrot.lane.b32.xlu0 %v3179, 40
        %v3981 = vpop.permute.xlu0 %3980
        %3982 = vrot.lane.b32.xlu0 %v3180, 40
        %v3983 = vpop.permute.xlu0 %3982
        %3984 = vrot.lane.b32.xlu0 %v3181, 40
        %v3985 = vpop.permute.xlu0 %3984
        %3986 = vrot.lane.b32.xlu0 %v3182, 40
        %v3987 = vpop.permute.xlu0 %3986
        %3988 = vrot.lane.b32.xlu0 %v3183, 40
        %v3989 = vpop.permute.xlu0 %3988
        %3990 = vrot.lane.b32.xlu0 %v3184, 40
        %v3991 = vpop.permute.xlu0 %3990
        %3992 = vrot.lane.b32.xlu0 %v3185, 40
        %v3993 = vpop.permute.xlu0 %3992
        %3994 = vrot.lane.b32.xlu0 %v3186, 40
        %v3995 = vpop.permute.xlu0 %3994
        %3996 = vrot.lane.b32.xlu0 %v3187, 40
        %v3997 = vpop.permute.xlu0 %3996
        %3998 = vrot.lane.b32.xlu0 %v3188, 40
        %v3999 = vpop.permute.xlu0 %3998
        %4000 = vrot.lane.b32.xlu0 %v3189, 40
        %v4001 = vpop.permute.xlu0 %4000
        %4002 = vrot.lane.b32.xlu0 %v3190, 40
        %v4003 = vpop.permute.xlu0 %4002
        %4004 = vrot.lane.b32.xlu0 %v3191, 40
        %v4005 = vpop.permute.xlu0 %4004
        %4006 = vrot.lane.b32.xlu0 %v3192, 40
        %v4007 = vpop.permute.xlu0 %4006
        %4008 = vrot.lane.b32.xlu0 %v3193, 40
        %v4009 = vpop.permute.xlu0 %4008
        %4010 = vrot.lane.b32.xlu0 %v3194, 40
        %v4011 = vpop.permute.xlu0 %4010
        %4012 = vrot.lane.b32.xlu0 %v3195, 40
        %v4013 = vpop.permute.xlu0 %4012
        %4014 = vrot.lane.b32.xlu0 %v3196, 40
        %v4015 = vpop.permute.xlu0 %4014
        %4016 = vrot.lane.b32.xlu0 %v3197, 40
        %v4017 = vpop.permute.xlu0 %4016
        %4018 = vrot.lane.b32.xlu0 %v3198, 40
        %v4019 = vpop.permute.xlu0 %4018
        %4020 = vrot.lane.b32.xlu0 %v3199, 40
        %v4021 = vpop.permute.xlu0 %4020
        %4022 = vrot.lane.b32.xlu0 %v3200, 40
        %v4023 = vpop.permute.xlu0 %4022
        %4024 = vrot.lane.b32.xlu0 %v3201, 40
        %v4025 = vpop.permute.xlu0 %4024
        %4026 = vrot.lane.b32.xlu0 %v3202, 40
        %v4027 = vpop.permute.xlu0 %4026
        %4028 = vrot.lane.b32.xlu0 %v3203, 40
        %v4029 = vpop.permute.xlu0 %4028
        %4030 = vrot.lane.b32.xlu0 %v3204, 40
        %v4031 = vpop.permute.xlu0 %4030
        %4032 = vrot.lane.b32.xlu0 %v3205, 40
        %v4033 = vpop.permute.xlu0 %4032
        %4034 = vrot.lane.b32.xlu0 %v3206, 40
        %v4035 = vpop.permute.xlu0 %4034
        %4036 = vrot.lane.b32.xlu0 %v3207, 40
        %v4037 = vpop.permute.xlu0 %4036
        %4038 = vrot.lane.b32.xlu0 %v3208, 40
        %v4039 = vpop.permute.xlu0 %4038
        %4040 = vrot.lane.b32.xlu0 %v3209, 40
        %v4041 = vpop.permute.xlu0 %4040
        %4042 = vrot.lane.b32.xlu0 %v3210, 40
        %v4043 = vpop.permute.xlu0 %4042
        %4044 = vrot.lane.b32.xlu0 %v3211, 40
        %v4045 = vpop.permute.xlu0 %4044
        %4046 = vrot.lane.b32.xlu0 %v3218, 40
        %v4047 = vpop.permute.xlu0 %4046
        %4048 = vrot.lane.b32.xlu0 %v3219, 40
        %v4049 = vpop.permute.xlu0 %4048
        %4050 = vrot.lane.b32.xlu0 %v3220, 40
        %v4051 = vpop.permute.xlu0 %4050
        %4103 = vrot.lane.b32.xlu0 %v3074, 48
        %v4104 = vpop.permute.xlu0 %4103
        %4105 = vrot.lane.b32.xlu0 %v3075, 48
        %v4106 = vpop.permute.xlu0 %4105
        %4107 = vrot.lane.b32.xlu0 %v3076, 48
        %v4108 = vpop.permute.xlu0 %4107
        %4109 = vrot.lane.b32.xlu0 %v3077, 48
        %v4110 = vpop.permute.xlu0 %4109
        %4111 = vrot.lane.b32.xlu0 %v3078, 48
        %v4112 = vpop.permute.xlu0 %4111
        %4113 = vrot.lane.b32.xlu0 %v3079, 48
        %v4114 = vpop.permute.xlu0 %4113
        %4115 = vrot.lane.b32.xlu0 %v3080, 48
        %v4116 = vpop.permute.xlu0 %4115
        %4117 = vrot.lane.b32.xlu0 %v3081, 48
        %v4118 = vpop.permute.xlu0 %4117
        %4119 = vrot.lane.b32.xlu0 %v3082, 48
        %v4120 = vpop.permute.xlu0 %4119
        %4121 = vrot.lane.b32.xlu0 %v3083, 48
        %v4122 = vpop.permute.xlu0 %4121
        %4123 = vrot.lane.b32.xlu0 %v3084, 48
        %v4124 = vpop.permute.xlu0 %4123
        %4125 = vrot.lane.b32.xlu0 %v3085, 48
        %v4126 = vpop.permute.xlu0 %4125
        %4127 = vrot.lane.b32.xlu0 %v3086, 48
        %v4128 = vpop.permute.xlu0 %4127
        %4129 = vrot.lane.b32.xlu0 %v3087, 48
        %v4130 = vpop.permute.xlu0 %4129
        %4131 = vrot.lane.b32.xlu0 %v3088, 48
        %v4132 = vpop.permute.xlu0 %4131
        %4133 = vrot.lane.b32.xlu0 %v3089, 48
        %v4134 = vpop.permute.xlu0 %4133
        %4135 = vrot.lane.b32.xlu0 %v3090, 48
        %v4136 = vpop.permute.xlu0 %4135
        %4137 = vrot.lane.b32.xlu0 %v3091, 48
        %v4138 = vpop.permute.xlu0 %4137
        %4139 = vrot.lane.b32.xlu0 %v3092, 48
        %v4140 = vpop.permute.xlu0 %4139
        %4141 = vrot.lane.b32.xlu0 %v3093, 48
        %v4142 = vpop.permute.xlu0 %4141
        %4143 = vrot.lane.b32.xlu0 %v3094, 48
        %v4144 = vpop.permute.xlu0 %4143
        %4145 = vrot.lane.b32.xlu0 %v3095, 48
        %v4146 = vpop.permute.xlu0 %4145
        %4147 = vrot.lane.b32.xlu0 %v3096, 48
        %v4148 = vpop.permute.xlu0 %4147
        %4149 = vrot.lane.b32.xlu0 %v3097, 48
        %v4150 = vpop.permute.xlu0 %4149
        %4151 = vrot.lane.b32.xlu0 %v3098, 48
        %v4152 = vpop.permute.xlu0 %4151
        %4153 = vrot.lane.b32.xlu0 %v3099, 48
        %v4154 = vpop.permute.xlu0 %4153
        %4155 = vrot.lane.b32.xlu0 %v3100, 48
        %v4156 = vpop.permute.xlu0 %4155
        %4157 = vrot.lane.b32.xlu0 %v3101, 48
        %v4158 = vpop.permute.xlu0 %4157
        %4159 = vrot.lane.b32.xlu0 %v3102, 48
        %v4160 = vpop.permute.xlu0 %4159
        %4161 = vrot.lane.b32.xlu0 %v3103, 48
        %v4162 = vpop.permute.xlu0 %4161
        %4163 = vrot.lane.b32.xlu0 %v3104, 48
        %v4164 = vpop.permute.xlu0 %4163
        %4165 = vrot.lane.b32.xlu0 %v3105, 48
        %v4166 = vpop.permute.xlu0 %4165
        %4167 = vrot.lane.b32.xlu0 %v3106, 48
        %v4168 = vpop.permute.xlu0 %4167
        %4169 = vrot.lane.b32.xlu0 %v3107, 48
        %v4170 = vpop.permute.xlu0 %4169
        %4171 = vrot.lane.b32.xlu0 %v3108, 48
        %v4172 = vpop.permute.xlu0 %4171
        %4173 = vrot.lane.b32.xlu0 %v3109, 48
        %v4174 = vpop.permute.xlu0 %4173
        %4175 = vrot.lane.b32.xlu0 %v3110, 48
        %v4176 = vpop.permute.xlu0 %4175
        %4177 = vrot.lane.b32.xlu0 %v3111, 48
        %v4178 = vpop.permute.xlu0 %4177
        %4179 = vrot.lane.b32.xlu0 %v3112, 48
        %v4180 = vpop.permute.xlu0 %4179
        %4181 = vrot.lane.b32.xlu0 %v3113, 48
        %v4182 = vpop.permute.xlu0 %4181
        %4183 = vrot.lane.b32.xlu0 %v3114, 48
        %v4184 = vpop.permute.xlu0 %4183
        %4185 = vrot.lane.b32.xlu0 %v3115, 48
        %v4186 = vpop.permute.xlu0 %4185
        %4187 = vrot.lane.b32.xlu0 %v3212, 48
        %v4188 = vpop.permute.xlu0 %4187
        %4189 = vrot.lane.b32.xlu0 %v3213, 48
        %v4190 = vpop.permute.xlu0 %4189
        %4191 = vrot.lane.b32.xlu0 %v3214, 48
        %v4192 = vpop.permute.xlu0 %4191
        %4193 = vrot.lane.b32.xlu0 %v3221, 48
        %v4194 = vpop.permute.xlu0 %4193
        %4195 = vrot.lane.b32.xlu0 %v3222, 48
        %v4196 = vpop.permute.xlu0 %4195
        %4197 = vrot.lane.b32.xlu0 %v3223, 48
        %v4198 = vpop.permute.xlu0 %4197
        %4250 = vrot.lane.b32.xlu0 %v3122, 56
        %v4251 = vpop.permute.xlu0 %4250
        %4252 = vrot.lane.b32.xlu0 %v3123, 56
        %v4253 = vpop.permute.xlu0 %4252
        %4254 = vrot.lane.b32.xlu0 %v3124, 56
        %v4255 = vpop.permute.xlu0 %4254
        %4256 = vrot.lane.b32.xlu0 %v3125, 56
        %v4257 = vpop.permute.xlu0 %4256
        %4258 = vrot.lane.b32.xlu0 %v3126, 56
        %v4259 = vpop.permute.xlu0 %4258
        %4260 = vrot.lane.b32.xlu0 %v3127, 56
        %v4261 = vpop.permute.xlu0 %4260
        %4262 = vrot.lane.b32.xlu0 %v3128, 56
        %v4263 = vpop.permute.xlu0 %4262
        %4264 = vrot.lane.b32.xlu0 %v3129, 56
        %v4265 = vpop.permute.xlu0 %4264
        %4266 = vrot.lane.b32.xlu0 %v3130, 56
        %v4267 = vpop.permute.xlu0 %4266
        %4268 = vrot.lane.b32.xlu0 %v3131, 56
        %v4269 = vpop.permute.xlu0 %4268
        %4270 = vrot.lane.b32.xlu0 %v3132, 56
        %v4271 = vpop.permute.xlu0 %4270
        %4272 = vrot.lane.b32.xlu0 %v3133, 56
        %v4273 = vpop.permute.xlu0 %4272
        %4274 = vrot.lane.b32.xlu0 %v3134, 56
        %v4275 = vpop.permute.xlu0 %4274
        %4276 = vrot.lane.b32.xlu0 %v3135, 56
        %v4277 = vpop.permute.xlu0 %4276
        %4278 = vrot.lane.b32.xlu0 %v3136, 56
        %v4279 = vpop.permute.xlu0 %4278
        %4280 = vrot.lane.b32.xlu0 %v3137, 56
        %v4281 = vpop.permute.xlu0 %4280
        %4282 = vrot.lane.b32.xlu0 %v3138, 56
        %v4283 = vpop.permute.xlu0 %4282
        %4284 = vrot.lane.b32.xlu0 %v3139, 56
        %v4285 = vpop.permute.xlu0 %4284
        %4286 = vrot.lane.b32.xlu0 %v3140, 56
        %v4287 = vpop.permute.xlu0 %4286
        %4288 = vrot.lane.b32.xlu0 %v3141, 56
        %v4289 = vpop.permute.xlu0 %4288
        %4290 = vrot.lane.b32.xlu0 %v3142, 56
        %v4291 = vpop.permute.xlu0 %4290
        %4292 = vrot.lane.b32.xlu0 %v3143, 56
        %v4293 = vpop.permute.xlu0 %4292
        %4294 = vrot.lane.b32.xlu0 %v3144, 56
        %v4295 = vpop.permute.xlu0 %4294
        %4296 = vrot.lane.b32.xlu0 %v3145, 56
        %v4297 = vpop.permute.xlu0 %4296
        %4298 = vrot.lane.b32.xlu0 %v3146, 56
        %v4299 = vpop.permute.xlu0 %4298
        %4300 = vrot.lane.b32.xlu0 %v3147, 56
        %v4301 = vpop.permute.xlu0 %4300
        %4302 = vrot.lane.b32.xlu0 %v3148, 56
        %v4303 = vpop.permute.xlu0 %4302
        %4304 = vrot.lane.b32.xlu0 %v3149, 56
        %v4305 = vpop.permute.xlu0 %4304
        %4306 = vrot.lane.b32.xlu0 %v3150, 56
        %v4307 = vpop.permute.xlu0 %4306
        %4308 = vrot.lane.b32.xlu0 %v3151, 56
        %v4309 = vpop.permute.xlu0 %4308
        %4310 = vrot.lane.b32.xlu0 %v3152, 56
        %v4311 = vpop.permute.xlu0 %4310
        %4312 = vrot.lane.b32.xlu0 %v3153, 56
        %v4313 = vpop.permute.xlu0 %4312
        %4314 = vrot.lane.b32.xlu0 %v3154, 56
        %v4315 = vpop.permute.xlu0 %4314
        %4316 = vrot.lane.b32.xlu0 %v3155, 56
        %v4317 = vpop.permute.xlu0 %4316
        %4318 = vrot.lane.b32.xlu0 %v3156, 56
        %v4319 = vpop.permute.xlu0 %4318
        %4320 = vrot.lane.b32.xlu0 %v3157, 56
        %v4321 = vpop.permute.xlu0 %4320
        %4322 = vrot.lane.b32.xlu0 %v3158, 56
        %v4323 = vpop.permute.xlu0 %4322
        %4324 = vrot.lane.b32.xlu0 %v3159, 56
        %v4325 = vpop.permute.xlu0 %4324
        %4326 = vrot.lane.b32.xlu0 %v3160, 56
        %v4327 = vpop.permute.xlu0 %4326
        %4328 = vrot.lane.b32.xlu0 %v3161, 56
        %v4329 = vpop.permute.xlu0 %4328
        %4330 = vrot.lane.b32.xlu0 %v3162, 56
        %v4331 = vpop.permute.xlu0 %4330
        %4332 = vrot.lane.b32.xlu0 %v3163, 56
        %v4333 = vpop.permute.xlu0 %4332
        %4334 = vrot.lane.b32.xlu0 %v3215, 56
        %v4335 = vpop.permute.xlu0 %4334
        %4336 = vrot.lane.b32.xlu0 %v3216, 56
        %v4337 = vpop.permute.xlu0 %4336
        %4338 = vrot.lane.b32.xlu0 %v3217, 56
        %v4339 = vpop.permute.xlu0 %4338
        %4340 = vrot.lane.b32.xlu0 %v3224, 56
        %v4341 = vpop.permute.xlu0 %4340
        %4342 = vrot.lane.b32.xlu0 %v3225, 56
        %v4343 = vpop.permute.xlu0 %4342
        %4344 = vrot.lane.b32.xlu0 %v3226, 56
        %v4345 = vpop.permute.xlu0 %4344
        %4397 = vrot.lane.b32.xlu0 %v3170, 64
        %v4398 = vpop.permute.xlu0 %4397
        %4399 = vrot.lane.b32.xlu0 %v3171, 64
        %v4400 = vpop.permute.xlu0 %4399
        %4401 = vrot.lane.b32.xlu0 %v3172, 64
        %v4402 = vpop.permute.xlu0 %4401
        %4403 = vrot.lane.b32.xlu0 %v3173, 64
        %v4404 = vpop.permute.xlu0 %4403
        %4405 = vrot.lane.b32.xlu0 %v3174, 64
        %v4406 = vpop.permute.xlu0 %4405
        %4407 = vrot.lane.b32.xlu0 %v3175, 64
        %v4408 = vpop.permute.xlu0 %4407
        %4409 = vrot.lane.b32.xlu0 %v3176, 64
        %v4410 = vpop.permute.xlu0 %4409
        %4411 = vrot.lane.b32.xlu0 %v3177, 64
        %v4412 = vpop.permute.xlu0 %4411
        %4413 = vrot.lane.b32.xlu0 %v3178, 64
        %v4414 = vpop.permute.xlu0 %4413
        %4415 = vrot.lane.b32.xlu0 %v3179, 64
        %v4416 = vpop.permute.xlu0 %4415
        %4417 = vrot.lane.b32.xlu0 %v3180, 64
        %v4418 = vpop.permute.xlu0 %4417
        %4419 = vrot.lane.b32.xlu0 %v3181, 64
        %v4420 = vpop.permute.xlu0 %4419
        %4421 = vrot.lane.b32.xlu0 %v3182, 64
        %v4422 = vpop.permute.xlu0 %4421
        %4423 = vrot.lane.b32.xlu0 %v3183, 64
        %v4424 = vpop.permute.xlu0 %4423
        %4425 = vrot.lane.b32.xlu0 %v3184, 64
        %v4426 = vpop.permute.xlu0 %4425
        %4427 = vrot.lane.b32.xlu0 %v3185, 64
        %v4428 = vpop.permute.xlu0 %4427
        %4429 = vrot.lane.b32.xlu0 %v3186, 64
        %v4430 = vpop.permute.xlu0 %4429
        %4431 = vrot.lane.b32.xlu0 %v3187, 64
        %v4432 = vpop.permute.xlu0 %4431
        %4433 = vrot.lane.b32.xlu0 %v3188, 64
        %v4434 = vpop.permute.xlu0 %4433
        %4435 = vrot.lane.b32.xlu0 %v3189, 64
        %v4436 = vpop.permute.xlu0 %4435
        %4437 = vrot.lane.b32.xlu0 %v3190, 64
        %v4438 = vpop.permute.xlu0 %4437
        %4439 = vrot.lane.b32.xlu0 %v3191, 64
        %v4440 = vpop.permute.xlu0 %4439
        %4441 = vrot.lane.b32.xlu0 %v3192, 64
        %v4442 = vpop.permute.xlu0 %4441
        %4443 = vrot.lane.b32.xlu0 %v3193, 64
        %v4444 = vpop.permute.xlu0 %4443
        %4445 = vrot.lane.b32.xlu0 %v3194, 64
        %v4446 = vpop.permute.xlu0 %4445
        %4447 = vrot.lane.b32.xlu0 %v3195, 64
        %v4448 = vpop.permute.xlu0 %4447
        %4449 = vrot.lane.b32.xlu0 %v3196, 64
        %v4450 = vpop.permute.xlu0 %4449
        %4451 = vrot.lane.b32.xlu0 %v3197, 64
        %v4452 = vpop.permute.xlu0 %4451
        %4453 = vrot.lane.b32.xlu0 %v3198, 64
        %v4454 = vpop.permute.xlu0 %4453
        %4455 = vrot.lane.b32.xlu0 %v3199, 64
        %v4456 = vpop.permute.xlu0 %4455
        %4457 = vrot.lane.b32.xlu0 %v3200, 64
        %v4458 = vpop.permute.xlu0 %4457
        %4459 = vrot.lane.b32.xlu0 %v3201, 64
        %v4460 = vpop.permute.xlu0 %4459
        %4461 = vrot.lane.b32.xlu0 %v3202, 64
        %v4462 = vpop.permute.xlu0 %4461
        %4463 = vrot.lane.b32.xlu0 %v3203, 64
        %v4464 = vpop.permute.xlu0 %4463
        %4465 = vrot.lane.b32.xlu0 %v3204, 64
        %v4466 = vpop.permute.xlu0 %4465
        %4467 = vrot.lane.b32.xlu0 %v3205, 64
        %v4468 = vpop.permute.xlu0 %4467
        %4469 = vrot.lane.b32.xlu0 %v3206, 64
        %v4470 = vpop.permute.xlu0 %4469
        %4471 = vrot.lane.b32.xlu0 %v3207, 64
        %v4472 = vpop.permute.xlu0 %4471
        %4473 = vrot.lane.b32.xlu0 %v3208, 64
        %v4474 = vpop.permute.xlu0 %4473
        %4475 = vrot.lane.b32.xlu0 %v3209, 64
        %v4476 = vpop.permute.xlu0 %4475
        %4477 = vrot.lane.b32.xlu0 %v3210, 64
        %v4478 = vpop.permute.xlu0 %4477
        %4479 = vrot.lane.b32.xlu0 %v3211, 64
        %v4480 = vpop.permute.xlu0 %4479
        %4481 = vrot.lane.b32.xlu0 %v3218, 64
        %v4482 = vpop.permute.xlu0 %4481
        %4483 = vrot.lane.b32.xlu0 %v3219, 64
        %v4484 = vpop.permute.xlu0 %4483
        %4485 = vrot.lane.b32.xlu0 %v3220, 64
        %v4486 = vpop.permute.xlu0 %4485
        %4487 = vrot.lane.b32.xlu0 %v3227, 64
        %v4488 = vpop.permute.xlu0 %4487
        %4489 = vrot.lane.b32.xlu0 %v3228, 64
        %v4490 = vpop.permute.xlu0 %4489
        %4491 = vrot.lane.b32.xlu0 %v3229, 64
        %v4492 = vpop.permute.xlu0 %4491
        %4541 = vrot.lane.b32.xlu0 %v251, 72
        %v4542 = vpop.permute.xlu0 %4541
        %4543 = vrot.lane.b32.xlu0 %v252, 72
        %v4544 = vpop.permute.xlu0 %4543
        %4545 = vrot.lane.b32.xlu0 %v253, 72
        %v4546 = vpop.permute.xlu0 %4545
        %4547 = vrot.lane.b32.xlu0 %v254, 72
        %v4548 = vpop.permute.xlu0 %4547
        %4549 = vrot.lane.b32.xlu0 %v255, 72
        %v4550 = vpop.permute.xlu0 %4549
        %4551 = vrot.lane.b32.xlu0 %v256, 72
        %v4552 = vpop.permute.xlu0 %4551
        %4553 = vrot.lane.b32.xlu0 %v257, 72
        %v4554 = vpop.permute.xlu0 %4553
        %4555 = vrot.lane.b32.xlu0 %v258, 72
        %v4556 = vpop.permute.xlu0 %4555
        %4557 = vrot.lane.b32.xlu0 %v259, 72
        %v4558 = vpop.permute.xlu0 %4557
        %4559 = vrot.lane.b32.xlu0 %v260, 72
        %v4560 = vpop.permute.xlu0 %4559
        %4561 = vrot.lane.b32.xlu0 %v261, 72
        %v4562 = vpop.permute.xlu0 %4561
        %4563 = vrot.lane.b32.xlu0 %v262, 72
        %v4564 = vpop.permute.xlu0 %4563
        %4565 = vrot.lane.b32.xlu0 %v263, 72
        %v4566 = vpop.permute.xlu0 %4565
        %4567 = vrot.lane.b32.xlu0 %v264, 72
        %v4568 = vpop.permute.xlu0 %4567
        %4569 = vrot.lane.b32.xlu0 %v265, 72
        %v4570 = vpop.permute.xlu0 %4569
        %4571 = vrot.lane.b32.xlu0 %v266, 72
        %v4572 = vpop.permute.xlu0 %4571
        %4573 = vrot.lane.b32.xlu0 %v267, 72
        %v4574 = vpop.permute.xlu0 %4573
        %4575 = vrot.lane.b32.xlu0 %v268, 72
        %v4576 = vpop.permute.xlu0 %4575
        %4577 = vrot.lane.b32.xlu0 %v269, 72
        %v4578 = vpop.permute.xlu0 %4577
        %4579 = vrot.lane.b32.xlu0 %v270, 72
        %v4580 = vpop.permute.xlu0 %4579
        %4581 = vrot.lane.b32.xlu0 %v271, 72
        %v4582 = vpop.permute.xlu0 %4581
        %4583 = vrot.lane.b32.xlu0 %v272, 72
        %v4584 = vpop.permute.xlu0 %4583
        %4585 = vrot.lane.b32.xlu0 %v273, 72
        %v4586 = vpop.permute.xlu0 %4585
        %4587 = vrot.lane.b32.xlu0 %v274, 72
        %v4588 = vpop.permute.xlu0 %4587
        %4589 = vrot.lane.b32.xlu0 %v275, 72
        %v4590 = vpop.permute.xlu0 %4589
        %4591 = vrot.lane.b32.xlu0 %v276, 72
        %v4592 = vpop.permute.xlu0 %4591
        %4593 = vrot.lane.b32.xlu0 %v277, 72
        %v4594 = vpop.permute.xlu0 %4593
        %4595 = vrot.lane.b32.xlu0 %v278, 72
        %v4596 = vpop.permute.xlu0 %4595
        %4597 = vrot.lane.b32.xlu0 %v279, 72
        %v4598 = vpop.permute.xlu0 %4597
        %4599 = vrot.lane.b32.xlu0 %v280, 72
        %v4600 = vpop.permute.xlu0 %4599
        %4601 = vrot.lane.b32.xlu0 %v281, 72
        %v4602 = vpop.permute.xlu0 %4601
        %4603 = vrot.lane.b32.xlu0 %v282, 72
        %v4604 = vpop.permute.xlu0 %4603
        %4605 = vrot.lane.b32.xlu0 %v283, 72
        %v4606 = vpop.permute.xlu0 %4605
        %4607 = vrot.lane.b32.xlu0 %v284, 72
        %v4608 = vpop.permute.xlu0 %4607
        %4609 = vrot.lane.b32.xlu0 %v285, 72
        %v4610 = vpop.permute.xlu0 %4609
        %4611 = vrot.lane.b32.xlu0 %v286, 72
        %v4612 = vpop.permute.xlu0 %4611
        %4613 = vrot.lane.b32.xlu0 %v287, 72
        %v4614 = vpop.permute.xlu0 %4613
        %4615 = vrot.lane.b32.xlu0 %v288, 72
        %v4616 = vpop.permute.xlu0 %4615
        %4617 = vrot.lane.b32.xlu0 %v289, 72
        %v4618 = vpop.permute.xlu0 %4617
        %4619 = vrot.lane.b32.xlu0 %v290, 72
        %v4620 = vpop.permute.xlu0 %4619
        %4621 = vrot.lane.b32.xlu0 %v291, 72
        %v4622 = vpop.permute.xlu0 %4621
        %4623 = vrot.lane.b32.xlu0 %v292, 72
        %v4624 = vpop.permute.xlu0 %4623
        %4625 = vrot.lane.b32.xlu0 %v293, 72
        %v4626 = vpop.permute.xlu0 %4625
        %4627 = vrot.lane.b32.xlu0 %v294, 72
        %v4628 = vpop.permute.xlu0 %4627
        %4629 = vrot.lane.b32.xlu0 %v295, 72
        %v4630 = vpop.permute.xlu0 %4629
        %4631 = vrot.lane.b32.xlu0 %v296, 72
        %v4632 = vpop.permute.xlu0 %4631
        %4633 = vrot.lane.b32.xlu0 %v297, 72
        %v4634 = vpop.permute.xlu0 %4633
        %4635 = vrot.lane.b32.xlu0 %v298, 72
        %v4636 = vpop.permute.xlu0 %4635
        %v4685 = vsel %vm2013, %v3068, %v3279
        %v4686 = vsel %vm2013, %v3069, %v3281
        %v4687 = vsel %vm2013, %v3070, %v3283
        %v4688 = vsel %vm2013, %v3071, %v3285
        %v4689 = vsel %vm2013, %v3072, %v3287
        %v4690 = vsel %vm2013, %v3073, %v3289
        %v4691 = vsel %vm2013, %v3074, %v3291
        %v4692 = vsel %vm2013, %v3075, %v3293
        %v4693 = vsel %vm2013, %v3076, %v3295
        %v4694 = vsel %vm2013, %v3077, %v3297
        %v4695 = vsel %vm2013, %v3078, %v3299
        %v4696 = vsel %vm2013, %v3079, %v3301
        %v4697 = vsel %vm2013, %v3080, %v3303
        %v4698 = vsel %vm2013, %v3081, %v3305
        %v4699 = vsel %vm2013, %v3082, %v3307
        %v4700 = vsel %vm2013, %v3083, %v3309
        %v4701 = vsel %vm2013, %v3084, %v3311
        %v4702 = vsel %vm2013, %v3085, %v3313
        %v4703 = vsel %vm2013, %v3086, %v3315
        %v4704 = vsel %vm2013, %v3087, %v3317
        %v4705 = vsel %vm2013, %v3088, %v3319
        %v4706 = vsel %vm2013, %v3089, %v3321
        %v4707 = vsel %vm2013, %v3090, %v3323
        %v4708 = vsel %vm2013, %v3091, %v3325
        %v4709 = vsel %vm2013, %v3092, %v3327
        %v4710 = vsel %vm2013, %v3093, %v3329
        %v4711 = vsel %vm2013, %v3094, %v3331
        %v4712 = vsel %vm2013, %v3095, %v3333
        %v4713 = vsel %vm2013, %v3096, %v3335
        %v4714 = vsel %vm2013, %v3097, %v3337
        %v4715 = vsel %vm2013, %v3098, %v3339
        %v4716 = vsel %vm2013, %v3099, %v3341
        %v4717 = vsel %vm2013, %v3100, %v3343
        %v4718 = vsel %vm2013, %v3101, %v3345
        %v4719 = vsel %vm2013, %v3102, %v3347
        %v4720 = vsel %vm2013, %v3103, %v3349
        %v4721 = vsel %vm2013, %v3104, %v3351
        %v4722 = vsel %vm2013, %v3105, %v3353
        %v4723 = vsel %vm2013, %v3106, %v3355
        %v4724 = vsel %vm2013, %v3107, %v3357
        %v4725 = vsel %vm2013, %v3108, %v3359
        %v4726 = vsel %vm2013, %v3109, %v3361
        %v4727 = vsel %vm2013, %v3110, %v3363
        %v4728 = vsel %vm2013, %v3111, %v3365
        %v4729 = vsel %vm2013, %v3112, %v3367
        %v4730 = vsel %vm2013, %v3113, %v3369
        %v4731 = vsel %vm2013, %v3114, %v3371
        %v4732 = vsel %vm2013, %v3115, %v3373
        %v4733 = vsel %vm2111, %v4685, %v3471
        %v4734 = vsel %vm2111, %v4686, %v3473
        %v4735 = vsel %vm2111, %v4687, %v3475
        %v4736 = vsel %vm2111, %v4688, %v3477
        %v4737 = vsel %vm2111, %v4689, %v3479
        %v4738 = vsel %vm2111, %v4690, %v3481
        %v4739 = vsel %vm2111, %v4691, %v3483
        %v4740 = vsel %vm2111, %v4692, %v3485
        %v4741 = vsel %vm2111, %v4693, %v3487
        %v4742 = vsel %vm2111, %v4694, %v3489
        %v4743 = vsel %vm2111, %v4695, %v3491
        %v4744 = vsel %vm2111, %v4696, %v3493
        %v4745 = vsel %vm2111, %v4697, %v3495
        %v4746 = vsel %vm2111, %v4698, %v3497
        %v4747 = vsel %vm2111, %v4699, %v3499
        %v4748 = vsel %vm2111, %v4700, %v3501
        %v4749 = vsel %vm2111, %v4701, %v3503
        %v4750 = vsel %vm2111, %v4702, %v3505
        %v4751 = vsel %vm2111, %v4703, %v3507
        %v4752 = vsel %vm2111, %v4704, %v3509
        %v4753 = vsel %vm2111, %v4705, %v3511
        %v4754 = vsel %vm2111, %v4706, %v3513
        %v4755 = vsel %vm2111, %v4707, %v3515
        %v4756 = vsel %vm2111, %v4708, %v3517
        %v4757 = vsel %vm2111, %v4709, %v3519
        %v4758 = vsel %vm2111, %v4710, %v3521
        %v4759 = vsel %vm2111, %v4711, %v3523
        %v4760 = vsel %vm2111, %v4712, %v3525
        %v4761 = vsel %vm2111, %v4713, %v3527
        %v4762 = vsel %vm2111, %v4714, %v3529
        %v4763 = vsel %vm2111, %v4715, %v3531
        %v4764 = vsel %vm2111, %v4716, %v3533
        %v4765 = vsel %vm2111, %v4717, %v3535
        %v4766 = vsel %vm2111, %v4718, %v3537
        %v4767 = vsel %vm2111, %v4719, %v3539
        %v4768 = vsel %vm2111, %v4720, %v3541
        %v4769 = vsel %vm2111, %v4721, %v3543
        %v4770 = vsel %vm2111, %v4722, %v3545
        %v4771 = vsel %vm2111, %v4723, %v3547
        %v4772 = vsel %vm2111, %v4724, %v3549
        %v4773 = vsel %vm2111, %v4725, %v3551
        %v4774 = vsel %vm2111, %v4726, %v3553
        %v4775 = vsel %vm2111, %v4727, %v3555
        %v4776 = vsel %vm2111, %v4728, %v3557
        %v4777 = vsel %vm2111, %v4729, %v3559
        %v4778 = vsel %vm2111, %v4730, %v3561
        %v4779 = vsel %vm2111, %v4731, %v3563
        %v4780 = vsel %vm2111, %v4732, %v3565
        %v4781 = vsel %vm2209, %v4733, %v3663
        %v4782 = vsel %vm2209, %v4734, %v3665
        %v4783 = vsel %vm2209, %v4735, %v3667
        %v4784 = vsel %vm2209, %v4736, %v3669
        %v4785 = vsel %vm2209, %v4737, %v3671
        %v4786 = vsel %vm2209, %v4738, %v3673
        %v4787 = vsel %vm2209, %v4739, %v3675
        %v4788 = vsel %vm2209, %v4740, %v3677
        %v4789 = vsel %vm2209, %v4741, %v3679
        %v4790 = vsel %vm2209, %v4742, %v3681
        %v4791 = vsel %vm2209, %v4743, %v3683
        %v4792 = vsel %vm2209, %v4744, %v3685
        %v4793 = vsel %vm2209, %v4745, %v3687
        %v4794 = vsel %vm2209, %v4746, %v3689
        %v4795 = vsel %vm2209, %v4747, %v3691
        %v4796 = vsel %vm2209, %v4748, %v3693
        %v4797 = vsel %vm2209, %v4749, %v3695
        %v4798 = vsel %vm2209, %v4750, %v3697
        %v4799 = vsel %vm2209, %v4751, %v3699
        %v4800 = vsel %vm2209, %v4752, %v3701
        %v4801 = vsel %vm2209, %v4753, %v3703
        %v4802 = vsel %vm2209, %v4754, %v3705
        %v4803 = vsel %vm2209, %v4755, %v3707
        %v4804 = vsel %vm2209, %v4756, %v3709
        %v4805 = vsel %vm2209, %v4757, %v3711
        %v4806 = vsel %vm2209, %v4758, %v3713
        %v4807 = vsel %vm2209, %v4759, %v3715
        %v4808 = vsel %vm2209, %v4760, %v3717
        %v4809 = vsel %vm2209, %v4761, %v3719
        %v4810 = vsel %vm2209, %v4762, %v3721
        %v4811 = vsel %vm2209, %v4763, %v3723
        %v4812 = vsel %vm2209, %v4764, %v3725
        %v4813 = vsel %vm2209, %v4765, %v3727
        %v4814 = vsel %vm2209, %v4766, %v3729
        %v4815 = vsel %vm2209, %v4767, %v3731
        %v4816 = vsel %vm2209, %v4768, %v3733
        %v4817 = vsel %vm2209, %v4769, %v3735
        %v4818 = vsel %vm2209, %v4770, %v3737
        %v4819 = vsel %vm2209, %v4771, %v3739
        %v4820 = vsel %vm2209, %v4772, %v3741
        %v4821 = vsel %vm2209, %v4773, %v3743
        %v4822 = vsel %vm2209, %v4774, %v3745
        %v4823 = vsel %vm2209, %v4775, %v3747
        %v4824 = vsel %vm2209, %v4776, %v3749
        %v4825 = vsel %vm2209, %v4777, %v3751
        %v4826 = vsel %vm2209, %v4778, %v3753
        %v4827 = vsel %vm2209, %v4779, %v3755
        %v4828 = vsel %vm2209, %v4780, %v3757
        %v4829 = vsel %vm2307, %v4781, %v3810
        %v4830 = vsel %vm2307, %v4782, %v3812
        %v4831 = vsel %vm2307, %v4783, %v3814
        %v4832 = vsel %vm2307, %v4784, %v3816
        %v4833 = vsel %vm2307, %v4785, %v3818
        %v4834 = vsel %vm2307, %v4786, %v3820
        %v4835 = vsel %vm2307, %v4787, %v3822
        %v4836 = vsel %vm2307, %v4788, %v3824
        %v4837 = vsel %vm2307, %v4789, %v3826
        %v4838 = vsel %vm2307, %v4790, %v3828
        %v4839 = vsel %vm2307, %v4791, %v3830
        %v4840 = vsel %vm2307, %v4792, %v3832
        %v4841 = vsel %vm2307, %v4793, %v3834
        %v4842 = vsel %vm2307, %v4794, %v3836
        %v4843 = vsel %vm2307, %v4795, %v3838
        %v4844 = vsel %vm2307, %v4796, %v3840
        %v4845 = vsel %vm2307, %v4797, %v3842
        %v4846 = vsel %vm2307, %v4798, %v3844
        %v4847 = vsel %vm2307, %v4799, %v3846
        %v4848 = vsel %vm2307, %v4800, %v3848
        %v4849 = vsel %vm2307, %v4801, %v3850
        %v4850 = vsel %vm2307, %v4802, %v3852
        %v4851 = vsel %vm2307, %v4803, %v3854
        %v4852 = vsel %vm2307, %v4804, %v3856
        %v4853 = vsel %vm2307, %v4805, %v3858
        %v4854 = vsel %vm2307, %v4806, %v3860
        %v4855 = vsel %vm2307, %v4807, %v3862
        %v4856 = vsel %vm2307, %v4808, %v3864
        %v4857 = vsel %vm2307, %v4809, %v3866
        %v4858 = vsel %vm2307, %v4810, %v3868
        %v4859 = vsel %vm2307, %v4811, %v3870
        %v4860 = vsel %vm2307, %v4812, %v3872
        %v4861 = vsel %vm2307, %v4813, %v3874
        %v4862 = vsel %vm2307, %v4814, %v3876
        %v4863 = vsel %vm2307, %v4815, %v3878
        %v4864 = vsel %vm2307, %v4816, %v3880
        %v4865 = vsel %vm2307, %v4817, %v3882
        %v4866 = vsel %vm2307, %v4818, %v3884
        %v4867 = vsel %vm2307, %v4819, %v3886
        %v4868 = vsel %vm2307, %v4820, %v3888
        %v4869 = vsel %vm2307, %v4821, %v3890
        %v4870 = vsel %vm2307, %v4822, %v3892
        %v4871 = vsel %vm2307, %v4823, %v3894
        %v4872 = vsel %vm2307, %v4824, %v3896
        %v4873 = vsel %vm2307, %v4825, %v3898
        %v4874 = vsel %vm2307, %v4826, %v3900
        %v4875 = vsel %vm2307, %v4827, %v3902
        %v4876 = vsel %vm2307, %v4828, %v3904
        %vm4877 = vcmask 326656
        %v4878 = vsel %vm4877, %v4829, %v3957
        %v4879 = vsel %vm4877, %v4830, %v3959
        %v4880 = vsel %vm4877, %v4831, %v3961
        %v4881 = vsel %vm4877, %v4832, %v3963
        %v4882 = vsel %vm4877, %v4833, %v3965
        %v4883 = vsel %vm4877, %v4834, %v3967
        %v4884 = vsel %vm4877, %v4835, %v3969
        %v4885 = vsel %vm4877, %v4836, %v3971
        %v4886 = vsel %vm4877, %v4837, %v3973
        %v4887 = vsel %vm4877, %v4838, %v3975
        %v4888 = vsel %vm4877, %v4839, %v3977
        %v4889 = vsel %vm4877, %v4840, %v3979
        %v4890 = vsel %vm4877, %v4841, %v3981
        %v4891 = vsel %vm4877, %v4842, %v3983
        %v4892 = vsel %vm4877, %v4843, %v3985
        %v4893 = vsel %vm4877, %v4844, %v3987
        %v4894 = vsel %vm4877, %v4845, %v3989
        %v4895 = vsel %vm4877, %v4846, %v3991
        %v4896 = vsel %vm4877, %v4847, %v3993
        %v4897 = vsel %vm4877, %v4848, %v3995
        %v4898 = vsel %vm4877, %v4849, %v3997
        %v4899 = vsel %vm4877, %v4850, %v3999
        %v4900 = vsel %vm4877, %v4851, %v4001
        %v4901 = vsel %vm4877, %v4852, %v4003
        %v4902 = vsel %vm4877, %v4853, %v4005
        %v4903 = vsel %vm4877, %v4854, %v4007
        %v4904 = vsel %vm4877, %v4855, %v4009
        %v4905 = vsel %vm4877, %v4856, %v4011
        %v4906 = vsel %vm4877, %v4857, %v4013
        %v4907 = vsel %vm4877, %v4858, %v4015
        %v4908 = vsel %vm4877, %v4859, %v4017
        %v4909 = vsel %vm4877, %v4860, %v4019
        %v4910 = vsel %vm4877, %v4861, %v4021
        %v4911 = vsel %vm4877, %v4862, %v4023
        %v4912 = vsel %vm4877, %v4863, %v4025
        %v4913 = vsel %vm4877, %v4864, %v4027
        %v4914 = vsel %vm4877, %v4865, %v4029
        %v4915 = vsel %vm4877, %v4866, %v4031
        %v4916 = vsel %vm4877, %v4867, %v4033
        %v4917 = vsel %vm4877, %v4868, %v4035
        %v4918 = vsel %vm4877, %v4869, %v4037
        %v4919 = vsel %vm4877, %v4870, %v4039
        %v4920 = vsel %vm4877, %v4871, %v4041
        %v4921 = vsel %vm4877, %v4872, %v4043
        %v4922 = vsel %vm4877, %v4873, %v4045
        %v4923 = vsel %vm4877, %v4874, %v4047
        %v4924 = vsel %vm4877, %v4875, %v4049
        %v4925 = vsel %vm4877, %v4876, %v4051
        %vm4926 = vcmask 392192
        %v4927 = vsel %vm4926, %v4878, %v4104
        %v4928 = vsel %vm4926, %v4879, %v4106
        %v4929 = vsel %vm4926, %v4880, %v4108
        %v4930 = vsel %vm4926, %v4881, %v4110
        %v4931 = vsel %vm4926, %v4882, %v4112
        %v4932 = vsel %vm4926, %v4883, %v4114
        %v4933 = vsel %vm4926, %v4884, %v4116
        %v4934 = vsel %vm4926, %v4885, %v4118
        %v4935 = vsel %vm4926, %v4886, %v4120
        %v4936 = vsel %vm4926, %v4887, %v4122
        %v4937 = vsel %vm4926, %v4888, %v4124
        %v4938 = vsel %vm4926, %v4889, %v4126
        %v4939 = vsel %vm4926, %v4890, %v4128
        %v4940 = vsel %vm4926, %v4891, %v4130
        %v4941 = vsel %vm4926, %v4892, %v4132
        %v4942 = vsel %vm4926, %v4893, %v4134
        %v4943 = vsel %vm4926, %v4894, %v4136
        %v4944 = vsel %vm4926, %v4895, %v4138
        %v4945 = vsel %vm4926, %v4896, %v4140
        %v4946 = vsel %vm4926, %v4897, %v4142
        %v4947 = vsel %vm4926, %v4898, %v4144
        %v4948 = vsel %vm4926, %v4899, %v4146
        %v4949 = vsel %vm4926, %v4900, %v4148
        %v4950 = vsel %vm4926, %v4901, %v4150
        %v4951 = vsel %vm4926, %v4902, %v4152
        %v4952 = vsel %vm4926, %v4903, %v4154
        %v4953 = vsel %vm4926, %v4904, %v4156
        %v4954 = vsel %vm4926, %v4905, %v4158
        %v4955 = vsel %vm4926, %v4906, %v4160
        %v4956 = vsel %vm4926, %v4907, %v4162
        %v4957 = vsel %vm4926, %v4908, %v4164
        %v4958 = vsel %vm4926, %v4909, %v4166
        %v4959 = vsel %vm4926, %v4910, %v4168
        %v4960 = vsel %vm4926, %v4911, %v4170
        %v4961 = vsel %vm4926, %v4912, %v4172
        %v4962 = vsel %vm4926, %v4913, %v4174
        %v4963 = vsel %vm4926, %v4914, %v4176
        %v4964 = vsel %vm4926, %v4915, %v4178
        %v4965 = vsel %vm4926, %v4916, %v4180
        %v4966 = vsel %vm4926, %v4917, %v4182
        %v4967 = vsel %vm4926, %v4918, %v4184
        %v4968 = vsel %vm4926, %v4919, %v4186
        %v4969 = vsel %vm4926, %v4920, %v4188
        %v4970 = vsel %vm4926, %v4921, %v4190
        %v4971 = vsel %vm4926, %v4922, %v4192
        %v4972 = vsel %vm4926, %v4923, %v4194
        %v4973 = vsel %vm4926, %v4924, %v4196
        %v4974 = vsel %vm4926, %v4925, %v4198
        %vm4975 = vcmask 457728
        %v4976 = vsel %vm4975, %v4927, %v4251
        %v4977 = vsel %vm4975, %v4928, %v4253
        %v4978 = vsel %vm4975, %v4929, %v4255
        %v4979 = vsel %vm4975, %v4930, %v4257
        %v4980 = vsel %vm4975, %v4931, %v4259
        %v4981 = vsel %vm4975, %v4932, %v4261
        %v4982 = vsel %vm4975, %v4933, %v4263
        %v4983 = vsel %vm4975, %v4934, %v4265
        %v4984 = vsel %vm4975, %v4935, %v4267
        %v4985 = vsel %vm4975, %v4936, %v4269
        %v4986 = vsel %vm4975, %v4937, %v4271
        %v4987 = vsel %vm4975, %v4938, %v4273
        %v4988 = vsel %vm4975, %v4939, %v4275
        %v4989 = vsel %vm4975, %v4940, %v4277
        %v4990 = vsel %vm4975, %v4941, %v4279
        %v4991 = vsel %vm4975, %v4942, %v4281
        %v4992 = vsel %vm4975, %v4943, %v4283
        %v4993 = vsel %vm4975, %v4944, %v4285
        %v4994 = vsel %vm4975, %v4945, %v4287
        %v4995 = vsel %vm4975, %v4946, %v4289
        %v4996 = vsel %vm4975, %v4947, %v4291
        %v4997 = vsel %vm4975, %v4948, %v4293
        %v4998 = vsel %vm4975, %v4949, %v4295
        %v4999 = vsel %vm4975, %v4950, %v4297
        %v5000 = vsel %vm4975, %v4951, %v4299
        %v5001 = vsel %vm4975, %v4952, %v4301
        %v5002 = vsel %vm4975, %v4953, %v4303
        %v5003 = vsel %vm4975, %v4954, %v4305
        %v5004 = vsel %vm4975, %v4955, %v4307
        %v5005 = vsel %vm4975, %v4956, %v4309
        %v5006 = vsel %vm4975, %v4957, %v4311
        %v5007 = vsel %vm4975, %v4958, %v4313
        %v5008 = vsel %vm4975, %v4959, %v4315
        %v5009 = vsel %vm4975, %v4960, %v4317
        %v5010 = vsel %vm4975, %v4961, %v4319
        %v5011 = vsel %vm4975, %v4962, %v4321
        %v5012 = vsel %vm4975, %v4963, %v4323
        %v5013 = vsel %vm4975, %v4964, %v4325
        %v5014 = vsel %vm4975, %v4965, %v4327
        %v5015 = vsel %vm4975, %v4966, %v4329
        %v5016 = vsel %vm4975, %v4967, %v4331
        %v5017 = vsel %vm4975, %v4968, %v4333
        %v5018 = vsel %vm4975, %v4969, %v4335
        %v5019 = vsel %vm4975, %v4970, %v4337
        %v5020 = vsel %vm4975, %v4971, %v4339
        %v5021 = vsel %vm4975, %v4972, %v4341
        %v5022 = vsel %vm4975, %v4973, %v4343
        %v5023 = vsel %vm4975, %v4974, %v4345
        %vm5024 = vcmask 523264
        %v5025 = vsel %vm5024, %v4976, %v4398
        %v5026 = vsel %vm5024, %v4977, %v4400
        %v5027 = vsel %vm5024, %v4978, %v4402
        %v5028 = vsel %vm5024, %v4979, %v4404
        %v5029 = vsel %vm5024, %v4980, %v4406
        %v5030 = vsel %vm5024, %v4981, %v4408
        %v5031 = vsel %vm5024, %v4982, %v4410
        %v5032 = vsel %vm5024, %v4983, %v4412
        %v5033 = vsel %vm5024, %v4984, %v4414
        %v5034 = vsel %vm5024, %v4985, %v4416
        %v5035 = vsel %vm5024, %v4986, %v4418
        %v5036 = vsel %vm5024, %v4987, %v4420
        %v5037 = vsel %vm5024, %v4988, %v4422
        %v5038 = vsel %vm5024, %v4989, %v4424
        %v5039 = vsel %vm5024, %v4990, %v4426
        %v5040 = vsel %vm5024, %v4991, %v4428
        %v5041 = vsel %vm5024, %v4992, %v4430
        %v5042 = vsel %vm5024, %v4993, %v4432
        %v5043 = vsel %vm5024, %v4994, %v4434
        %v5044 = vsel %vm5024, %v4995, %v4436
        %v5045 = vsel %vm5024, %v4996, %v4438
        %v5046 = vsel %vm5024, %v4997, %v4440
        %v5047 = vsel %vm5024, %v4998, %v4442
        %v5048 = vsel %vm5024, %v4999, %v4444
        %v5049 = vsel %vm5024, %v5000, %v4446
        %v5050 = vsel %vm5024, %v5001, %v4448
        %v5051 = vsel %vm5024, %v5002, %v4450
        %v5052 = vsel %vm5024, %v5003, %v4452
        %v5053 = vsel %vm5024, %v5004, %v4454
        %v5054 = vsel %vm5024, %v5005, %v4456
        %v5055 = vsel %vm5024, %v5006, %v4458
        %v5056 = vsel %vm5024, %v5007, %v4460
        %v5057 = vsel %vm5024, %v5008, %v4462
        %v5058 = vsel %vm5024, %v5009, %v4464
        %v5059 = vsel %vm5024, %v5010, %v4466
        %v5060 = vsel %vm5024, %v5011, %v4468
        %v5061 = vsel %vm5024, %v5012, %v4470
        %v5062 = vsel %vm5024, %v5013, %v4472
        %v5063 = vsel %vm5024, %v5014, %v4474
        %v5064 = vsel %vm5024, %v5015, %v4476
        %v5065 = vsel %vm5024, %v5016, %v4478
        %v5066 = vsel %vm5024, %v5017, %v4480
        %v5067 = vsel %vm5024, %v5018, %v4482
        %v5068 = vsel %vm5024, %v5019, %v4484
        %v5069 = vsel %vm5024, %v5020, %v4486
        %v5070 = vsel %vm5024, %v5021, %v4488
        %v5071 = vsel %vm5024, %v5022, %v4490
        %v5072 = vsel %vm5024, %v5023, %v4492
        %vm5073 = vcmask 588800
        %v5074 = vsel %vm5073, %v5025, %v4542
        %v5075 = vsel %vm5073, %v5026, %v4544
        %v5076 = vsel %vm5073, %v5027, %v4546
        %v5077 = vsel %vm5073, %v5028, %v4548
        %v5078 = vsel %vm5073, %v5029, %v4550
        %v5079 = vsel %vm5073, %v5030, %v4552
        %v5080 = vsel %vm5073, %v5031, %v4554
        %v5081 = vsel %vm5073, %v5032, %v4556
        %v5082 = vsel %vm5073, %v5033, %v4558
        %v5083 = vsel %vm5073, %v5034, %v4560
        %v5084 = vsel %vm5073, %v5035, %v4562
        %v5085 = vsel %vm5073, %v5036, %v4564
        %v5086 = vsel %vm5073, %v5037, %v4566
        %v5087 = vsel %vm5073, %v5038, %v4568
        %v5088 = vsel %vm5073, %v5039, %v4570
        %v5089 = vsel %vm5073, %v5040, %v4572
        %v5090 = vsel %vm5073, %v5041, %v4574
        %v5091 = vsel %vm5073, %v5042, %v4576
        %v5092 = vsel %vm5073, %v5043, %v4578
        %v5093 = vsel %vm5073, %v5044, %v4580
        %v5094 = vsel %vm5073, %v5045, %v4582
        %v5095 = vsel %vm5073, %v5046, %v4584
        %v5096 = vsel %vm5073, %v5047, %v4586
        %v5097 = vsel %vm5073, %v5048, %v4588
        %v5098 = vsel %vm5073, %v5049, %v4590
        %v5099 = vsel %vm5073, %v5050, %v4592
        %v5100 = vsel %vm5073, %v5051, %v4594
        %v5101 = vsel %vm5073, %v5052, %v4596
        %v5102 = vsel %vm5073, %v5053, %v4598
        %v5103 = vsel %vm5073, %v5054, %v4600
        %v5104 = vsel %vm5073, %v5055, %v4602
        %v5105 = vsel %vm5073, %v5056, %v4604
        %v5106 = vsel %vm5073, %v5057, %v4606
        %v5107 = vsel %vm5073, %v5058, %v4608
        %v5108 = vsel %vm5073, %v5059, %v4610
        %v5109 = vsel %vm5073, %v5060, %v4612
        %v5110 = vsel %vm5073, %v5061, %v4614
        %v5111 = vsel %vm5073, %v5062, %v4616
        %v5112 = vsel %vm5073, %v5063, %v4618
        %v5113 = vsel %vm5073, %v5064, %v4620
        %v5114 = vsel %vm5073, %v5065, %v4622
        %v5115 = vsel %vm5073, %v5066, %v4624
        %v5116 = vsel %vm5073, %v5067, %v4626
        %v5117 = vsel %vm5073, %v5068, %v4628
        %v5118 = vsel %vm5073, %v5069, %v4630
        %v5119 = vsel %vm5073, %v5070, %v4632
        %v5120 = vsel %vm5073, %v5071, %v4634
        %v5121 = vsel %vm5073, %v5072, %v4636
        %v5122 = vld [vmem:[%s2] sm:$0xff]
        %v5123 = vld [vmem:[%s2 + $0x8] sm:$0xff]
        %v5124 = vld [vmem:[%s2 + $0x10] sm:$0xff]
        %v5125 = vld [vmem:[%s2 + $0x18] sm:$0xff]
        %v5126 = vld [vmem:[%s2 + $0x20] sm:$0xff]
        %v5127 = vld [vmem:[%s2 + $0x28] sm:$0xff]
        %v5128 = vld [vmem:[%s2 + $0x30] sm:$0xff]
        %v5129 = vld [vmem:[%s2 + $0x38] sm:$0xff]
        %v5130 = vld [vmem:[%s2 + $0x40] sm:$0xff]
        %v5131 = vld [vmem:[%s2 + $0x48] sm:$0x1]
        %vm5132 = vcmask 596992
        %v5134 = vsel %vm5132, %v5074, 0
        %v5137 = vsel %vm5132, %v5075, 0
        %v5140 = vsel %vm5132, %v5076, 0
        %v5143 = vsel %vm5132, %v5077, 0
        %v5146 = vsel %vm5132, %v5078, 0
        %v5149 = vsel %vm5132, %v5079, 0
        %v5152 = vsel %vm5132, %v5080, 0
        %v5155 = vsel %vm5132, %v5081, 0
        %v5158 = vsel %vm5132, %v5082, 0
        %v5161 = vsel %vm5132, %v5083, 0
        %v5164 = vsel %vm5132, %v5084, 0
        %v5167 = vsel %vm5132, %v5085, 0
        %v5170 = vsel %vm5132, %v5086, 0
        %v5173 = vsel %vm5132, %v5087, 0
        %v5176 = vsel %vm5132, %v5088, 0
        %v5179 = vsel %vm5132, %v5089, 0
        %v5182 = vsel %vm5132, %v5090, 0
        %v5185 = vsel %vm5132, %v5091, 0
        %v5188 = vsel %vm5132, %v5092, 0
        %v5191 = vsel %vm5132, %v5093, 0
        %v5194 = vsel %vm5132, %v5094, 0
        %v5197 = vsel %vm5132, %v5095, 0
        %v5200 = vsel %vm5132, %v5096, 0
        %v5203 = vsel %vm5132, %v5097, 0
        %v5206 = vsel %vm5132, %v5098, 0
        %v5209 = vsel %vm5132, %v5099, 0
        %v5212 = vsel %vm5132, %v5100, 0
        %v5215 = vsel %vm5132, %v5101, 0
        %v5218 = vsel %vm5132, %v5102, 0
        %v5221 = vsel %vm5132, %v5103, 0
        %v5224 = vsel %vm5132, %v5104, 0
        %v5227 = vsel %vm5132, %v5105, 0
        %v5230 = vsel %vm5132, %v5106, 0
        %v5233 = vsel %vm5132, %v5107, 0
        %v5236 = vsel %vm5132, %v5108, 0
        %v5239 = vsel %vm5132, %v5109, 0
        %v5242 = vsel %vm5132, %v5110, 0
        %v5245 = vsel %vm5132, %v5111, 0
        %v5248 = vsel %vm5132, %v5112, 0
        %v5251 = vsel %vm5132, %v5113, 0
        %v5254 = vsel %vm5132, %v5114, 0
        %v5257 = vsel %vm5132, %v5115, 0
        %v5260 = vsel %vm5132, %v5116, 0
        %v5263 = vsel %vm5132, %v5117, 0
        %v5266 = vsel %vm5132, %v5118, 0
        %v5269 = vsel %vm5132, %v5119, 0
        %v5272 = vsel %vm5132, %v5120, 0
        %v5275 = vsel %vm5132, %v5121, 0
        %vm5277 = vcmask 1040384
        %v5279 = vsel %vm5277, %v5131, 0
        %5281 = vmatpush.msra.mxu0 0.0
        %5282 = vmatpush.msra.mxu0 0.0
        %5283 = vmatpush.msra.mxu0 0.0
        %5284 = vmatpush.msra.mxu0 0.0
        %5285 = vmatpush.msra.mxu0 0.0
        %5286 = vmatpush.msra.mxu0 0.0
        %5287 = vmatpush.msra.mxu0 %v5279
        %5288 = vmatpush.msra.mxu0 %v5130
        %5289 = vmatpush.msra.mxu0 %v5129
        %5290 = vmatpush.msra.mxu0 %v5128
        %5291 = vmatpush.msra.mxu0 %v5127
        %5292 = vmatpush.msra.mxu0 %v5126
        %5293 = vmatpush.msra.mxu0 %v5125
        %5294 = vmatpush.msra.mxu0 %v5124
        %5295 = vmatpush.msra.mxu0 %v5123
        %5296 = vmatpush.msra.mxu0 %v5122
        %5297 = vmatmul.f32.gmra.mxu0 %v5134
        %v5298 = vpop.f32.mrf.mxu0
        %v5299 = vadd.f32 0.0, %v5298
        %5300 = vmatmul.f32.gmra.mxu0 %v5137
        %v5301 = vpop.f32.mrf.mxu0
        %v5302 = vadd.f32 0.0, %v5301
        %5303 = vmatmul.f32.gmra.mxu0 %v5140
        %v5304 = vpop.f32.mrf.mxu0
        %v5305 = vadd.f32 0.0, %v5304
        %5306 = vmatmul.f32.gmra.mxu0 %v5143
        %v5307 = vpop.f32.mrf.mxu0
        %v5308 = vadd.f32 0.0, %v5307
        %5309 = vmatmul.f32.gmra.mxu0 %v5146
        %v5310 = vpop.f32.mrf.mxu0
        %v5311 = vadd.f32 0.0, %v5310
        %5312 = vmatmul.f32.gmra.mxu0 %v5149
        %v5313 = vpop.f32.mrf.mxu0
        %v5314 = vadd.f32 0.0, %v5313
        %5315 = vmatmul.f32.gmra.mxu0 %v5152
        %v5316 = vpop.f32.mrf.mxu0
        %v5317 = vadd.f32 0.0, %v5316
        %5318 = vmatmul.f32.gmra.mxu0 %v5155
        %v5319 = vpop.f32.mrf.mxu0
        %v5320 = vadd.f32 0.0, %v5319
        %5321 = vmatmul.f32.gmra.mxu0 %v5158
        %v5322 = vpop.f32.mrf.mxu0
        %v5323 = vadd.f32 0.0, %v5322
        %5324 = vmatmul.f32.gmra.mxu0 %v5161
        %v5325 = vpop.f32.mrf.mxu0
        %v5326 = vadd.f32 0.0, %v5325
        %5327 = vmatmul.f32.gmra.mxu0 %v5164
        %v5328 = vpop.f32.mrf.mxu0
        %v5329 = vadd.f32 0.0, %v5328
        %5330 = vmatmul.f32.gmra.mxu0 %v5167
        %v5331 = vpop.f32.mrf.mxu0
        %v5332 = vadd.f32 0.0, %v5331
        %5333 = vmatmul.f32.gmra.mxu0 %v5170
        %v5334 = vpop.f32.mrf.mxu0
        %v5335 = vadd.f32 0.0, %v5334
        %5336 = vmatmul.f32.gmra.mxu0 %v5173
        %v5337 = vpop.f32.mrf.mxu0
        %v5338 = vadd.f32 0.0, %v5337
        %5339 = vmatmul.f32.gmra.mxu0 %v5176
        %v5340 = vpop.f32.mrf.mxu0
        %v5341 = vadd.f32 0.0, %v5340
        %5342 = vmatmul.f32.gmra.mxu0 %v5179
        %v5343 = vpop.f32.mrf.mxu0
        %v5344 = vadd.f32 0.0, %v5343
        %5345 = vmatmul.f32.gmra.mxu0 %v5182
        %v5346 = vpop.f32.mrf.mxu0
        %v5347 = vadd.f32 0.0, %v5346
        %5348 = vmatmul.f32.gmra.mxu0 %v5185
        %v5349 = vpop.f32.mrf.mxu0
        %v5350 = vadd.f32 0.0, %v5349
        %5351 = vmatmul.f32.gmra.mxu0 %v5188
        %v5352 = vpop.f32.mrf.mxu0
        %v5353 = vadd.f32 0.0, %v5352
        %5354 = vmatmul.f32.gmra.mxu0 %v5191
        %v5355 = vpop.f32.mrf.mxu0
        %v5356 = vadd.f32 0.0, %v5355
        %5357 = vmatmul.f32.gmra.mxu0 %v5194
        %v5358 = vpop.f32.mrf.mxu0
        %v5359 = vadd.f32 0.0, %v5358
        %5360 = vmatmul.f32.gmra.mxu0 %v5197
        %v5361 = vpop.f32.mrf.mxu0
        %v5362 = vadd.f32 0.0, %v5361
        %5363 = vmatmul.f32.gmra.mxu0 %v5200
        %v5364 = vpop.f32.mrf.mxu0
        %v5365 = vadd.f32 0.0, %v5364
        %5366 = vmatmul.f32.gmra.mxu0 %v5203
        %v5367 = vpop.f32.mrf.mxu0
        %v5368 = vadd.f32 0.0, %v5367
        %5369 = vmatmul.f32.gmra.mxu0 %v5206
        %v5370 = vpop.f32.mrf.mxu0
        %v5371 = vadd.f32 0.0, %v5370
        %5372 = vmatmul.f32.gmra.mxu0 %v5209
        %v5373 = vpop.f32.mrf.mxu0
        %v5374 = vadd.f32 0.0, %v5373
        %5375 = vmatmul.f32.gmra.mxu0 %v5212
        %v5376 = vpop.f32.mrf.mxu0
        %v5377 = vadd.f32 0.0, %v5376
        %5378 = vmatmul.f32.gmra.mxu0 %v5215
        %v5379 = vpop.f32.mrf.mxu0
        %v5380 = vadd.f32 0.0, %v5379
        %5381 = vmatmul.f32.gmra.mxu0 %v5218
        %v5382 = vpop.f32.mrf.mxu0
        %v5383 = vadd.f32 0.0, %v5382
        %5384 = vmatmul.f32.gmra.mxu0 %v5221
        %v5385 = vpop.f32.mrf.mxu0
        %v5386 = vadd.f32 0.0, %v5385
        %5387 = vmatmul.f32.gmra.mxu0 %v5224
        %v5388 = vpop.f32.mrf.mxu0
        %v5389 = vadd.f32 0.0, %v5388
        %5390 = vmatmul.f32.gmra.mxu0 %v5227
        %v5391 = vpop.f32.mrf.mxu0
        %v5392 = vadd.f32 0.0, %v5391
        %5393 = vmatmul.f32.gmra.mxu0 %v5230
        %v5394 = vpop.f32.mrf.mxu0
        %v5395 = vadd.f32 0.0, %v5394
        %5396 = vmatmul.f32.gmra.mxu0 %v5233
        %v5397 = vpop.f32.mrf.mxu0
        %v5398 = vadd.f32 0.0, %v5397
        %5399 = vmatmul.f32.gmra.mxu0 %v5236
        %v5400 = vpop.f32.mrf.mxu0
        %v5401 = vadd.f32 0.0, %v5400
        %5402 = vmatmul.f32.gmra.mxu0 %v5239
        %v5403 = vpop.f32.mrf.mxu0
        %v5404 = vadd.f32 0.0, %v5403
        %5405 = vmatmul.f32.gmra.mxu0 %v5242
        %v5406 = vpop.f32.mrf.mxu0
        %v5407 = vadd.f32 0.0, %v5406
        %5408 = vmatmul.f32.gmra.mxu0 %v5245
        %v5409 = vpop.f32.mrf.mxu0
        %v5410 = vadd.f32 0.0, %v5409
        %5411 = vmatmul.f32.gmra.mxu0 %v5248
        %v5412 = vpop.f32.mrf.mxu0
        %v5413 = vadd.f32 0.0, %v5412
        %5414 = vmatmul.f32.gmra.mxu0 %v5251
        %v5415 = vpop.f32.mrf.mxu0
        %v5416 = vadd.f32 0.0, %v5415
        %5417 = vmatmul.f32.gmra.mxu0 %v5254
        %v5418 = vpop.f32.mrf.mxu0
        %v5419 = vadd.f32 0.0, %v5418
        %5420 = vmatmul.f32.gmra.mxu0 %v5257
        %v5421 = vpop.f32.mrf.mxu0
        %v5422 = vadd.f32 0.0, %v5421
        %5423 = vmatmul.f32.gmra.mxu0 %v5260
        %v5424 = vpop.f32.mrf.mxu0
        %v5425 = vadd.f32 0.0, %v5424
        %5426 = vmatmul.f32.gmra.mxu0 %v5263
        %v5427 = vpop.f32.mrf.mxu0
        %v5428 = vadd.f32 0.0, %v5427
        %5429 = vmatmul.f32.gmra.mxu0 %v5266
        %v5430 = vpop.f32.mrf.mxu0
        %v5431 = vadd.f32 0.0, %v5430
        %5432 = vmatmul.f32.gmra.mxu0 %v5269
        %v5433 = vpop.f32.mrf.mxu0
        %v5434 = vadd.f32 0.0, %v5433
        %5435 = vmatmul.f32.gmra.mxu0 %v5272
        %v5436 = vpop.f32.mrf.mxu0
        %v5437 = vadd.f32 0.0, %v5436
        %5438 = vmatmul.f32.gmra.mxu0 %v5275
        %v5439 = vpop.f32.mrf.mxu0
        %v5440 = vadd.f32 0.0, %v5439
        %5441 = vdwg.mxu0
        %v5442 = vmax.f32 %v5299, 0.0
        %v5443 = vmax.f32 %v5302, 0.0
        %v5444 = vmax.f32 %v5305, 0.0
        %v5445 = vmax.f32 %v5308, 0.0
        %v5446 = vmax.f32 %v5311, 0.0
        %v5447 = vmax.f32 %v5314, 0.0
        %v5448 = vmax.f32 %v5317, 0.0
        %v5449 = vmax.f32 %v5320, 0.0
        %v5450 = vmax.f32 %v5323, 0.0
        %v5451 = vmax.f32 %v5326, 0.0
        %v5452 = vmax.f32 %v5329, 0.0
        %v5453 = vmax.f32 %v5332, 0.0
        %v5454 = vmax.f32 %v5335, 0.0
        %v5455 = vmax.f32 %v5338, 0.0
        %v5456 = vmax.f32 %v5341, 0.0
        %v5457 = vmax.f32 %v5344, 0.0
        %v5458 = vmax.f32 %v5347, 0.0
        %v5459 = vmax.f32 %v5350, 0.0
        %v5460 = vmax.f32 %v5353, 0.0
        %v5461 = vmax.f32 %v5356, 0.0
        %v5462 = vmax.f32 %v5359, 0.0
        %v5463 = vmax.f32 %v5362, 0.0
        %v5464 = vmax.f32 %v5365, 0.0
        %v5465 = vmax.f32 %v5368, 0.0
        %v5466 = vmax.f32 %v5371, 0.0
        %v5467 = vmax.f32 %v5374, 0.0
        %v5468 = vmax.f32 %v5377, 0.0
        %v5469 = vmax.f32 %v5380, 0.0
        %v5470 = vmax.f32 %v5383, 0.0
        %v5471 = vmax.f32 %v5386, 0.0
        %v5472 = vmax.f32 %v5389, 0.0
        %v5473 = vmax.f32 %v5392, 0.0
        %v5474 = vmax.f32 %v5395, 0.0
        %v5475 = vmax.f32 %v5398, 0.0
        %v5476 = vmax.f32 %v5401, 0.0
        %v5477 = vmax.f32 %v5404, 0.0
        %v5478 = vmax.f32 %v5407, 0.0
        %v5479 = vmax.f32 %v5410, 0.0
        %v5480 = vmax.f32 %v5413, 0.0
        %v5481 = vmax.f32 %v5416, 0.0
        %v5482 = vmax.f32 %v5419, 0.0
        %v5483 = vmax.f32 %v5422, 0.0
        %v5484 = vmax.f32 %v5425, 0.0
        %v5485 = vmax.f32 %v5428, 0.0
        %v5486 = vmax.f32 %v5431, 0.0
        %v5487 = vmax.f32 %v5434, 0.0
        %v5488 = vmax.f32 %v5437, 0.0
        %v5489 = vmax.f32 %v5440, 0.0
        %v5490 = vld [vmem:[%s5] sm:$0x7]
        %v5492 = vperm.slane %v5490, 0
        %v5493 = vperm.slane %v5490, 1
        %v5494 = vperm.slane %v5490, 2
        %5498 = vmatpush.msra.mxu0 %v5457
        %5499 = vmatpush.msra.mxu0 %v5456
        %5500 = vmatpush.msra.mxu0 %v5455
        %5501 = vmatpush.msra.mxu0 %v5454
        %5502 = vmatpush.msra.mxu0 %v5453
        %5503 = vmatpush.msra.mxu0 %v5452
        %5504 = vmatpush.msra.mxu0 %v5451
        %5505 = vmatpush.msra.mxu0 %v5450
        %5506 = vmatpush.msra.mxu0 %v5449
        %5507 = vmatpush.msra.mxu0 %v5448
        %5508 = vmatpush.msra.mxu0 %v5447
        %5509 = vmatpush.msra.mxu0 %v5446
        %5510 = vmatpush.msra.mxu0 %v5445
        %5511 = vmatpush.msra.mxu0 %v5444
        %5512 = vmatpush.msra.mxu0 %v5443
        %5513 = vmatpush.msra.mxu0 %v5442
        %5514 = vmatmul.f32.gmra.mxu0 %v5492
        %v5515 = vpop.f32.mrf.mxu0
        %v5516 = vadd.f32 0.0, %v5515
        %5517 = vdwg.mxu0
        %5518 = vmatpush.msra.mxu0 %v5473
        %5519 = vmatpush.msra.mxu0 %v5472
        %5520 = vmatpush.msra.mxu0 %v5471
        %5521 = vmatpush.msra.mxu0 %v5470
        %5522 = vmatpush.msra.mxu0 %v5469
        %5523 = vmatpush.msra.mxu0 %v5468
        %5524 = vmatpush.msra.mxu0 %v5467
        %5525 = vmatpush.msra.mxu0 %v5466
        %5526 = vmatpush.msra.mxu0 %v5465
        %5527 = vmatpush.msra.mxu0 %v5464
        %5528 = vmatpush.msra.mxu0 %v5463
        %5529 = vmatpush.msra.mxu0 %v5462
        %5530 = vmatpush.msra.mxu0 %v5461
        %5531 = vmatpush.msra.mxu0 %v5460
        %5532 = vmatpush.msra.mxu0 %v5459
        %5533 = vmatpush.msra.mxu0 %v5458
        %5534 = vmatmul.f32.gmra.mxu0 %v5493
        %v5535 = vpop.f32.mrf.mxu0
        %v5536 = vadd.f32 %v5516, %v5535
        %5537 = vdwg.mxu0
        %5538 = vmatpush.msra.mxu0 %v5489
        %5539 = vmatpush.msra.mxu0 %v5488
        %5540 = vmatpush.msra.mxu0 %v5487
        %5541 = vmatpush.msra.mxu0 %v5486
        %5542 = vmatpush.msra.mxu0 %v5485
        %5543 = vmatpush.msra.mxu0 %v5484
        %5544 = vmatpush.msra.mxu0 %v5483
        %5545 = vmatpush.msra.mxu0 %v5482
        %5546 = vmatpush.msra.mxu0 %v5481
        %5547 = vmatpush.msra.mxu0 %v5480
        %5548 = vmatpush.msra.mxu0 %v5479
        %5549 = vmatpush.msra.mxu0 %v5478
        %5550 = vmatpush.msra.mxu0 %v5477
        %5551 = vmatpush.msra.mxu0 %v5476
        %5552 = vmatpush.msra.mxu0 %v5475
        %5553 = vmatpush.msra.mxu0 %v5474
        %5554 = vmatmul.f32.gmra.mxu0 %v5494
        %v5555 = vpop.f32.mrf.mxu0
        %v5556 = vadd.f32 %v5536, %v5555
        %5557 = vdwg.mxu0
        %v5558 = vld [vmem:[%s3] sm:$0xff]
        %v5559 = vld [vmem:[%s3 + $0x8] sm:$0xff]
        %v5560 = vld [vmem:[%s3 + $0x10] sm:$0x1]
        %v5562 = vsel %vm2111, %v5556, 0
        %5564 = vmatpush.msra.mxu0 0.0
        %5565 = vmatpush.msra.mxu0 0.0
        %5566 = vmatpush.msra.mxu0 0.0
        %5567 = vmatpush.msra.mxu0 0.0
        %5568 = vmatpush.msra.mxu0 0.0
        %5569 = vmatpush.msra.mxu0 0.0
        %5570 = vmatpush.msra.mxu0 0.0
        %5571 = vmatpush.msra.mxu0 0.0
        %5572 = vmatpush.msra.mxu0 0.0
        %5573 = vmatpush.msra.mxu0 0.0
        %5574 = vmatpush.msra.mxu0 0.0
        %5575 = vmatpush.msra.mxu0 0.0
        %5576 = vmatpush.msra.mxu0 0.0
        %5577 = vmatpush.msra.mxu0 0.0
        %5578 = vmatpush.msra.mxu0 %v5559
        %5579 = vmatpush.msra.mxu0 %v5558
        %5580 = vmatmul.f32.gmra.mxu0 %v5562
        %v5581 = vpop.f32.mrf.mxu0
        %v5582 = vadd.f32 %v5560, %v5581
        %5583 = vdwg.mxu0
        %vm5584 = vcmask 73728
        %5585 = vst.msk [vmem:[%s244] sm:$0x1] %vm5584, %v5582
        %s5586 = sand.u32 %s159, 1
        %s5587 = scalar_lea.sflag [#allocation4], %s5586
        %s5588 = sand.u32 %s159, 1
        %s5589 = scalar_lea.vmem [#allocation3], %s5588
        // Predicated region
        $region45: #{masked_resnet_forward.1} parent=43 // pred_check
          %p5590 = pneg %p169
        $region46: #{masked_resnet_forward.1} parent=43 // pred_check_branch
          %5592 = sbr.rel (%p5590) target = $region48
        $region47: #{masked_resnet_forward.1} parent=43 // pred_region
          %5594 = vsyncadd %s5587, 0
          %s5595 = scalar_lea.hbm %s6, %s20
          %s5597 = sshll.u32 %s5589, 4
          %s5598 = int_to_ptr.vmem [resolvable:$true] %s5597
          %s5599 = sshll.u32 %s5595, 4
          %s5600 = int_to_ptr.hbm [resolvable:$true] %s5599
          %5602 = dma.vmem_to_hbm [thread:$0]  %s5598, 16, %s5600, %s5587
        $region48: #{masked_resnet_forward.1} parent=43 // pred_fallthru
          _
      $region44: #{masked_resnet_forward.1} parent=5 // pred_fallthru
        _
      %p5603 = scmp.le.s32.totalorder 2, %s15
      // Predicated region
      $region49: #{masked_resnet_forward.1} parent=5 // pred_check
        %p5604 = pneg %p5603
      $region50: #{masked_resnet_forward.1} parent=5 // pred_check_branch
        %5606 = sbr.rel (%p5604) target = $region52
      $region51: #{masked_resnet_forward.1} parent=5 // pred_region
        %s5607 = ssub.s32 %s15, 2
        // Predicated region
        $region53: #{masked_resnet_forward.1} parent=51 // pred_check
          %p5608 = pneg %p175
        $region54: #{masked_resnet_forward.1} parent=51 // pred_check_branch
          %5610 = sbr.rel (%p5608) target = $region56
        $region55: #{masked_resnet_forward.1} parent=51 // pred_region
          %s5611 = sand.u32 %s160, 1
          %s5612 = scalar_lea.sflag [#allocation4], %s5611
          %s5613 = sand.u32 %s160, 1
          %s5614 = scalar_lea.vmem [#allocation3], %s5613
          %5616 = dma.done %s5612, 16
        $region56: #{masked_resnet_forward.1} parent=51 // pred_fallthru
          _
      $region52: #{masked_resnet_forward.1} parent=5 // pred_fallthru
        _
    $region6: #{masked_resnet_forward.1} parent=1 // loop_footer
      %s19 = sadd.s32 1, %s15
    $region7: #{masked_resnet_forward.1} parent=1 // loop_footer_branch
      %14 = sbr.rel target = $region3
    $region8: #{masked_resnet_forward.1} parent=1 // loop_exit
      _
    %5617 = vsyncpa [#allocation4], 1
    %s5618 = scalar_lea.sflag [#allocation4], 1
    %5619 = vsyncpa %s5618, 1

</llo_original>
